<compile_context>
chip_gen: v7x
topology: tpu7x:2x2x1
jax: 0.10.0
libtpu: 0.0.40
codegen_flags: <defaults>
</compile_context>

<pallas_src>
import functools

import jax
import jax.numpy as jnp
from jax.experimental import pallas as pl
from jax.experimental.pallas import tpu as pltpu

EMBED_DIM = 768
NUM_CLASSES = 2
CLS_PAD = 128          # lane-dense padded width for the 2-class head
LN_EPS = 1e-5


def _divisors(n):
    return [d for d in range(1, n + 1) if n % d == 0]


# ----------------------------------------------------------------------------
# Kernel 1: streaming video pool
#   vid (B*C, Nt, pt, H, W)  ->  out (B*C, pt, ph, W)  (already scaled by 1/N)
#   grid = (BC tiles, Nt tiles); Nt is the reduction axis; output block is
#   VMEM-resident across it (accumulate directly into o_ref, no scratch).
# ----------------------------------------------------------------------------
def _pool_kernel(x_ref, o_ref, *, n_h, ph, inv_n):
    j = pl.program_id(1)

    @pl.when(j == 0)
    def _():
        o_ref[...] = jnp.zeros_like(o_ref)

    x = x_ref[...].astype(jnp.float32)       # (tbc, tt, pt, H, W)
    x = jnp.sum(x, axis=1)                   # sum temporal blocks in this tile
    # Fold H over ph-blocks (sublane-aligned static slices; ph % 8 == 0).
    acc = x[:, :, 0:ph, :]
    for hb in range(1, n_h):
        acc = acc + x[:, :, hb * ph:(hb + 1) * ph, :]
    o_ref[...] += acc

    @pl.when(j == pl.num_programs(1) - 1)
    def _():
        o_ref[...] = o_ref[...] * inv_n


def _choose_tiles(bc, n_t, per_t_bytes, max_block_bytes):
    """Pick (tbc, tt): divisors of BC / Nt under a per-block VMEM budget."""
    tbc_cands = [d for d in _divisors(bc) if d * per_t_bytes <= max_block_bytes]
    if not tbc_cands:
        tbc = 1
    else:
        # Prefer >= 2 blocks on the parallel axis (megacore / v7x dual TC).
        pref = [d for d in tbc_cands if bc // d >= 2]
        tbc = max(pref) if pref else max(tbc_cands)
    tt = 1
    for d in _divisors(n_t):
        if tbc * d * per_t_bytes <= max_block_bytes:
            tt = d
    return tbc, tt


def pool_video(videos, *, pt, ph, pw, max_block_bytes=6 * 1024 * 1024):
    """videos (B, C, T, H, W) -> (B*C, pt, ph, W) f32, mean over (Nt, Nh) taken,
    scaled by 1/(Nt*Nh*Nw).  Reads the video exactly once from HBM."""
    B, C, T, H, W = videos.shape
    assert T % pt == 0 and H % ph == 0 and W % pw == 0
    BC = B * C
    Nt, Nh, Nw = T // pt, H // ph, W // pw
    n_tokens = Nt * Nh * Nw

    # Free (contiguous-split) reshape — no HBM transpose, no pad.
    vid = videos.reshape(BC, Nt, pt, H, W)

    itemsize = videos.dtype.itemsize
    per_t_bytes = pt * H * W * itemsize
    tbc, tt = _choose_tiles(BC, Nt, per_t_bytes, max_block_bytes)
    grid = (BC // tbc, Nt // tt)

    in_block_bytes = tbc * tt * per_t_bytes
    out_block_bytes = tbc * pt * ph * W * 4
    vmem_bytes = 2 * in_block_bytes + 2 * out_block_bytes + (8 << 20)
    vmem_bytes = int(min(max(vmem_bytes, 16 << 20), 48 << 20))  # v7x-safe cap

    return pl.pallas_call(
        functools.partial(_pool_kernel, n_h=Nh, ph=ph, inv_n=1.0 / n_tokens),
        out_shape=jax.ShapeDtypeStruct((BC, pt, ph, W), jnp.float32),
        grid_spec=pltpu.PrefetchScalarGridSpec(
            num_scalar_prefetch=0,
            grid=grid,
            in_specs=[
                pl.BlockSpec((tbc, tt, pt, H, W),
                             lambda i, j: (i, j, 0, 0, 0)),
            ],
            out_specs=pl.BlockSpec((tbc, pt, ph, W),
                                   lambda i, j: (i, 0, 0, 0)),
        ),
        compiler_params=pltpu.CompilerParams(
            dimension_semantics=("parallel", "arbitrary"),
            vmem_limit_bytes=vmem_bytes,
        ),
    )(vid)


# ----------------------------------------------------------------------------
# Kernel 2: fused head
#   pooled (B, P) -> patch-embed Linear(P, 768) -> LayerNorm(768)
#                 -> Linear(768, 2) (zero-padded to 128 lanes) -> logits
# ----------------------------------------------------------------------------
def _head_kernel(x_ref, ew_ref, eb_ref, g_ref, bt_ref, cw_ref, cb_ref, o_ref):
    feat = (
        jnp.dot(x_ref[...], ew_ref[...], preferred_element_type=jnp.float32)
        + eb_ref[...]
    )                                               # (B, 768)
    mu = jnp.mean(feat, axis=-1, keepdims=True)
    var = jnp.mean((feat - mu) ** 2, axis=-1, keepdims=True)
    xhat = (feat - mu) * jax.lax.rsqrt(var + LN_EPS)
    y = xhat * g_ref[...] + bt_ref[...]
    logits = (
        jnp.dot(y, cw_ref[...], preferred_element_type=jnp.float32)
        + cb_ref[...]
    )                                               # (B, CLS_PAD)
    o_ref[...] = logits.astype(o_ref.dtype)


def fused_head(pooled, prep):
    """pooled (B, P) f32 + prepared params -> logits (B, NUM_CLASSES) f32."""
    B, P = pooled.shape
    D = prep["embed_w"].shape[1]

    out = pl.pallas_call(
        _head_kernel,
        out_shape=jax.ShapeDtypeStruct((B, CLS_PAD), jnp.float32),
        grid_spec=pltpu.PrefetchScalarGridSpec(
            num_scalar_prefetch=0,
            grid=(1,),
            in_specs=[
                pl.BlockSpec((B, P), lambda i: (0, 0)),
                pl.BlockSpec((P, D), lambda i: (0, 0)),
                pl.BlockSpec((1, D), lambda i: (0, 0)),
                pl.BlockSpec((1, D), lambda i: (0, 0)),
                pl.BlockSpec((1, D), lambda i: (0, 0)),
                pl.BlockSpec((D, CLS_PAD), lambda i: (0, 0)),
                pl.BlockSpec((1, CLS_PAD), lambda i: (0, 0)),
            ],
            out_specs=pl.BlockSpec((B, CLS_PAD), lambda i: (0, 0)),
        ),
        compiler_params=pltpu.CompilerParams(
            dimension_semantics=("arbitrary",),
            vmem_limit_bytes=32 * 1024 * 1024,
        ),
    )(
        pooled,
        prep["embed_w"],
        prep["embed_b"],
        prep["ln_gamma"],
        prep["ln_beta"],
        prep["clf_w_pad"],
        prep["clf_b_pad"],
    )
    return out[:, :NUM_CLASSES]


# ----------------------------------------------------------------------------
# Parameters (one-time prep hoisted out of the jitted forward)
# ----------------------------------------------------------------------------
def init_params(key, patch_dim):
    ks = jax.random.split(key, 4)
    scale_e = 1.0 / jnp.sqrt(patch_dim)
    scale_c = 1.0 / jnp.sqrt(EMBED_DIM)
    return {
        "embed_w": jax.random.uniform(
            ks[0], (patch_dim, EMBED_DIM), jnp.float32, -scale_e, scale_e
        ),
        "embed_b": jax.random.uniform(
            ks[1], (EMBED_DIM,), jnp.float32, -scale_e, scale_e
        ),
        "ln_gamma": jnp.ones((EMBED_DIM,), jnp.float32),
        "ln_beta": jnp.zeros((EMBED_DIM,), jnp.float32),
        "clf_w": jax.random.uniform(
            ks[2], (EMBED_DIM, NUM_CLASSES), jnp.float32, -scale_c, scale_c
        ),
        "clf_b": jax.random.uniform(
            ks[3], (NUM_CLASSES,), jnp.float32, -scale_c, scale_c
        ),
    }


def prepare_params(params):
    """One-time prep: pad the tiny classifier to 128 lanes, reshape 1-D params
    to (1, D) blocks.  Keeps this work out of every jitted forward call."""
    D = EMBED_DIM
    cw = jnp.zeros((D, CLS_PAD), jnp.float32).at[:, :NUM_CLASSES].set(
        params["clf_w"]
    )
    cb = jnp.zeros((1, CLS_PAD), jnp.float32).at[0, :NUM_CLASSES].set(
        params["clf_b"]
    )
    return {
        "embed_w": params["embed_w"],
        "embed_b": params["embed_b"].reshape(1, D),
        "ln_gamma": params["ln_gamma"].reshape(1, D),
        "ln_beta": params["ln_beta"].reshape(1, D),
        "clf_w_pad": cw,
        "clf_b_pad": cb,
    }


# ----------------------------------------------------------------------------
# Forward
# ----------------------------------------------------------------------------
@functools.partial(jax.jit, static_argnames=("pt", "ph", "pw"))
def model_forward(videos, prep, pt=2, ph=16, pw=16):
    B, C, T, H, W = videos.shape
    P = C * pt * ph * pw
    Nw = W // pw

    # Single HBM pass over the video: sum over (t-blocks, h-blocks), /N.
    pooled_cw = pool_video(videos, pt=pt, ph=ph, pw=pw)      # (B*C, pt, ph, W)
    # Tiny W-block fold + flatten to the (c, i, j, k) patch-dim ordering.
    # O(B*P) elements — negligible, left to XLA.
    pooled = (
        pooled_cw.reshape(B, C, pt, ph, Nw, pw).sum(axis=4).reshape(B, P)
    )

    # self.norm is nn.Identity(); mean-pool commutes with the affine encoder.
    # self.fc_dropout is nn.Identity() (fc_drop_rate=0.0).
    return fused_head(pooled, prep)


# ----------------------------------------------------------------------------
# Pure-JAX reference in the ORIGINAL (un-commuted) order, for verification.
# ----------------------------------------------------------------------------
def patchify3d(videos, pt, ph, pw):
    """videos: (B, C, T, H, W) -> (B, N_tokens, C*pt*ph*pw)."""
    B, C, T, H, W = videos.shape
    x = videos.reshape(B, C, T // pt, pt, H // ph, ph, W // pw, pw)
    x = jnp.transpose(x, (0, 2, 4, 6, 1, 3, 5, 7))
    n_tok = (T // pt) * (H // ph) * (W // pw)
    return x.reshape(B, n_tok, C * pt * ph * pw)


def reference_forward(videos, params, pt=2, ph=16, pw=16):
    hi = jax.lax.Precision.HIGHEST
    patches = patchify3d(videos, pt, ph, pw)                     # (B, N, P)
    tokens = (
        jnp.einsum("bnp,pd->bnd", patches, params["embed_w"], precision=hi)
        + params["embed_b"]
    )                                                            # encoder
    x = tokens.mean(axis=1)                                      # x.mean(1)
    mu = x.mean(-1, keepdims=True)
    var = ((x - mu) ** 2).mean(-1, keepdims=True)
    y = (x - mu) / jnp.sqrt(var + LN_EPS)
    y = y * params["ln_gamma"] + params["ln_beta"]               # fc_norm
    return jnp.dot(y, params["clf_w"], precision=hi) + params["clf_b"]


if __name__ == "__main__":
    # Small shapes consistent with the module: NCTHW video, tubelet=2, 16x16.
    B, C, T, H, W = 2, 3, 4, 32, 32
    pt, ph, pw = 2, 16, 16
    patch_dim = C * pt * ph * pw  # 1536

    key = jax.random.PRNGKey(0)
    k_vid, k_par = jax.random.split(key)
    videos = jax.random.normal(k_vid, (B, C, T, H, W), dtype=jnp.float32)
    params = init_params(k_par, patch_dim)
    prep = prepare_params(params)          # one-time, outside the jitted path

    logits = model_forward(videos, prep, pt=pt, ph=ph, pw=pw)
    logits = jax.block_until_ready(logits)

    assert logits.shape == (B, NUM_CLASSES), logits.shape
    assert bool(jnp.all(jnp.isfinite(logits)))

    ref = reference_forward(videos, params, pt=pt, ph=ph, pw=pw)
    assert bool(
        jnp.allclose(logits, ref, atol=2e-2, rtol=2e-2)
    ), (logits, ref)

    print("KERNEL_OK")
</pallas_src>

<mosaic_0001>
module attributes {stable_mosaic.version = 11 : i64} {
  func.func @_pool_kernel(%arg0: i32, %arg1: i32, %arg2: memref<3x2x2x32x32xf32, #tpu.memory_space<vmem>>, %arg3: memref<3x2x16x32xf32, #tpu.memory_space<vmem>>) attributes {dimension_semantics = [#tpu.dimension_semantics<parallel>, #tpu.dimension_semantics<arbitrary>], iteration_bounds = array<i64: 2, 1>, scalar_prefetch = 0 : i64, scratch_operands = 0 : i64, tpu.core_type = #tpu.core_type<tc>, window_params = [{transform_indices = @transform_0, window_bounds = array<i64: 3, 2, 2, 32, 32>}, {transform_indices = @transform_1, window_bounds = array<i64: 3, 2, 16, 32>}]} {
    %c0_i32 = arith.constant 0 : i32
    %0 = arith.cmpi eq, %arg1, %c0_i32 : i32
    %1 = arith.extui %0 : i1 to i32
    %c0_i32_0 = arith.constant 0 : i32
    %2 = arith.cmpi ne, %1, %c0_i32_0 : i32
    scf.if %2 {
      %cst_15 = arith.constant 0.000000e+00 : f32
      %14 = vector.broadcast %cst_15 : f32 to vector<3x2x16x32xf32>
      %c0_16 = arith.constant 0 : index
      %c0_17 = arith.constant 0 : index
      %c0_18 = arith.constant 0 : index
      %c0_19 = arith.constant 0 : index
      %15 = vector.load %arg3[%c0_16, %c0_17, %c0_18, %c0_19] : memref<3x2x16x32xf32, #tpu.memory_space<vmem>>, vector<3x2x16x32xf32>
      tpu.vector_store %arg3[%c0_16, %c0_17, %c0_18, %c0_19], %14 {strides = array<i32>} : memref<3x2x16x32xf32, #tpu.memory_space<vmem>>, vector<3x2x16x32xf32>,
    } else {
    }
    %c0 = arith.constant 0 : index
    %c0_1 = arith.constant 0 : index
    %c0_2 = arith.constant 0 : index
    %c0_3 = arith.constant 0 : index
    %c0_4 = arith.constant 0 : index
    %3 = vector.load %arg2[%c0, %c0_1, %c0_2, %c0_3, %c0_4] : memref<3x2x2x32x32xf32, #tpu.memory_space<vmem>>, vector<3x2x2x32x32xf32>
    %cst = arith.constant dense<0.000000e+00> : vector<3x2x32x32xf32>
    %4 = vector.multi_reduction <add>, %3, %cst [1] : vector<3x2x2x32x32xf32> to vector<3x2x32x32xf32>
    %5 = vector.extract_strided_slice %4 {offsets = [0, 0, 0, 0], sizes = [3, 2, 16, 32], strides = [1, 1, 1, 1]} : vector<3x2x32x32xf32> to vector<3x2x16x32xf32>
    %6 = vector.extract_strided_slice %4 {offsets = [0, 0, 16, 0], sizes = [3, 2, 16, 32], strides = [1, 1, 1, 1]} : vector<3x2x32x32xf32> to vector<3x2x16x32xf32>
    %7 = arith.addf %5, %6 : vector<3x2x16x32xf32>
    %c0_5 = arith.constant 0 : index
    %c0_6 = arith.constant 0 : index
    %c0_7 = arith.constant 0 : index
    %c0_8 = arith.constant 0 : index
    %8 = vector.load %arg3[%c0_5, %c0_6, %c0_7, %c0_8] : memref<3x2x16x32xf32, #tpu.memory_space<vmem>>, vector<3x2x16x32xf32>
    %9 = arith.addf %8, %7 : vector<3x2x16x32xf32>
    %c0_9 = arith.constant 0 : index
    %c0_10 = arith.constant 0 : index
    %c0_11 = arith.constant 0 : index
    %c0_12 = arith.constant 0 : index
    %10 = vector.load %arg3[%c0_9, %c0_10, %c0_11, %c0_12] : memref<3x2x16x32xf32, #tpu.memory_space<vmem>>, vector<3x2x16x32xf32>
    tpu.vector_store %arg3[%c0_9, %c0_10, %c0_11, %c0_12], %9 {strides = array<i32>} : memref<3x2x16x32xf32, #tpu.memory_space<vmem>>, vector<3x2x16x32xf32>,
    %c0_i32_13 = arith.constant 0 : i32
    %11 = arith.cmpi eq, %arg1, %c0_i32_13 : i32
    %12 = arith.extui %11 : i1 to i32
    %c0_i32_14 = arith.constant 0 : i32
    %13 = arith.cmpi ne, %12, %c0_i32_14 : i32
    scf.if %13 {
      %c0_15 = arith.constant 0 : index
      %c0_16 = arith.constant 0 : index
      %c0_17 = arith.constant 0 : index
      %c0_18 = arith.constant 0 : index
      %14 = vector.load %arg3[%c0_15, %c0_16, %c0_17, %c0_18] : memref<3x2x16x32xf32, #tpu.memory_space<vmem>>, vector<3x2x16x32xf32>
      %cst_19 = arith.constant 1.250000e-01 : f32
      %15 = vector.broadcast %cst_19 : f32 to vector<3x2x16x32xf32>
      %16 = arith.mulf %14, %15 : vector<3x2x16x32xf32>
      %c0_20 = arith.constant 0 : index
      %c0_21 = arith.constant 0 : index
      %c0_22 = arith.constant 0 : index
      %c0_23 = arith.constant 0 : index
      %17 = vector.load %arg3[%c0_20, %c0_21, %c0_22, %c0_23] : memref<3x2x16x32xf32, #tpu.memory_space<vmem>>, vector<3x2x16x32xf32>
      tpu.vector_store %arg3[%c0_20, %c0_21, %c0_22, %c0_23], %16 {strides = array<i32>} : memref<3x2x16x32xf32, #tpu.memory_space<vmem>>, vector<3x2x16x32xf32>,
    } else {
    }
    return
  }
  func.func @transform_0(%arg0: i32, %arg1: i32) -> (i32, i32, i32, i32, i32) {
    %c0_i32 = arith.constant 0 : i32
    %c0_i32_0 = arith.constant 0 : i32
    %c0_i32_1 = arith.constant 0 : i32
    %c0_i32_2 = arith.constant 0 : i32
    return %arg0, %arg1, %c0_i32, %c0_i32_0, %c0_i32_1 : i32, i32, i32, i32, i32
  }
  func.func @transform_1(%arg0: i32, %arg1: i32) -> (i32, i32, i32, i32) {
    %c0_i32 = arith.constant 0 : i32
    %c0_i32_0 = arith.constant 0 : i32
    %c0_i32_1 = arith.constant 0 : i32
    %c0_i32_2 = arith.constant 0 : i32
    return %arg0, %c0_i32, %c0_i32_0, %c0_i32_1 : i32, i32, i32, i32
  }
}

module attributes {stable_mosaic.version = 11 : i64} {
  func.func @_head_kernel(%arg0: i32, %arg1: memref<2x1536xf32, #tpu.memory_space<vmem>>, %arg2: memref<1536x768xf32, #tpu.memory_space<vmem>>, %arg3: memref<1x768xf32, #tpu.memory_space<vmem>>, %arg4: memref<1x768xf32, #tpu.memory_space<vmem>>, %arg5: memref<1x768xf32, #tpu.memory_space<vmem>>, %arg6: memref<768x128xf32, #tpu.memory_space<vmem>>, %arg7: memref<1x128xf32, #tpu.memory_space<vmem>>, %arg8: memref<2x128xf32, #tpu.memory_space<vmem>>) attributes {dimension_semantics = [#tpu.dimension_semantics<arbitrary>], iteration_bounds = array<i64: 1>, scalar_prefetch = 0 : i64, scratch_operands = 0 : i64, tpu.core_type = #tpu.core_type<tc>, window_params = [{pipeline_mode = #tpu.pipeline_mode<synchronous>, transform_indices = @transform_0, window_bounds = array<i64: 2, 1536>}, {pipeline_mode = #tpu.pipeline_mode<synchronous>, transform_indices = @transform_1, window_bounds = array<i64: 1536, 768>}, {pipeline_mode = #tpu.pipeline_mode<synchronous>, transform_indices = @transform_2, window_bounds = array<i64: 1, 768>}, {pipeline_mode = #tpu.pipeline_mode<synchronous>, transform_indices = @transform_3, window_bounds = array<i64: 1, 768>}, {pipeline_mode = #tpu.pipeline_mode<synchronous>, transform_indices = @transform_4, window_bounds = array<i64: 1, 768>}, {pipeline_mode = #tpu.pipeline_mode<synchronous>, transform_indices = @transform_5, window_bounds = array<i64: 768, 128>}, {pipeline_mode = #tpu.pipeline_mode<synchronous>, transform_indices = @transform_6, window_bounds = array<i64: 1, 128>}, {pipeline_mode = #tpu.pipeline_mode<synchronous>, transform_indices = @transform_7, window_bounds = array<i64: 2, 128>}]} {
    %c0 = arith.constant 0 : index
    %c0_0 = arith.constant 0 : index
    %0 = vector.load %arg1[%c0, %c0_0] : memref<2x1536xf32, #tpu.memory_space<vmem>>, vector<2x1536xf32>
    %c0_1 = arith.constant 0 : index
    %c0_2 = arith.constant 0 : index
    %1 = vector.load %arg2[%c0_1, %c0_2] : memref<1536x768xf32, #tpu.memory_space<vmem>>, vector<1536x768xf32>
    %cst = arith.constant dense<0.000000e+00> : vector<2x768xf32>
    %2 = tpu.matmul %0, %1, %cst {dimension_numbers = #tpu.dot_dimension_numbers<[1], [0], [0], [1], [0, 0, 1, 1], [], []>} : vector<2x1536xf32>, vector<1536x768xf32>, vector<2x768xf32> -> vector<2x768xf32>
    %c0_3 = arith.constant 0 : index
    %c0_4 = arith.constant 0 : index
    %3 = vector.load %arg3[%c0_3, %c0_4] : memref<1x768xf32, #tpu.memory_space<vmem>>, vector<1x768xf32>
    %4 = vector.broadcast %3 : vector<1x768xf32> to vector<2x768xf32>
    %5 = arith.addf %2, %4 : vector<2x768xf32>
    %cst_5 = arith.constant dense<0.000000e+00> : vector<2xf32>
    %6 = vector.multi_reduction <add>, %5, %cst_5 [1] : vector<2x768xf32> to vector<2xf32>
    %7 = vector.shape_cast %6 : vector<2xf32> to vector<2x1xf32>
    %cst_6 = arith.constant 7.680000e+02 : f32
    %8 = vector.broadcast %cst_6 : f32 to vector<2x1xf32>
    %9 = arith.divf %7, %8 : vector<2x1xf32>
    %10 = vector.broadcast %9 : vector<2x1xf32> to vector<2x768xf32>
    %11 = arith.subf %5, %10 : vector<2x768xf32>
    %12 = arith.mulf %11, %11 : vector<2x768xf32>
    %cst_7 = arith.constant dense<0.000000e+00> : vector<2xf32>
    %13 = vector.multi_reduction <add>, %12, %cst_7 [1] : vector<2x768xf32> to vector<2xf32>
    %14 = vector.shape_cast %13 : vector<2xf32> to vector<2x1xf32>
    %cst_8 = arith.constant 7.680000e+02 : f32
    %15 = vector.broadcast %cst_8 : f32 to vector<2x1xf32>
    %16 = arith.divf %14, %15 : vector<2x1xf32>
    %17 = vector.broadcast %9 : vector<2x1xf32> to vector<2x768xf32>
    %18 = arith.subf %5, %17 : vector<2x768xf32>
    %cst_9 = arith.constant 9.99999974E-6 : f32
    %19 = vector.broadcast %cst_9 : f32 to vector<2x1xf32>
    %20 = arith.addf %16, %19 : vector<2x1xf32>
    %21 = math.rsqrt %20 : vector<2x1xf32>
    %22 = vector.broadcast %21 : vector<2x1xf32> to vector<2x768xf32>
    %23 = arith.mulf %18, %22 : vector<2x768xf32>
    %c0_10 = arith.constant 0 : index
    %c0_11 = arith.constant 0 : index
    %24 = vector.load %arg4[%c0_10, %c0_11] : memref<1x768xf32, #tpu.memory_space<vmem>>, vector<1x768xf32>
    %25 = vector.broadcast %24 : vector<1x768xf32> to vector<2x768xf32>
    %26 = arith.mulf %23, %25 : vector<2x768xf32>
    %c0_12 = arith.constant 0 : index
    %c0_13 = arith.constant 0 : index
    %27 = vector.load %arg5[%c0_12, %c0_13] : memref<1x768xf32, #tpu.memory_space<vmem>>, vector<1x768xf32>
    %28 = vector.broadcast %27 : vector<1x768xf32> to vector<2x768xf32>
    %29 = arith.addf %26, %28 : vector<2x768xf32>
    %c0_14 = arith.constant 0 : index
    %c0_15 = arith.constant 0 : index
    %30 = vector.load %arg6[%c0_14, %c0_15] : memref<768x128xf32, #tpu.memory_space<vmem>>, vector<768x128xf32>
    %cst_16 = arith.constant dense<0.000000e+00> : vector<2x128xf32>
    %31 = tpu.matmul %29, %30, %cst_16 {dimension_numbers = #tpu.dot_dimension_numbers<[1], [0], [0], [1], [0, 0, 1, 1], [], []>} : vector<2x768xf32>, vector<768x128xf32>, vector<2x128xf32> -> vector<2x128xf32>
    %c0_17 = arith.constant 0 : index
    %c0_18 = arith.constant 0 : index
    %32 = vector.load %arg7[%c0_17, %c0_18] : memref<1x128xf32, #tpu.memory_space<vmem>>, vector<1x128xf32>
    %33 = vector.broadcast %32 : vector<1x128xf32> to vector<2x128xf32>
    %34 = arith.addf %31, %33 : vector<2x128xf32>
    %c0_19 = arith.constant 0 : index
    %c0_20 = arith.constant 0 : index
    %35 = vector.load %arg8[%c0_19, %c0_20] : memref<2x128xf32, #tpu.memory_space<vmem>>, vector<2x128xf32>
    tpu.vector_store %arg8[%c0_19, %c0_20], %34 {strides = array<i32>} : memref<2x128xf32, #tpu.memory_space<vmem>>, vector<2x128xf32>,
    return
  }
  func.func @transform_0(%arg0: i32) -> (i32, i32) {
    %c0_i32 = arith.constant 0 : i32
    %c0_i32_0 = arith.constant 0 : i32
    %c0_i32_1 = arith.constant 0 : i32
    return %c0_i32, %c0_i32_0 : i32, i32
  }
  func.func @transform_1(%arg0: i32) -> (i32, i32) {
    %c0_i32 = arith.constant 0 : i32
    %c0_i32_0 = arith.constant 0 : i32
    %c0_i32_1 = arith.constant 0 : i32
    return %c0_i32, %c0_i32_0 : i32, i32
  }
  func.func @transform_2(%arg0: i32) -> (i32, i32) {
    %c0_i32 = arith.constant 0 : i32
    %c0_i32_0 = arith.constant 0 : i32
    %c0_i32_1 = arith.constant 0 : i32
    return %c0_i32, %c0_i32_0 : i32, i32
  }
  func.func @transform_3(%arg0: i32) -> (i32, i32) {
    %c0_i32 = arith.constant 0 : i32
    %c0_i32_0 = arith.constant 0 : i32
    %c0_i32_1 = arith.constant 0 : i32
    return %c0_i32, %c0_i32_0 : i32, i32
  }
  func.func @transform_4(%arg0: i32) -> (i32, i32) {
    %c0_i32 = arith.constant 0 : i32
    %c0_i32_0 = arith.constant 0 : i32
    %c0_i32_1 = arith.constant 0 : i32
    return %c0_i32, %c0_i32_0 : i32, i32
  }
  func.func @transform_5(%arg0: i32) -> (i32, i32) {
    %c0_i32 = arith.constant 0 : i32
    %c0_i32_0 = arith.constant 0 : i32
    %c0_i32_1 = arith.constant 0 : i32
    return %c0_i32, %c0_i32_0 : i32, i32
  }
  func.func @transform_6(%arg0: i32) -> (i32, i32) {
    %c0_i32 = arith.constant 0 : i32
    %c0_i32_0 = arith.constant 0 : i32
    %c0_i32_1 = arith.constant 0 : i32
    return %c0_i32, %c0_i32_0 : i32, i32
  }
  func.func @transform_7(%arg0: i32) -> (i32, i32) {
    %c0_i32 = arith.constant 0 : i32
    %c0_i32_0 = arith.constant 0 : i32
    %c0_i32_1 = arith.constant 0 : i32
    return %c0_i32, %c0_i32_0 : i32, i32
  }
}

</mosaic_0001>

<llo_original>
// kernel: model_forward.2
$region0: #{model_forward.2}
  #allocation0 [shape = 'u32[]', space=smem, size = 0x4, offset = 0x4, fixed_abs, tag = 'smem constant byte address 0x4 - core index']
  #allocation1 [shape = 'u32[144,128]{1,0:T(1,128)}', space=vmem, size = 0x12000, scoped, tag = 'internal scratch']
  %s0 = inlined_call_operand.hbm [shape: f32[6,2,2,32,32], index: 0, kind: input, shape index: {}]
  %s1 = inlined_call_operand.vmem [shape: f32[6,2,16,32], index: 1, kind: output, shape index: {}]
  %s2 = sld [smem:[#allocation0]]
  $region49: #{model_forward.2} parent=0
    _
  %s4 = ssub.s32 1, %s2
  %s5 = scalar_select 0, %s4, %s2
  $region1: #{model_forward.2} parent=0
    #allocation2 [shape = 'u8[393216]{0}', space=vmem, size = 0x60000, scoped, tag = 'input window, operand 0']
    #allocation3 [shape = 's32[2]{0}', space=sflag, size = 0x8, scoped, tag = 'scoped memory for model_forward.2']
    %6 = vsyncpa [#allocation3], 0
    %s7 = scalar_lea.sflag [#allocation3], 1
    %8 = vsyncpa %s7, 0
    loop: start=0, step=1, limit=4
    $region2: #{model_forward.2} parent=1 // loop_pre_header
      _
    $region3: #{model_forward.2} parent=1 // loop_header
      %s10 = sphi 0, %s14
      %p11 = scmp.ge.s32.totalorder %s10, 4
      %s17 = sphi 0, %s29
      %s18 = sphi 0, %s25
      %s19 = sphi 0, %s17
      %s20 = sphi 0, %s18
      %s21 = sphi 0, %s19
      %s22 = sphi 0, %s20
      %s34 = sphi 0, %s36
      %s37 = sphi 0, %s34
      %s38 = sphi 0, %s37
      %s54 = sphi 0, %s38
      %s60 = sphi 0, %s62
      %s63 = sphi 0, %s60
      %s64 = sphi 0, %s63
      %s80 = sphi 0, %s64
    $region4: #{model_forward.2} parent=1 // loop_header_branch
      %13 = sbr.rel (%p11) target = $region8
    $region5: #{model_forward.2} parent=1 // loop_body
      %s15 = ssub.s32 %s10, 1
      %s16 = ssub.s32 %s10, 2
      %s23 = sadd.s32 1, %s18
      %p24 = scmp.ge.s32.totalorder %s23, 1
      %s25 = scalar_select %p24, 0, %s23
      %s26 = sadd.s32 1, %s17
      %s27 = scalar_select %p24, %s26, %s17
      %p28 = scmp.ge.s32.totalorder %s27, 2
      %s29 = scalar_select %p28, 0, %s27
      %s30 = ssub.s32 %s17, %s29
      %s31 = ssub.s32 %s18, %s25
      %s32 = sor.u32 %s30, %s31
      %p33 = scmp.eq.s32.totalorder %s32, 0
      %s35 = sadd.s32 %s34, 1
      %s36 = scalar_select %p33, %s34, %s35
      %p39 = pneg %p33
      %p40 = scmp.eq.s32.totalorder %s10, 1
      %p41 = por %p39, %p40
      %p42 = scmp.ne.s32.totalorder %s34, %s37
      %p43 = scmp.eq.s32.totalorder %s10, 0
      %p44 = por %p42, %p43
      %p45 = scmp.ne.s32.totalorder %s34, %s37
      %p46 = scmp.eq.s32.totalorder %s15, 1
      %p47 = por %p45, %p46
      %p48 = scmp.ne.s32.totalorder %s37, %s38
      %p49 = scmp.eq.s32.totalorder %s15, 0
      %p50 = por %p48, %p49
      %p51 = scmp.ne.s32.totalorder %s37, %s38
      %p52 = scmp.eq.s32.totalorder %s16, 1
      %p53 = por %p51, %p52
      %p55 = scmp.ne.s32.totalorder %s38, %s54
      %p56 = scmp.eq.s32.totalorder %s16, 0
      %p57 = por %p55, %p56
      %s58 = ssub.s32 %s17, %s29
      %p59 = scmp.eq.s32.totalorder %s58, 0
      %s61 = sadd.s32 %s60, 1
      %s62 = scalar_select %p59, %s60, %s61
      %p65 = pneg %p59
      %p66 = scmp.eq.s32.totalorder %s10, 1
      %p67 = por %p65, %p66
      %p68 = scmp.ne.s32.totalorder %s60, %s63
      %p69 = scmp.eq.s32.totalorder %s10, 0
      %p70 = por %p68, %p69
      %p71 = scmp.ne.s32.totalorder %s60, %s63
      %p72 = scmp.eq.s32.totalorder %s15, 1
      %p73 = por %p71, %p72
      %p74 = scmp.ne.s32.totalorder %s63, %s64
      %p75 = scmp.eq.s32.totalorder %s15, 0
      %p76 = por %p74, %p75
      %p77 = scmp.ne.s32.totalorder %s63, %s64
      %p78 = scmp.eq.s32.totalorder %s16, 1
      %p79 = por %p77, %p78
      %p81 = scmp.ne.s32.totalorder %s64, %s80
      %p82 = scmp.eq.s32.totalorder %s16, 0
      %p83 = por %p81, %p82
      %p84 = scmp.le.s32.totalorder 1, %s10
      %p85 = scmp.lt.s32.totalorder %s10, 3
      %p86 = pnand %p84, %p85
      %p87 = pneg %p86
      // Predicated region
      $region9: #{model_forward.2} parent=5 // pred_check
        _
      $region10: #{model_forward.2} parent=5 // pred_check_branch
        %89 = sbr.rel (%p86) target = $region12
      $region11: #{model_forward.2} parent=5 // pred_region
        %s90 = ssub.s32 %s10, 1
      $region12: #{model_forward.2} parent=5 // pred_fallthru
        _
      %p91 = scmp.lt.s32.totalorder %s10, 2
      // Predicated region
      $region13: #{model_forward.2} parent=5 // pred_check
        %p92 = pneg %p91
      $region14: #{model_forward.2} parent=5 // pred_check_branch
        %94 = sbr.rel (%p92) target = $region16
      $region15: #{model_forward.2} parent=5 // pred_region
        // Predicated region
        $region17: #{model_forward.2} parent=15 // pred_check
          %p95 = pneg %p44
        $region18: #{model_forward.2} parent=15 // pred_check_branch
          %97 = sbr.rel (%p95) target = $region20
        $region19: #{model_forward.2} parent=15 // pred_region
          %s98 = sand.u32 %s34, 1
          %s99 = scalar_lea.sflag [#allocation3], %s98
          %s100 = sand.u32 %s34, 1
          %s101 = smul.addr %s100, 384
          %s102 = scalar_lea.vmem [#allocation2], %s101
          %s103 = smul.u32 3, %s17
          %s104 = smul.u32 2, %s18
          %s106 = ssub.s32 6144, 6144
          %107 = vsyncadd %s99, %s106
          %s108 = smul.addr %s104, 8
          %s109 = smul.addr %s103, 16
          %s110 = sadd.s32 %s108, %s109
          %s111 = smul.addr %s110, 128
          %s112 = scalar_lea.hbm %s0, %s111
          %s113 = sshll.u32 %s102, 4
          %s114 = int_to_ptr.vmem [resolvable:$true] %s113
          %119 = dma.hbm_to_vmem [thread:$0]  %s112, 6144, %s114, %s99, 128, 128, 8
        $region20: #{model_forward.2} parent=15 // pred_fallthru
          _
      $region16: #{model_forward.2} parent=5 // pred_fallthru
        _
      %p120 = scmp.le.s32.totalorder 1, %s10
      %p121 = scmp.lt.s32.totalorder %s10, 3
      %p122 = pnand %p120, %p121
      %p123 = pneg %p122
      // Predicated region
      $region21: #{model_forward.2} parent=5 // pred_check
        _
      $region22: #{model_forward.2} parent=5 // pred_check_branch
        %125 = sbr.rel (%p122) target = $region24
      $region23: #{model_forward.2} parent=5 // pred_region
        %s126 = ssub.s32 %s10, 1
        %s127 = sand.u32 %s37, 1
        %s128 = scalar_lea.sflag [#allocation3], %s127
        %s129 = sand.u32 %s37, 1
        %s130 = smul.addr %s129, 384
        %s131 = scalar_lea.vmem [#allocation2], %s130
        // Predicated region
        $region25: #{model_forward.2} parent=23 // pred_check
          %p132 = pneg %p50
        $region26: #{model_forward.2} parent=23 // pred_check_branch
          %134 = sbr.rel (%p132) target = $region28
        $region27: #{model_forward.2} parent=23 // pred_region
          %135 = dma.done %s128, 6144
        $region28: #{model_forward.2} parent=23 // pred_fallthru
          _
        %s136 = sand.u32 %s37, 1
        %s137 = scalar_lea.sflag [#allocation3], %s136
        %s138 = sand.u32 %s37, 1
        %s139 = smul.addr %s138, 384
        %s140 = scalar_lea.vmem [#allocation2], %s139
        %p141 = pneg %p50
        %p142 = pneg %p47
        %p143 = pneg %p76
        %p144 = pneg %p73
        %s145 = smul.u32 3, %s19
        %p146 = scmp.lt.s32.totalorder %s145, 5
        %s147 = scalar_select %p146, %s145, 5
        %s148 = smul.addr %s147, 4
        %s149 = smul.addr %s148, 8
        %s150 = scalar_lea.vmem %s1, %s149
        %s151 = smul.u32 3, %s19
        %s152 = smul.u32 2, %s20
        %s153 = smul.u32 3, %s19
        %p154 = scmp.lt.s32.totalorder %s153, 5
        %s155 = scalar_select %p154, %s153, 5
        %s156 = smul.addr %s155, 4
        %s157 = smul.addr %s156, 8
        %s158 = scalar_lea.vmem %s1, %s157
        %s159 = smul.u32 3, %s19
        %p160 = scmp.eq.s32.totalorder %s20, 0
        // Predicated region
        $region29: #{model_forward.2} parent=23 // pred_check
          %p161 = pneg %p160
        $region30: #{model_forward.2} parent=23 // pred_check_branch
          %163 = sbr.rel (%p161) target = $region32
        $region31: #{model_forward.2} parent=23 // pred_region
          %vm164 = vcmask 261120
          %165 = vst.msk [vmem:[%s158] sm:$0xff] %vm164, 0.0
          %166 = vst.msk [vmem:[%s158 + $0x8] sm:$0xff] %vm164, 0.0
          %167 = vst.msk [vmem:[%s158 + $0x10] sm:$0xff] %vm164, 0.0
          %168 = vst.msk [vmem:[%s158 + $0x18] sm:$0xff] %vm164, 0.0
          %169 = vst.msk [vmem:[%s158 + $0x20] sm:$0xff] %vm164, 0.0
          %170 = vst.msk [vmem:[%s158 + $0x28] sm:$0xff] %vm164, 0.0
          %171 = vst.msk [vmem:[%s158 + $0x30] sm:$0xff] %vm164, 0.0
          %172 = vst.msk [vmem:[%s158 + $0x38] sm:$0xff] %vm164, 0.0
          %173 = vst.msk [vmem:[%s158 + $0x40] sm:$0xff] %vm164, 0.0
          %174 = vst.msk [vmem:[%s158 + $0x48] sm:$0xff] %vm164, 0.0
          %175 = vst.msk [vmem:[%s158 + $0x50] sm:$0xff] %vm164, 0.0
          %176 = vst.msk [vmem:[%s158 + $0x58] sm:$0xff] %vm164, 0.0
        $region32: #{model_forward.2} parent=23 // pred_fallthru
          _
        %v177 = vld [vmem:[%s131] sm:$0xff]
        %v178 = vld [vmem:[%s131 + $0x8] sm:$0xff]
        %v179 = vld [vmem:[%s131 + $0x10] sm:$0xff]
        %v180 = vld [vmem:[%s131 + $0x18] sm:$0xff]
        %v181 = vld [vmem:[%s131 + $0x20] sm:$0xff]
        %v182 = vld [vmem:[%s131 + $0x28] sm:$0xff]
        %v183 = vld [vmem:[%s131 + $0x30] sm:$0xff]
        %v184 = vld [vmem:[%s131 + $0x38] sm:$0xff]
        %v185 = vld [vmem:[%s131 + $0x40] sm:$0xff]
        %v186 = vld [vmem:[%s131 + $0x48] sm:$0xff]
        %v187 = vld [vmem:[%s131 + $0x50] sm:$0xff]
        %v188 = vld [vmem:[%s131 + $0x58] sm:$0xff]
        %v189 = vld [vmem:[%s131 + $0x60] sm:$0xff]
        %v190 = vld [vmem:[%s131 + $0x68] sm:$0xff]
        %v191 = vld [vmem:[%s131 + $0x70] sm:$0xff]
        %v192 = vld [vmem:[%s131 + $0x78] sm:$0xff]
        %v193 = vld [vmem:[%s131 + $0x80] sm:$0xff]
        %v194 = vld [vmem:[%s131 + $0x88] sm:$0xff]
        %v195 = vld [vmem:[%s131 + $0x90] sm:$0xff]
        %v196 = vld [vmem:[%s131 + $0x98] sm:$0xff]
        %v197 = vld [vmem:[%s131 + $0xa0] sm:$0xff]
        %v198 = vld [vmem:[%s131 + $0xa8] sm:$0xff]
        %v199 = vld [vmem:[%s131 + $0xb0] sm:$0xff]
        %v200 = vld [vmem:[%s131 + $0xb8] sm:$0xff]
        %v201 = vld [vmem:[%s131 + $0xc0] sm:$0xff]
        %v202 = vld [vmem:[%s131 + $0xc8] sm:$0xff]
        %v203 = vld [vmem:[%s131 + $0xd0] sm:$0xff]
        %v204 = vld [vmem:[%s131 + $0xd8] sm:$0xff]
        %v205 = vld [vmem:[%s131 + $0xe0] sm:$0xff]
        %v206 = vld [vmem:[%s131 + $0xe8] sm:$0xff]
        %v207 = vld [vmem:[%s131 + $0xf0] sm:$0xff]
        %v208 = vld [vmem:[%s131 + $0xf8] sm:$0xff]
        %v209 = vld [vmem:[%s131 + $0x100] sm:$0xff]
        %v210 = vld [vmem:[%s131 + $0x108] sm:$0xff]
        %v211 = vld [vmem:[%s131 + $0x110] sm:$0xff]
        %v212 = vld [vmem:[%s131 + $0x118] sm:$0xff]
        %v213 = vld [vmem:[%s131 + $0x120] sm:$0xff]
        %v214 = vld [vmem:[%s131 + $0x128] sm:$0xff]
        %v215 = vld [vmem:[%s131 + $0x130] sm:$0xff]
        %v216 = vld [vmem:[%s131 + $0x138] sm:$0xff]
        %v217 = vld [vmem:[%s131 + $0x140] sm:$0xff]
        %v218 = vld [vmem:[%s131 + $0x148] sm:$0xff]
        %v219 = vld [vmem:[%s131 + $0x150] sm:$0xff]
        %v220 = vld [vmem:[%s131 + $0x158] sm:$0xff]
        %v221 = vld [vmem:[%s131 + $0x160] sm:$0xff]
        %v222 = vld [vmem:[%s131 + $0x168] sm:$0xff]
        %v223 = vld [vmem:[%s131 + $0x170] sm:$0xff]
        %v224 = vld [vmem:[%s131 + $0x178] sm:$0xff]
        %vm225 = vcmask 261120
        %v226 = vsel %vm225, %v177, 0.0
        %v227 = vsel %vm225, %v185, 0.0
        %v228 = vadd.f32 %v226, %v227
        %v229 = vsel %vm225, %v178, 0.0
        %v230 = vsel %vm225, %v186, 0.0
        %v231 = vadd.f32 %v229, %v230
        %v232 = vsel %vm225, %v179, 0.0
        %v233 = vsel %vm225, %v187, 0.0
        %v234 = vadd.f32 %v232, %v233
        %v235 = vsel %vm225, %v180, 0.0
        %v236 = vsel %vm225, %v188, 0.0
        %v237 = vadd.f32 %v235, %v236
        %v238 = vsel %vm225, %v181, 0.0
        %v239 = vsel %vm225, %v189, 0.0
        %v240 = vadd.f32 %v238, %v239
        %v241 = vsel %vm225, %v182, 0.0
        %v242 = vsel %vm225, %v190, 0.0
        %v243 = vadd.f32 %v241, %v242
        %v244 = vsel %vm225, %v183, 0.0
        %v245 = vsel %vm225, %v191, 0.0
        %v246 = vadd.f32 %v244, %v245
        %v247 = vsel %vm225, %v184, 0.0
        %v248 = vsel %vm225, %v192, 0.0
        %v249 = vadd.f32 %v247, %v248
        %v250 = vsel %vm225, %v193, 0.0
        %v251 = vsel %vm225, %v201, 0.0
        %v252 = vadd.f32 %v250, %v251
        %v253 = vsel %vm225, %v194, 0.0
        %v254 = vsel %vm225, %v202, 0.0
        %v255 = vadd.f32 %v253, %v254
        %v256 = vsel %vm225, %v195, 0.0
        %v257 = vsel %vm225, %v203, 0.0
        %v258 = vadd.f32 %v256, %v257
        %v259 = vsel %vm225, %v196, 0.0
        %v260 = vsel %vm225, %v204, 0.0
        %v261 = vadd.f32 %v259, %v260
        %v262 = vsel %vm225, %v197, 0.0
        %v263 = vsel %vm225, %v205, 0.0
        %v264 = vadd.f32 %v262, %v263
        %v265 = vsel %vm225, %v198, 0.0
        %v266 = vsel %vm225, %v206, 0.0
        %v267 = vadd.f32 %v265, %v266
        %v268 = vsel %vm225, %v199, 0.0
        %v269 = vsel %vm225, %v207, 0.0
        %v270 = vadd.f32 %v268, %v269
        %v271 = vsel %vm225, %v200, 0.0
        %v272 = vsel %vm225, %v208, 0.0
        %v273 = vadd.f32 %v271, %v272
        %v274 = vsel %vm225, %v209, 0.0
        %v275 = vsel %vm225, %v217, 0.0
        %v276 = vadd.f32 %v274, %v275
        %v277 = vsel %vm225, %v210, 0.0
        %v278 = vsel %vm225, %v218, 0.0
        %v279 = vadd.f32 %v277, %v278
        %v280 = vsel %vm225, %v211, 0.0
        %v281 = vsel %vm225, %v219, 0.0
        %v282 = vadd.f32 %v280, %v281
        %v283 = vsel %vm225, %v212, 0.0
        %v284 = vsel %vm225, %v220, 0.0
        %v285 = vadd.f32 %v283, %v284
        %v286 = vsel %vm225, %v213, 0.0
        %v287 = vsel %vm225, %v221, 0.0
        %v288 = vadd.f32 %v286, %v287
        %v289 = vsel %vm225, %v214, 0.0
        %v290 = vsel %vm225, %v222, 0.0
        %v291 = vadd.f32 %v289, %v290
        %v292 = vsel %vm225, %v215, 0.0
        %v293 = vsel %vm225, %v223, 0.0
        %v294 = vadd.f32 %v292, %v293
        %v295 = vsel %vm225, %v216, 0.0
        %v296 = vsel %vm225, %v224, 0.0
        %v297 = vadd.f32 %v295, %v296
        %v298 = vadd.f32 %v228, %v234
        %v299 = vadd.f32 %v231, %v237
        %v300 = vadd.f32 %v240, %v246
        %v301 = vadd.f32 %v243, %v249
        %v302 = vadd.f32 %v252, %v258
        %v303 = vadd.f32 %v255, %v261
        %v304 = vadd.f32 %v264, %v270
        %v305 = vadd.f32 %v267, %v273
        %v306 = vadd.f32 %v276, %v282
        %v307 = vadd.f32 %v279, %v285
        %v308 = vadd.f32 %v288, %v294
        %v309 = vadd.f32 %v291, %v297
        %v310 = vld [vmem:[%s158] sm:$0xff]
        %v311 = vld [vmem:[%s158 + $0x8] sm:$0xff]
        %v312 = vld [vmem:[%s158 + $0x10] sm:$0xff]
        %v313 = vld [vmem:[%s158 + $0x18] sm:$0xff]
        %v314 = vld [vmem:[%s158 + $0x20] sm:$0xff]
        %v315 = vld [vmem:[%s158 + $0x28] sm:$0xff]
        %v316 = vld [vmem:[%s158 + $0x30] sm:$0xff]
        %v317 = vld [vmem:[%s158 + $0x38] sm:$0xff]
        %v318 = vld [vmem:[%s158 + $0x40] sm:$0xff]
        %v319 = vld [vmem:[%s158 + $0x48] sm:$0xff]
        %v320 = vld [vmem:[%s158 + $0x50] sm:$0xff]
        %v321 = vld [vmem:[%s158 + $0x58] sm:$0xff]
        %v322 = vadd.f32 %v310, %v298
        %v323 = vadd.f32 %v311, %v299
        %v324 = vadd.f32 %v312, %v300
        %v325 = vadd.f32 %v313, %v301
        %v326 = vadd.f32 %v314, %v302
        %v327 = vadd.f32 %v315, %v303
        %v328 = vadd.f32 %v316, %v304
        %v329 = vadd.f32 %v317, %v305
        %v330 = vadd.f32 %v318, %v306
        %v331 = vadd.f32 %v319, %v307
        %v332 = vadd.f32 %v320, %v308
        %v333 = vadd.f32 %v321, %v309
        %334 = vst.msk [vmem:[%s158] sm:$0xff] %vm225, %v322
        %335 = vst.msk [vmem:[%s158 + $0x8] sm:$0xff] %vm225, %v323
        %336 = vst.msk [vmem:[%s158 + $0x10] sm:$0xff] %vm225, %v324
        %337 = vst.msk [vmem:[%s158 + $0x18] sm:$0xff] %vm225, %v325
        %338 = vst.msk [vmem:[%s158 + $0x20] sm:$0xff] %vm225, %v326
        %339 = vst.msk [vmem:[%s158 + $0x28] sm:$0xff] %vm225, %v327
        %340 = vst.msk [vmem:[%s158 + $0x30] sm:$0xff] %vm225, %v328
        %341 = vst.msk [vmem:[%s158 + $0x38] sm:$0xff] %vm225, %v329
        %342 = vst.msk [vmem:[%s158 + $0x40] sm:$0xff] %vm225, %v330
        %343 = vst.msk [vmem:[%s158 + $0x48] sm:$0xff] %vm225, %v331
        %344 = vst.msk [vmem:[%s158 + $0x50] sm:$0xff] %vm225, %v332
        %345 = vst.msk [vmem:[%s158 + $0x58] sm:$0xff] %vm225, %v333
        // Predicated region
        $region33: #{model_forward.2} parent=23 // pred_check
          %p346 = pneg %p160
        $region34: #{model_forward.2} parent=23 // pred_check_branch
          %348 = sbr.rel (%p346) target = $region36
        $region35: #{model_forward.2} parent=23 // pred_region
          %v349 = vld [vmem:[%s158] sm:$0xff]
          %v350 = vld [vmem:[%s158 + $0x8] sm:$0xff]
          %v351 = vld [vmem:[%s158 + $0x10] sm:$0xff]
          %v352 = vld [vmem:[%s158 + $0x18] sm:$0xff]
          %v353 = vld [vmem:[%s158 + $0x20] sm:$0xff]
          %v354 = vld [vmem:[%s158 + $0x28] sm:$0xff]
          %v355 = vld [vmem:[%s158 + $0x30] sm:$0xff]
          %v356 = vld [vmem:[%s158 + $0x38] sm:$0xff]
          %v357 = vld [vmem:[%s158 + $0x40] sm:$0xff]
          %v358 = vld [vmem:[%s158 + $0x48] sm:$0xff]
          %v359 = vld [vmem:[%s158 + $0x50] sm:$0xff]
          %v360 = vld [vmem:[%s158 + $0x58] sm:$0xff]
          %v361 = vmul.f32 %v349, 0.125
          %v362 = vmul.f32 %v350, 0.125
          %v363 = vmul.f32 %v351, 0.125
          %v364 = vmul.f32 %v352, 0.125
          %v365 = vmul.f32 %v353, 0.125
          %v366 = vmul.f32 %v354, 0.125
          %v367 = vmul.f32 %v355, 0.125
          %v368 = vmul.f32 %v356, 0.125
          %v369 = vmul.f32 %v357, 0.125
          %v370 = vmul.f32 %v358, 0.125
          %v371 = vmul.f32 %v359, 0.125
          %v372 = vmul.f32 %v360, 0.125
          %373 = vst.msk [vmem:[%s158] sm:$0xff] %vm225, %v361
          %374 = vst.msk [vmem:[%s158 + $0x8] sm:$0xff] %vm225, %v362
          %375 = vst.msk [vmem:[%s158 + $0x10] sm:$0xff] %vm225, %v363
          %376 = vst.msk [vmem:[%s158 + $0x18] sm:$0xff] %vm225, %v364
          %377 = vst.msk [vmem:[%s158 + $0x20] sm:$0xff] %vm225, %v365
          %378 = vst.msk [vmem:[%s158 + $0x28] sm:$0xff] %vm225, %v366
          %379 = vst.msk [vmem:[%s158 + $0x30] sm:$0xff] %vm225, %v367
          %380 = vst.msk [vmem:[%s158 + $0x38] sm:$0xff] %vm225, %v368
          %381 = vst.msk [vmem:[%s158 + $0x40] sm:$0xff] %vm225, %v369
          %382 = vst.msk [vmem:[%s158 + $0x48] sm:$0xff] %vm225, %v370
          %383 = vst.msk [vmem:[%s158 + $0x50] sm:$0xff] %vm225, %v371
          %384 = vst.msk [vmem:[%s158 + $0x58] sm:$0xff] %vm225, %v372
        $region36: #{model_forward.2} parent=23 // pred_fallthru
          _
        %s385 = smul.u32 3, %s19
        %p386 = scmp.lt.s32.totalorder %s385, 5
        %s387 = scalar_select %p386, %s385, 5
        %s388 = smul.addr %s387, 4
        %s389 = smul.addr %s388, 8
        %s390 = scalar_lea.vmem %s1, %s389
        // Predicated region
        $region37: #{model_forward.2} parent=23 // pred_check
          %p391 = pneg %p73
        $region38: #{model_forward.2} parent=23 // pred_check_branch
          %393 = sbr.rel (%p391) target = $region40
        $region39: #{model_forward.2} parent=23 // pred_region
          %s394 = smul.u32 3, %s19
        $region40: #{model_forward.2} parent=23 // pred_fallthru
          _
      $region24: #{model_forward.2} parent=5 // pred_fallthru
        _
      %p395 = scmp.le.s32.totalorder 2, %s10
      // Predicated region
      $region41: #{model_forward.2} parent=5 // pred_check
        %p396 = pneg %p395
      $region42: #{model_forward.2} parent=5 // pred_check_branch
        %398 = sbr.rel (%p396) target = $region44
      $region43: #{model_forward.2} parent=5 // pred_region
        %s399 = ssub.s32 %s10, 2
        // Predicated region
        $region45: #{model_forward.2} parent=43 // pred_check
          %p400 = pneg %p79
        $region46: #{model_forward.2} parent=43 // pred_check_branch
          %402 = sbr.rel (%p400) target = $region48
        $region47: #{model_forward.2} parent=43 // pred_region
          %s403 = smul.u32 3, %s21
          %p404 = scmp.lt.s32.totalorder %s403, 5
          %s405 = scalar_select %p404, %s403, 5
          %s406 = smul.addr %s405, 4
          %s407 = smul.addr %s406, 8
          %s408 = scalar_lea.vmem %s1, %s407
        $region48: #{model_forward.2} parent=43 // pred_fallthru
          _
      $region44: #{model_forward.2} parent=5 // pred_fallthru
        _
    $region6: #{model_forward.2} parent=1 // loop_footer
      %s14 = sadd.s32 1, %s10
    $region7: #{model_forward.2} parent=1 // loop_footer_branch
      %9 = sbr.rel target = $region3
    $region8: #{model_forward.2} parent=1 // loop_exit
      _
    %409 = vsyncpa [#allocation3], 1
    %s410 = scalar_lea.sflag [#allocation3], 1
    %411 = vsyncpa %s410, 1

// kernel: model_forward.3
$region0: #{model_forward.3}
  #allocation0 [shape = 'u32[]', space=smem, size = 0x4, offset = 0x4, fixed_abs, tag = 'smem constant byte address 0x4 - core index']
  #allocation1 [shape = 'u32[144,128]{1,0:T(1,128)}', space=vmem, size = 0x12000, scoped, tag = 'internal scratch']
  %s0 = inlined_call_operand.vmem [shape: f32[2,1536], index: 0, kind: input, shape index: {}]
  %s1 = inlined_call_operand.hbm [shape: f32[1536,768], index: 1, kind: input, shape index: {}]
  %s2 = inlined_call_operand.hbm [shape: f32[1,768], index: 2, kind: input, shape index: {}]
  %s3 = inlined_call_operand.hbm [shape: f32[1,768], index: 3, kind: input, shape index: {}]
  %s4 = inlined_call_operand.hbm [shape: f32[1,768], index: 4, kind: input, shape index: {}]
  %s5 = inlined_call_operand.hbm [shape: f32[768,128], index: 5, kind: input, shape index: {}]
  %s6 = inlined_call_operand.hbm [shape: f32[1,128], index: 6, kind: input, shape index: {}]
  %s7 = inlined_call_operand.hbm [shape: f32[2,128], index: 7, kind: output, shape index: {}]
  %s8 = sld [smem:[#allocation0]]
  $region62: #{model_forward.3} parent=0
    _
  %s10 = ssub.s32 1, %s8
  %s11 = scalar_select 0, %s10, %s8
  $region1: #{model_forward.3} parent=0
    #allocation2 [shape = 'u8[4718592]{0}', space=vmem, size = 0x480000, scoped, tag = 'input window, operand 1, single buffered']
    #allocation3 [shape = 's32[1]{0}', space=sflag, size = 0x4, scoped, tag = 'scoped memory for model_forward.3']
    #allocation4 [shape = 's32[1]{0}', space=sflag, size = 0x4, scoped, tag = 'scoped memory for model_forward.3']
    #allocation5 [shape = 'u8[3072]{0}', space=vmem, size = 0xc00, scoped, tag = 'input window, operand 2, single buffered']
    #allocation6 [shape = 's32[1]{0}', space=sflag, size = 0x4, scoped, tag = 'scoped memory for model_forward.3']
    #allocation7 [shape = 'u8[3072]{0}', space=vmem, size = 0xc00, scoped, tag = 'input window, operand 3, single buffered']
    #allocation8 [shape = 'u8[3072]{0}', space=vmem, size = 0xc00, scoped, tag = 'input window, operand 4, single buffered']
    #allocation9 [shape = 's32[1]{0}', space=sflag, size = 0x4, scoped, tag = 'scoped memory for model_forward.3']
    #allocation10 [shape = 'u8[393216]{0}', space=vmem, size = 0x60000, scoped, tag = 'input window, operand 5, single buffered']
    #allocation11 [shape = 'u8[512]{0}', space=vmem, size = 0x400, scoped, tag = 'input window, operand 6, single buffered']
    #allocation12 [shape = 's32[1]{0}', space=sflag, size = 0x4, scoped, tag = 'scoped memory for model_forward.3']
    #allocation13 [shape = 'u8[1024]{0}', space=vmem, size = 0x400, scoped, tag = 'output window, operand 0, single buffered']
    %12 = vsyncpa [#allocation3], 0
    %13 = vsyncpa [#allocation6], 0
    %14 = vsyncpa [#allocation9], 0
    %15 = vsyncpa [#allocation12], 0
    %16 = vsyncpa [#allocation4], 0
    // Predicated region
    $region2: #{model_forward.3} parent=1 // pred_check
      _
    $region3: #{model_forward.3} parent=1 // pred_check_branch
      %18 = sbr.rel (0) target = $region5
    $region4: #{model_forward.3} parent=1 // pred_region
      _
    $region5: #{model_forward.3} parent=1 // pred_fallthru
      _
    // Predicated region
    $region6: #{model_forward.3} parent=1 // pred_check
      _
    $region7: #{model_forward.3} parent=1 // pred_check_branch
      %20 = sbr.rel (0) target = $region9
    $region8: #{model_forward.3} parent=1 // pred_region
      %s22 = ssub.s32 147456, 147456
      %23 = vsyncadd [#allocation3], %s22
      %s24 = sshll.u32 [#allocation2], 4
      %s25 = int_to_ptr.vmem [resolvable:$true] %s24
      %30 = dma.hbm_to_vmem [thread:$0]  %s1, 147456, %s25, [#allocation3], 768, 768, 48
    $region9: #{model_forward.3} parent=1 // pred_fallthru
      _
    // Predicated region
    $region10: #{model_forward.3} parent=1 // pred_check
      _
    $region11: #{model_forward.3} parent=1 // pred_check_branch
      %32 = sbr.rel (0) target = $region13
    $region12: #{model_forward.3} parent=1 // pred_region
      %s34 = ssub.s32 96, 96
      %35 = vsyncadd [#allocation6], %s34
      %s37 = sshll.u32 [#allocation5], 4
      %s38 = int_to_ptr.vmem [resolvable:$true] %s37
      %40 = dma.hbm_to_vmem [thread:$0]  %s2, 96, %s38, [#allocation6]
    $region13: #{model_forward.3} parent=1 // pred_fallthru
      _
    // Predicated region
    $region14: #{model_forward.3} parent=1 // pred_check
      _
    $region15: #{model_forward.3} parent=1 // pred_check_branch
      %42 = sbr.rel (0) target = $region17
    $region16: #{model_forward.3} parent=1 // pred_region
      %s44 = ssub.s32 96, 96
      %45 = vsyncadd [#allocation6], %s44
      %s47 = sshll.u32 [#allocation7], 4
      %s48 = int_to_ptr.vmem [resolvable:$true] %s47
      %50 = dma.hbm_to_vmem [thread:$0]  %s3, 96, %s48, [#allocation6]
    $region17: #{model_forward.3} parent=1 // pred_fallthru
      _
    // Predicated region
    $region18: #{model_forward.3} parent=1 // pred_check
      _
    $region19: #{model_forward.3} parent=1 // pred_check_branch
      %52 = sbr.rel (0) target = $region21
    $region20: #{model_forward.3} parent=1 // pred_region
      %s54 = ssub.s32 96, 96
      %55 = vsyncadd [#allocation9], %s54
      %s57 = sshll.u32 [#allocation8], 4
      %s58 = int_to_ptr.vmem [resolvable:$true] %s57
      %60 = dma.hbm_to_vmem [thread:$0]  %s4, 96, %s58, [#allocation9]
    $region21: #{model_forward.3} parent=1 // pred_fallthru
      _
    // Predicated region
    $region22: #{model_forward.3} parent=1 // pred_check
      _
    $region23: #{model_forward.3} parent=1 // pred_check_branch
      %62 = sbr.rel (0) target = $region25
    $region24: #{model_forward.3} parent=1 // pred_region
      %s64 = ssub.s32 12288, 12288
      %65 = vsyncadd [#allocation9], %s64
      %s66 = sshll.u32 [#allocation10], 4
      %s67 = int_to_ptr.vmem [resolvable:$true] %s66
      %72 = dma.hbm_to_vmem [thread:$0]  %s5, 12288, %s67, [#allocation9], 128, 128, 8
    $region25: #{model_forward.3} parent=1 // pred_fallthru
      _
    // Predicated region
    $region26: #{model_forward.3} parent=1 // pred_check
      _
    $region27: #{model_forward.3} parent=1 // pred_check_branch
      %74 = sbr.rel (0) target = $region29
    $region28: #{model_forward.3} parent=1 // pred_region
      %s76 = ssub.s32 16, 16
      %77 = vsyncadd [#allocation12], %s76
      %s79 = sshll.u32 [#allocation11], 4
      %s80 = int_to_ptr.vmem [resolvable:$true] %s79
      %82 = dma.hbm_to_vmem [thread:$0]  %s6, 16, %s80, [#allocation12]
    $region29: #{model_forward.3} parent=1 // pred_fallthru
      _
    // Predicated region
    $region30: #{model_forward.3} parent=1 // pred_check
      _
    $region31: #{model_forward.3} parent=1 // pred_check_branch
      %84 = sbr.rel (0) target = $region33
    $region32: #{model_forward.3} parent=1 // pred_region
      %85 = dma.done [#allocation3], 147456
    $region33: #{model_forward.3} parent=1 // pred_fallthru
      _
    // Predicated region
    $region34: #{model_forward.3} parent=1 // pred_check
      _
    $region35: #{model_forward.3} parent=1 // pred_check_branch
      %87 = sbr.rel (0) target = $region37
    $region36: #{model_forward.3} parent=1 // pred_region
      %88 = dma.done [#allocation6], 96
    $region37: #{model_forward.3} parent=1 // pred_fallthru
      _
    // Predicated region
    $region38: #{model_forward.3} parent=1 // pred_check
      _
    $region39: #{model_forward.3} parent=1 // pred_check_branch
      %90 = sbr.rel (0) target = $region41
    $region40: #{model_forward.3} parent=1 // pred_region
      %91 = dma.done [#allocation6], 96
    $region41: #{model_forward.3} parent=1 // pred_fallthru
      _
    // Predicated region
    $region42: #{model_forward.3} parent=1 // pred_check
      _
    $region43: #{model_forward.3} parent=1 // pred_check_branch
      %93 = sbr.rel (0) target = $region45
    $region44: #{model_forward.3} parent=1 // pred_region
      %94 = dma.done [#allocation9], 96
    $region45: #{model_forward.3} parent=1 // pred_fallthru
      _
    // Predicated region
    $region46: #{model_forward.3} parent=1 // pred_check
      _
    $region47: #{model_forward.3} parent=1 // pred_check_branch
      %96 = sbr.rel (0) target = $region49
    $region48: #{model_forward.3} parent=1 // pred_region
      %97 = dma.done [#allocation9], 12288
    $region49: #{model_forward.3} parent=1 // pred_fallthru
      _
    // Predicated region
    $region50: #{model_forward.3} parent=1 // pred_check
      _
    $region51: #{model_forward.3} parent=1 // pred_check_branch
      %99 = sbr.rel (0) target = $region53
    $region52: #{model_forward.3} parent=1 // pred_region
      %100 = dma.done [#allocation12], 16
    $region53: #{model_forward.3} parent=1 // pred_fallthru
      _
    %v101 = vld [vmem:[%s0] sm:$0xff]
    %v102 = vld [vmem:[%s0 + $0x8] sm:$0xff]
    %v103 = vld [vmem:[%s0 + $0x10] sm:$0xff]
    %v104 = vld [vmem:[#allocation2] sm:$0xff]
    %v105 = vld [vmem:[#allocation2 + $0x8] sm:$0xff]
    %v106 = vld [vmem:[#allocation2 + $0x10] sm:$0xff]
    %v107 = vld [vmem:[#allocation2 + $0x18] sm:$0xff]
    %v108 = vld [vmem:[#allocation2 + $0x20] sm:$0xff]
    %v109 = vld [vmem:[#allocation2 + $0x28] sm:$0xff]
    %v110 = vld [vmem:[#allocation2 + $0x30] sm:$0xff]
    %v111 = vld [vmem:[#allocation2 + $0x38] sm:$0xff]
    %v112 = vld [vmem:[#allocation2 + $0x40] sm:$0xff]
    %v113 = vld [vmem:[#allocation2 + $0x48] sm:$0xff]
    %v114 = vld [vmem:[#allocation2 + $0x50] sm:$0xff]
    %v115 = vld [vmem:[#allocation2 + $0x58] sm:$0xff]
    %v116 = vld [vmem:[#allocation2 + $0x60] sm:$0xff]
    %v117 = vld [vmem:[#allocation2 + $0x68] sm:$0xff]
    %v118 = vld [vmem:[#allocation2 + $0x70] sm:$0xff]
    %v119 = vld [vmem:[#allocation2 + $0x78] sm:$0xff]
    %v120 = vld [vmem:[#allocation2 + $0x80] sm:$0xff]
    %v121 = vld [vmem:[#allocation2 + $0x88] sm:$0xff]
    %v122 = vld [vmem:[#allocation2 + $0x90] sm:$0xff]
    %v123 = vld [vmem:[#allocation2 + $0x98] sm:$0xff]
    %v124 = vld [vmem:[#allocation2 + $0xa0] sm:$0xff]
    %v125 = vld [vmem:[#allocation2 + $0xa8] sm:$0xff]
    %v126 = vld [vmem:[#allocation2 + $0xb0] sm:$0xff]
    %v127 = vld [vmem:[#allocation2 + $0xb8] sm:$0xff]
    %v128 = vld [vmem:[#allocation2 + $0xc0] sm:$0xff]
    %v129 = vld [vmem:[#allocation2 + $0xc8] sm:$0xff]
    %v130 = vld [vmem:[#allocation2 + $0xd0] sm:$0xff]
    %v131 = vld [vmem:[#allocation2 + $0xd8] sm:$0xff]
    %v132 = vld [vmem:[#allocation2 + $0xe0] sm:$0xff]
    %v133 = vld [vmem:[#allocation2 + $0xe8] sm:$0xff]
    %v134 = vld [vmem:[#allocation2 + $0xf0] sm:$0xff]
    %v135 = vld [vmem:[#allocation2 + $0xf8] sm:$0xff]
    %v136 = vld [vmem:[#allocation2 + $0x100] sm:$0xff]
    %v137 = vld [vmem:[#allocation2 + $0x108] sm:$0xff]
    %v138 = vld [vmem:[#allocation2 + $0x110] sm:$0xff]
    %v139 = vld [vmem:[#allocation2 + $0x118] sm:$0xff]
    %v140 = vld [vmem:[#allocation2 + $0x120] sm:$0xff]
    %v141 = vld [vmem:[#allocation2 + $0x128] sm:$0xff]
    %v142 = vld [vmem:[#allocation2 + $0x130] sm:$0xff]
    %v143 = vld [vmem:[#allocation2 + $0x138] sm:$0xff]
    %v144 = vld [vmem:[#allocation2 + $0x140] sm:$0xff]
    %v145 = vld [vmem:[#allocation2 + $0x148] sm:$0xff]
    %v146 = vld [vmem:[#allocation2 + $0x150] sm:$0xff]
    %v147 = vld [vmem:[#allocation2 + $0x158] sm:$0xff]
    %v148 = vld [vmem:[#allocation2 + $0x160] sm:$0xff]
    %v149 = vld [vmem:[#allocation2 + $0x168] sm:$0xff]
    %v150 = vld [vmem:[#allocation2 + $0x170] sm:$0xff]
    %v151 = vld [vmem:[#allocation2 + $0x178] sm:$0xff]
    %v152 = vld [vmem:[#allocation2 + $0x180] sm:$0xff]
    %v153 = vld [vmem:[#allocation2 + $0x188] sm:$0xff]
    %v154 = vld [vmem:[#allocation2 + $0x190] sm:$0xff]
    %v155 = vld [vmem:[#allocation2 + $0x198] sm:$0xff]
    %v156 = vld [vmem:[#allocation2 + $0x1a0] sm:$0xff]
    %v157 = vld [vmem:[#allocation2 + $0x1a8] sm:$0xff]
    %v158 = vld [vmem:[#allocation2 + $0x1b0] sm:$0xff]
    %v159 = vld [vmem:[#allocation2 + $0x1b8] sm:$0xff]
    %v160 = vld [vmem:[#allocation2 + $0x1c0] sm:$0xff]
    %v161 = vld [vmem:[#allocation2 + $0x1c8] sm:$0xff]
    %v162 = vld [vmem:[#allocation2 + $0x1d0] sm:$0xff]
    %v163 = vld [vmem:[#allocation2 + $0x1d8] sm:$0xff]
    %v164 = vld [vmem:[#allocation2 + $0x1e0] sm:$0xff]
    %v165 = vld [vmem:[#allocation2 + $0x1e8] sm:$0xff]
    %v166 = vld [vmem:[#allocation2 + $0x1f0] sm:$0xff]
    %v167 = vld [vmem:[#allocation2 + $0x1f8] sm:$0xff]
    %v168 = vld [vmem:[#allocation2 + $0x200] sm:$0xff]
    %v169 = vld [vmem:[#allocation2 + $0x208] sm:$0xff]
    %v170 = vld [vmem:[#allocation2 + $0x210] sm:$0xff]
    %v171 = vld [vmem:[#allocation2 + $0x218] sm:$0xff]
    %v172 = vld [vmem:[#allocation2 + $0x220] sm:$0xff]
    %v173 = vld [vmem:[#allocation2 + $0x228] sm:$0xff]
    %v174 = vld [vmem:[#allocation2 + $0x230] sm:$0xff]
    %v175 = vld [vmem:[#allocation2 + $0x238] sm:$0xff]
    %v176 = vld [vmem:[#allocation2 + $0x240] sm:$0xff]
    %v177 = vld [vmem:[#allocation2 + $0x248] sm:$0xff]
    %v178 = vld [vmem:[#allocation2 + $0x250] sm:$0xff]
    %v179 = vld [vmem:[#allocation2 + $0x258] sm:$0xff]
    %v180 = vld [vmem:[#allocation2 + $0x260] sm:$0xff]
    %v181 = vld [vmem:[#allocation2 + $0x268] sm:$0xff]
    %v182 = vld [vmem:[#allocation2 + $0x270] sm:$0xff]
    %v183 = vld [vmem:[#allocation2 + $0x278] sm:$0xff]
    %v184 = vld [vmem:[#allocation2 + $0x280] sm:$0xff]
    %v185 = vld [vmem:[#allocation2 + $0x288] sm:$0xff]
    %v186 = vld [vmem:[#allocation2 + $0x290] sm:$0xff]
    %v187 = vld [vmem:[#allocation2 + $0x298] sm:$0xff]
    %v188 = vld [vmem:[#allocation2 + $0x2a0] sm:$0xff]
    %v189 = vld [vmem:[#allocation2 + $0x2a8] sm:$0xff]
    %v190 = vld [vmem:[#allocation2 + $0x2b0] sm:$0xff]
    %v191 = vld [vmem:[#allocation2 + $0x2b8] sm:$0xff]
    %v192 = vld [vmem:[#allocation2 + $0x2c0] sm:$0xff]
    %v193 = vld [vmem:[#allocation2 + $0x2c8] sm:$0xff]
    %v194 = vld [vmem:[#allocation2 + $0x2d0] sm:$0xff]
    %v195 = vld [vmem:[#allocation2 + $0x2d8] sm:$0xff]
    %v196 = vld [vmem:[#allocation2 + $0x2e0] sm:$0xff]
    %v197 = vld [vmem:[#allocation2 + $0x2e8] sm:$0xff]
    %v198 = vld [vmem:[#allocation2 + $0x2f0] sm:$0xff]
    %v199 = vld [vmem:[#allocation2 + $0x2f8] sm:$0xff]
    %v200 = vld [vmem:[#allocation2 + $0x300] sm:$0xff]
    %v201 = vld [vmem:[#allocation2 + $0x308] sm:$0xff]
    %v202 = vld [vmem:[#allocation2 + $0x310] sm:$0xff]
    %v203 = vld [vmem:[#allocation2 + $0x318] sm:$0xff]
    %v204 = vld [vmem:[#allocation2 + $0x320] sm:$0xff]
    %v205 = vld [vmem:[#allocation2 + $0x328] sm:$0xff]
    %v206 = vld [vmem:[#allocation2 + $0x330] sm:$0xff]
    %v207 = vld [vmem:[#allocation2 + $0x338] sm:$0xff]
    %v208 = vld [vmem:[#allocation2 + $0x340] sm:$0xff]
    %v209 = vld [vmem:[#allocation2 + $0x348] sm:$0xff]
    %v210 = vld [vmem:[#allocation2 + $0x350] sm:$0xff]
    %v211 = vld [vmem:[#allocation2 + $0x358] sm:$0xff]
    %v212 = vld [vmem:[#allocation2 + $0x360] sm:$0xff]
    %v213 = vld [vmem:[#allocation2 + $0x368] sm:$0xff]
    %v214 = vld [vmem:[#allocation2 + $0x370] sm:$0xff]
    %v215 = vld [vmem:[#allocation2 + $0x378] sm:$0xff]
    %v216 = vld [vmem:[#allocation2 + $0x380] sm:$0xff]
    %v217 = vld [vmem:[#allocation2 + $0x388] sm:$0xff]
    %v218 = vld [vmem:[#allocation2 + $0x390] sm:$0xff]
    %v219 = vld [vmem:[#allocation2 + $0x398] sm:$0xff]
    %v220 = vld [vmem:[#allocation2 + $0x3a0] sm:$0xff]
    %v221 = vld [vmem:[#allocation2 + $0x3a8] sm:$0xff]
    %v222 = vld [vmem:[#allocation2 + $0x3b0] sm:$0xff]
    %v223 = vld [vmem:[#allocation2 + $0x3b8] sm:$0xff]
    %v224 = vld [vmem:[#allocation2 + $0x3c0] sm:$0xff]
    %v225 = vld [vmem:[#allocation2 + $0x3c8] sm:$0xff]
    %v226 = vld [vmem:[#allocation2 + $0x3d0] sm:$0xff]
    %v227 = vld [vmem:[#allocation2 + $0x3d8] sm:$0xff]
    %v228 = vld [vmem:[#allocation2 + $0x3e0] sm:$0xff]
    %v229 = vld [vmem:[#allocation2 + $0x3e8] sm:$0xff]
    %v230 = vld [vmem:[#allocation2 + $0x3f0] sm:$0xff]
    %v231 = vld [vmem:[#allocation2 + $0x3f8] sm:$0xff]
    %v232 = vld [vmem:[#allocation2 + $0x400] sm:$0xff]
    %v233 = vld [vmem:[#allocation2 + $0x408] sm:$0xff]
    %v234 = vld [vmem:[#allocation2 + $0x410] sm:$0xff]
    %v235 = vld [vmem:[#allocation2 + $0x418] sm:$0xff]
    %v236 = vld [vmem:[#allocation2 + $0x420] sm:$0xff]
    %v237 = vld [vmem:[#allocation2 + $0x428] sm:$0xff]
    %v238 = vld [vmem:[#allocation2 + $0x430] sm:$0xff]
    %v239 = vld [vmem:[#allocation2 + $0x438] sm:$0xff]
    %v240 = vld [vmem:[#allocation2 + $0x440] sm:$0xff]
    %v241 = vld [vmem:[#allocation2 + $0x448] sm:$0xff]
    %v242 = vld [vmem:[#allocation2 + $0x450] sm:$0xff]
    %v243 = vld [vmem:[#allocation2 + $0x458] sm:$0xff]
    %v244 = vld [vmem:[#allocation2 + $0x460] sm:$0xff]
    %v245 = vld [vmem:[#allocation2 + $0x468] sm:$0xff]
    %v246 = vld [vmem:[#allocation2 + $0x470] sm:$0xff]
    %v247 = vld [vmem:[#allocation2 + $0x478] sm:$0xff]
    %v248 = vld [vmem:[#allocation2 + $0x480] sm:$0xff]
    %v249 = vld [vmem:[#allocation2 + $0x488] sm:$0xff]
    %v250 = vld [vmem:[#allocation2 + $0x490] sm:$0xff]
    %v251 = vld [vmem:[#allocation2 + $0x498] sm:$0xff]
    %v252 = vld [vmem:[#allocation2 + $0x4a0] sm:$0xff]
    %v253 = vld [vmem:[#allocation2 + $0x4a8] sm:$0xff]
    %v254 = vld [vmem:[#allocation2 + $0x4b0] sm:$0xff]
    %v255 = vld [vmem:[#allocation2 + $0x4b8] sm:$0xff]
    %v256 = vld [vmem:[#allocation2 + $0x4c0] sm:$0xff]
    %v257 = vld [vmem:[#allocation2 + $0x4c8] sm:$0xff]
    %v258 = vld [vmem:[#allocation2 + $0x4d0] sm:$0xff]
    %v259 = vld [vmem:[#allocation2 + $0x4d8] sm:$0xff]
    %v260 = vld [vmem:[#allocation2 + $0x4e0] sm:$0xff]
    %v261 = vld [vmem:[#allocation2 + $0x4e8] sm:$0xff]
    %v262 = vld [vmem:[#allocation2 + $0x4f0] sm:$0xff]
    %v263 = vld [vmem:[#allocation2 + $0x4f8] sm:$0xff]
    %v264 = vld [vmem:[#allocation2 + $0x500] sm:$0xff]
    %v265 = vld [vmem:[#allocation2 + $0x508] sm:$0xff]
    %v266 = vld [vmem:[#allocation2 + $0x510] sm:$0xff]
    %v267 = vld [vmem:[#allocation2 + $0x518] sm:$0xff]
    %v268 = vld [vmem:[#allocation2 + $0x520] sm:$0xff]
    %v269 = vld [vmem:[#allocation2 + $0x528] sm:$0xff]
    %v270 = vld [vmem:[#allocation2 + $0x530] sm:$0xff]
    %v271 = vld [vmem:[#allocation2 + $0x538] sm:$0xff]
    %v272 = vld [vmem:[#allocation2 + $0x540] sm:$0xff]
    %v273 = vld [vmem:[#allocation2 + $0x548] sm:$0xff]
    %v274 = vld [vmem:[#allocation2 + $0x550] sm:$0xff]
    %v275 = vld [vmem:[#allocation2 + $0x558] sm:$0xff]
    %v276 = vld [vmem:[#allocation2 + $0x560] sm:$0xff]
    %v277 = vld [vmem:[#allocation2 + $0x568] sm:$0xff]
    %v278 = vld [vmem:[#allocation2 + $0x570] sm:$0xff]
    %v279 = vld [vmem:[#allocation2 + $0x578] sm:$0xff]
    %v280 = vld [vmem:[#allocation2 + $0x580] sm:$0xff]
    %v281 = vld [vmem:[#allocation2 + $0x588] sm:$0xff]
    %v282 = vld [vmem:[#allocation2 + $0x590] sm:$0xff]
    %v283 = vld [vmem:[#allocation2 + $0x598] sm:$0xff]
    %v284 = vld [vmem:[#allocation2 + $0x5a0] sm:$0xff]
    %v285 = vld [vmem:[#allocation2 + $0x5a8] sm:$0xff]
    %v286 = vld [vmem:[#allocation2 + $0x5b0] sm:$0xff]
    %v287 = vld [vmem:[#allocation2 + $0x5b8] sm:$0xff]
    %v288 = vld [vmem:[#allocation2 + $0x5c0] sm:$0xff]
    %v289 = vld [vmem:[#allocation2 + $0x5c8] sm:$0xff]
    %v290 = vld [vmem:[#allocation2 + $0x5d0] sm:$0xff]
    %v291 = vld [vmem:[#allocation2 + $0x5d8] sm:$0xff]
    %v292 = vld [vmem:[#allocation2 + $0x5e0] sm:$0xff]
    %v293 = vld [vmem:[#allocation2 + $0x5e8] sm:$0xff]
    %v294 = vld [vmem:[#allocation2 + $0x5f0] sm:$0xff]
    %v295 = vld [vmem:[#allocation2 + $0x5f8] sm:$0xff]
    %v296 = vld [vmem:[#allocation2 + $0x600] sm:$0xff]
    %v297 = vld [vmem:[#allocation2 + $0x608] sm:$0xff]
    %v298 = vld [vmem:[#allocation2 + $0x610] sm:$0xff]
    %v299 = vld [vmem:[#allocation2 + $0x618] sm:$0xff]
    %v300 = vld [vmem:[#allocation2 + $0x620] sm:$0xff]
    %v301 = vld [vmem:[#allocation2 + $0x628] sm:$0xff]
    %v302 = vld [vmem:[#allocation2 + $0x630] sm:$0xff]
    %v303 = vld [vmem:[#allocation2 + $0x638] sm:$0xff]
    %v304 = vld [vmem:[#allocation2 + $0x640] sm:$0xff]
    %v305 = vld [vmem:[#allocation2 + $0x648] sm:$0xff]
    %v306 = vld [vmem:[#allocation2 + $0x650] sm:$0xff]
    %v307 = vld [vmem:[#allocation2 + $0x658] sm:$0xff]
    %v308 = vld [vmem:[#allocation2 + $0x660] sm:$0xff]
    %v309 = vld [vmem:[#allocation2 + $0x668] sm:$0xff]
    %v310 = vld [vmem:[#allocation2 + $0x670] sm:$0xff]
    %v311 = vld [vmem:[#allocation2 + $0x678] sm:$0xff]
    %v312 = vld [vmem:[#allocation2 + $0x680] sm:$0xff]
    %v313 = vld [vmem:[#allocation2 + $0x688] sm:$0xff]
    %v314 = vld [vmem:[#allocation2 + $0x690] sm:$0xff]
    %v315 = vld [vmem:[#allocation2 + $0x698] sm:$0xff]
    %v316 = vld [vmem:[#allocation2 + $0x6a0] sm:$0xff]
    %v317 = vld [vmem:[#allocation2 + $0x6a8] sm:$0xff]
    %v318 = vld [vmem:[#allocation2 + $0x6b0] sm:$0xff]
    %v319 = vld [vmem:[#allocation2 + $0x6b8] sm:$0xff]
    %v320 = vld [vmem:[#allocation2 + $0x6c0] sm:$0xff]
    %v321 = vld [vmem:[#allocation2 + $0x6c8] sm:$0xff]
    %v322 = vld [vmem:[#allocation2 + $0x6d0] sm:$0xff]
    %v323 = vld [vmem:[#allocation2 + $0x6d8] sm:$0xff]
    %v324 = vld [vmem:[#allocation2 + $0x6e0] sm:$0xff]
    %v325 = vld [vmem:[#allocation2 + $0x6e8] sm:$0xff]
    %v326 = vld [vmem:[#allocation2 + $0x6f0] sm:$0xff]
    %v327 = vld [vmem:[#allocation2 + $0x6f8] sm:$0xff]
    %v328 = vld [vmem:[#allocation2 + $0x700] sm:$0xff]
    %v329 = vld [vmem:[#allocation2 + $0x708] sm:$0xff]
    %v330 = vld [vmem:[#allocation2 + $0x710] sm:$0xff]
    %v331 = vld [vmem:[#allocation2 + $0x718] sm:$0xff]
    %v332 = vld [vmem:[#allocation2 + $0x720] sm:$0xff]
    %v333 = vld [vmem:[#allocation2 + $0x728] sm:$0xff]
    %v334 = vld [vmem:[#allocation2 + $0x730] sm:$0xff]
    %v335 = vld [vmem:[#allocation2 + $0x738] sm:$0xff]
    %v336 = vld [vmem:[#allocation2 + $0x740] sm:$0xff]
    %v337 = vld [vmem:[#allocation2 + $0x748] sm:$0xff]
    %v338 = vld [vmem:[#allocation2 + $0x750] sm:$0xff]
    %v339 = vld [vmem:[#allocation2 + $0x758] sm:$0xff]
    %v340 = vld [vmem:[#allocation2 + $0x760] sm:$0xff]
    %v341 = vld [vmem:[#allocation2 + $0x768] sm:$0xff]
    %v342 = vld [vmem:[#allocation2 + $0x770] sm:$0xff]
    %v343 = vld [vmem:[#allocation2 + $0x778] sm:$0xff]
    %v344 = vld [vmem:[#allocation2 + $0x780] sm:$0xff]
    %v345 = vld [vmem:[#allocation2 + $0x788] sm:$0xff]
    %v346 = vld [vmem:[#allocation2 + $0x790] sm:$0xff]
    %v347 = vld [vmem:[#allocation2 + $0x798] sm:$0xff]
    %v348 = vld [vmem:[#allocation2 + $0x7a0] sm:$0xff]
    %v349 = vld [vmem:[#allocation2 + $0x7a8] sm:$0xff]
    %v350 = vld [vmem:[#allocation2 + $0x7b0] sm:$0xff]
    %v351 = vld [vmem:[#allocation2 + $0x7b8] sm:$0xff]
    %v352 = vld [vmem:[#allocation2 + $0x7c0] sm:$0xff]
    %v353 = vld [vmem:[#allocation2 + $0x7c8] sm:$0xff]
    %v354 = vld [vmem:[#allocation2 + $0x7d0] sm:$0xff]
    %v355 = vld [vmem:[#allocation2 + $0x7d8] sm:$0xff]
    %v356 = vld [vmem:[#allocation2 + $0x7e0] sm:$0xff]
    %v357 = vld [vmem:[#allocation2 + $0x7e8] sm:$0xff]
    %v358 = vld [vmem:[#allocation2 + $0x7f0] sm:$0xff]
    %v359 = vld [vmem:[#allocation2 + $0x7f8] sm:$0xff]
    %v360 = vld [vmem:[#allocation2 + $0x800] sm:$0xff]
    %v361 = vld [vmem:[#allocation2 + $0x808] sm:$0xff]
    %v362 = vld [vmem:[#allocation2 + $0x810] sm:$0xff]
    %v363 = vld [vmem:[#allocation2 + $0x818] sm:$0xff]
    %v364 = vld [vmem:[#allocation2 + $0x820] sm:$0xff]
    %v365 = vld [vmem:[#allocation2 + $0x828] sm:$0xff]
    %v366 = vld [vmem:[#allocation2 + $0x830] sm:$0xff]
    %v367 = vld [vmem:[#allocation2 + $0x838] sm:$0xff]
    %v368 = vld [vmem:[#allocation2 + $0x840] sm:$0xff]
    %v369 = vld [vmem:[#allocation2 + $0x848] sm:$0xff]
    %v370 = vld [vmem:[#allocation2 + $0x850] sm:$0xff]
    %v371 = vld [vmem:[#allocation2 + $0x858] sm:$0xff]
    %v372 = vld [vmem:[#allocation2 + $0x860] sm:$0xff]
    %v373 = vld [vmem:[#allocation2 + $0x868] sm:$0xff]
    %v374 = vld [vmem:[#allocation2 + $0x870] sm:$0xff]
    %v375 = vld [vmem:[#allocation2 + $0x878] sm:$0xff]
    %v376 = vld [vmem:[#allocation2 + $0x880] sm:$0xff]
    %v377 = vld [vmem:[#allocation2 + $0x888] sm:$0xff]
    %v378 = vld [vmem:[#allocation2 + $0x890] sm:$0xff]
    %v379 = vld [vmem:[#allocation2 + $0x898] sm:$0xff]
    %v380 = vld [vmem:[#allocation2 + $0x8a0] sm:$0xff]
    %v381 = vld [vmem:[#allocation2 + $0x8a8] sm:$0xff]
    %v382 = vld [vmem:[#allocation2 + $0x8b0] sm:$0xff]
    %v383 = vld [vmem:[#allocation2 + $0x8b8] sm:$0xff]
    %v384 = vld [vmem:[#allocation2 + $0x8c0] sm:$0xff]
    %v385 = vld [vmem:[#allocation2 + $0x8c8] sm:$0xff]
    %v386 = vld [vmem:[#allocation2 + $0x8d0] sm:$0xff]
    %v387 = vld [vmem:[#allocation2 + $0x8d8] sm:$0xff]
    %v388 = vld [vmem:[#allocation2 + $0x8e0] sm:$0xff]
    %v389 = vld [vmem:[#allocation2 + $0x8e8] sm:$0xff]
    %v390 = vld [vmem:[#allocation2 + $0x8f0] sm:$0xff]
    %v391 = vld [vmem:[#allocation2 + $0x8f8] sm:$0xff]
    %v392 = vld [vmem:[#allocation2 + $0x900] sm:$0xff]
    %v393 = vld [vmem:[#allocation2 + $0x908] sm:$0xff]
    %v394 = vld [vmem:[#allocation2 + $0x910] sm:$0xff]
    %v395 = vld [vmem:[#allocation2 + $0x918] sm:$0xff]
    %v396 = vld [vmem:[#allocation2 + $0x920] sm:$0xff]
    %v397 = vld [vmem:[#allocation2 + $0x928] sm:$0xff]
    %v398 = vld [vmem:[#allocation2 + $0x930] sm:$0xff]
    %v399 = vld [vmem:[#allocation2 + $0x938] sm:$0xff]
    %v400 = vld [vmem:[#allocation2 + $0x940] sm:$0xff]
    %v401 = vld [vmem:[#allocation2 + $0x948] sm:$0xff]
    %v402 = vld [vmem:[#allocation2 + $0x950] sm:$0xff]
    %v403 = vld [vmem:[#allocation2 + $0x958] sm:$0xff]
    %v404 = vld [vmem:[#allocation2 + $0x960] sm:$0xff]
    %v405 = vld [vmem:[#allocation2 + $0x968] sm:$0xff]
    %v406 = vld [vmem:[#allocation2 + $0x970] sm:$0xff]
    %v407 = vld [vmem:[#allocation2 + $0x978] sm:$0xff]
    %v408 = vld [vmem:[#allocation2 + $0x980] sm:$0xff]
    %v409 = vld [vmem:[#allocation2 + $0x988] sm:$0xff]
    %v410 = vld [vmem:[#allocation2 + $0x990] sm:$0xff]
    %v411 = vld [vmem:[#allocation2 + $0x998] sm:$0xff]
    %v412 = vld [vmem:[#allocation2 + $0x9a0] sm:$0xff]
    %v413 = vld [vmem:[#allocation2 + $0x9a8] sm:$0xff]
    %v414 = vld [vmem:[#allocation2 + $0x9b0] sm:$0xff]
    %v415 = vld [vmem:[#allocation2 + $0x9b8] sm:$0xff]
    %v416 = vld [vmem:[#allocation2 + $0x9c0] sm:$0xff]
    %v417 = vld [vmem:[#allocation2 + $0x9c8] sm:$0xff]
    %v418 = vld [vmem:[#allocation2 + $0x9d0] sm:$0xff]
    %v419 = vld [vmem:[#allocation2 + $0x9d8] sm:$0xff]
    %v420 = vld [vmem:[#allocation2 + $0x9e0] sm:$0xff]
    %v421 = vld [vmem:[#allocation2 + $0x9e8] sm:$0xff]
    %v422 = vld [vmem:[#allocation2 + $0x9f0] sm:$0xff]
    %v423 = vld [vmem:[#allocation2 + $0x9f8] sm:$0xff]
    %v424 = vld [vmem:[#allocation2 + $0xa00] sm:$0xff]
    %v425 = vld [vmem:[#allocation2 + $0xa08] sm:$0xff]
    %v426 = vld [vmem:[#allocation2 + $0xa10] sm:$0xff]
    %v427 = vld [vmem:[#allocation2 + $0xa18] sm:$0xff]
    %v428 = vld [vmem:[#allocation2 + $0xa20] sm:$0xff]
    %v429 = vld [vmem:[#allocation2 + $0xa28] sm:$0xff]
    %v430 = vld [vmem:[#allocation2 + $0xa30] sm:$0xff]
    %v431 = vld [vmem:[#allocation2 + $0xa38] sm:$0xff]
    %v432 = vld [vmem:[#allocation2 + $0xa40] sm:$0xff]
    %v433 = vld [vmem:[#allocation2 + $0xa48] sm:$0xff]
    %v434 = vld [vmem:[#allocation2 + $0xa50] sm:$0xff]
    %v435 = vld [vmem:[#allocation2 + $0xa58] sm:$0xff]
    %v436 = vld [vmem:[#allocation2 + $0xa60] sm:$0xff]
    %v437 = vld [vmem:[#allocation2 + $0xa68] sm:$0xff]
    %v438 = vld [vmem:[#allocation2 + $0xa70] sm:$0xff]
    %v439 = vld [vmem:[#allocation2 + $0xa78] sm:$0xff]
    %v440 = vld [vmem:[#allocation2 + $0xa80] sm:$0xff]
    %v441 = vld [vmem:[#allocation2 + $0xa88] sm:$0xff]
    %v442 = vld [vmem:[#allocation2 + $0xa90] sm:$0xff]
    %v443 = vld [vmem:[#allocation2 + $0xa98] sm:$0xff]
    %v444 = vld [vmem:[#allocation2 + $0xaa0] sm:$0xff]
    %v445 = vld [vmem:[#allocation2 + $0xaa8] sm:$0xff]
    %v446 = vld [vmem:[#allocation2 + $0xab0] sm:$0xff]
    %v447 = vld [vmem:[#allocation2 + $0xab8] sm:$0xff]
    %v448 = vld [vmem:[#allocation2 + $0xac0] sm:$0xff]
    %v449 = vld [vmem:[#allocation2 + $0xac8] sm:$0xff]
    %v450 = vld [vmem:[#allocation2 + $0xad0] sm:$0xff]
    %v451 = vld [vmem:[#allocation2 + $0xad8] sm:$0xff]
    %v452 = vld [vmem:[#allocation2 + $0xae0] sm:$0xff]
    %v453 = vld [vmem:[#allocation2 + $0xae8] sm:$0xff]
    %v454 = vld [vmem:[#allocation2 + $0xaf0] sm:$0xff]
    %v455 = vld [vmem:[#allocation2 + $0xaf8] sm:$0xff]
    %v456 = vld [vmem:[#allocation2 + $0xb00] sm:$0xff]
    %v457 = vld [vmem:[#allocation2 + $0xb08] sm:$0xff]
    %v458 = vld [vmem:[#allocation2 + $0xb10] sm:$0xff]
    %v459 = vld [vmem:[#allocation2 + $0xb18] sm:$0xff]
    %v460 = vld [vmem:[#allocation2 + $0xb20] sm:$0xff]
    %v461 = vld [vmem:[#allocation2 + $0xb28] sm:$0xff]
    %v462 = vld [vmem:[#allocation2 + $0xb30] sm:$0xff]
    %v463 = vld [vmem:[#allocation2 + $0xb38] sm:$0xff]
    %v464 = vld [vmem:[#allocation2 + $0xb40] sm:$0xff]
    %v465 = vld [vmem:[#allocation2 + $0xb48] sm:$0xff]
    %v466 = vld [vmem:[#allocation2 + $0xb50] sm:$0xff]
    %v467 = vld [vmem:[#allocation2 + $0xb58] sm:$0xff]
    %v468 = vld [vmem:[#allocation2 + $0xb60] sm:$0xff]
    %v469 = vld [vmem:[#allocation2 + $0xb68] sm:$0xff]
    %v470 = vld [vmem:[#allocation2 + $0xb70] sm:$0xff]
    %v471 = vld [vmem:[#allocation2 + $0xb78] sm:$0xff]
    %v472 = vld [vmem:[#allocation2 + $0xb80] sm:$0xff]
    %v473 = vld [vmem:[#allocation2 + $0xb88] sm:$0xff]
    %v474 = vld [vmem:[#allocation2 + $0xb90] sm:$0xff]
    %v475 = vld [vmem:[#allocation2 + $0xb98] sm:$0xff]
    %v476 = vld [vmem:[#allocation2 + $0xba0] sm:$0xff]
    %v477 = vld [vmem:[#allocation2 + $0xba8] sm:$0xff]
    %v478 = vld [vmem:[#allocation2 + $0xbb0] sm:$0xff]
    %v479 = vld [vmem:[#allocation2 + $0xbb8] sm:$0xff]
    %v480 = vld [vmem:[#allocation2 + $0xbc0] sm:$0xff]
    %v481 = vld [vmem:[#allocation2 + $0xbc8] sm:$0xff]
    %v482 = vld [vmem:[#allocation2 + $0xbd0] sm:$0xff]
    %v483 = vld [vmem:[#allocation2 + $0xbd8] sm:$0xff]
    %v484 = vld [vmem:[#allocation2 + $0xbe0] sm:$0xff]
    %v485 = vld [vmem:[#allocation2 + $0xbe8] sm:$0xff]
    %v486 = vld [vmem:[#allocation2 + $0xbf0] sm:$0xff]
    %v487 = vld [vmem:[#allocation2 + $0xbf8] sm:$0xff]
    %v488 = vld [vmem:[#allocation2 + $0xc00] sm:$0xff]
    %v489 = vld [vmem:[#allocation2 + $0xc08] sm:$0xff]
    %v490 = vld [vmem:[#allocation2 + $0xc10] sm:$0xff]
    %v491 = vld [vmem:[#allocation2 + $0xc18] sm:$0xff]
    %v492 = vld [vmem:[#allocation2 + $0xc20] sm:$0xff]
    %v493 = vld [vmem:[#allocation2 + $0xc28] sm:$0xff]
    %v494 = vld [vmem:[#allocation2 + $0xc30] sm:$0xff]
    %v495 = vld [vmem:[#allocation2 + $0xc38] sm:$0xff]
    %v496 = vld [vmem:[#allocation2 + $0xc40] sm:$0xff]
    %v497 = vld [vmem:[#allocation2 + $0xc48] sm:$0xff]
    %v498 = vld [vmem:[#allocation2 + $0xc50] sm:$0xff]
    %v499 = vld [vmem:[#allocation2 + $0xc58] sm:$0xff]
    %v500 = vld [vmem:[#allocation2 + $0xc60] sm:$0xff]
    %v501 = vld [vmem:[#allocation2 + $0xc68] sm:$0xff]
    %v502 = vld [vmem:[#allocation2 + $0xc70] sm:$0xff]
    %v503 = vld [vmem:[#allocation2 + $0xc78] sm:$0xff]
    %v504 = vld [vmem:[#allocation2 + $0xc80] sm:$0xff]
    %v505 = vld [vmem:[#allocation2 + $0xc88] sm:$0xff]
    %v506 = vld [vmem:[#allocation2 + $0xc90] sm:$0xff]
    %v507 = vld [vmem:[#allocation2 + $0xc98] sm:$0xff]
    %v508 = vld [vmem:[#allocation2 + $0xca0] sm:$0xff]
    %v509 = vld [vmem:[#allocation2 + $0xca8] sm:$0xff]
    %v510 = vld [vmem:[#allocation2 + $0xcb0] sm:$0xff]
    %v511 = vld [vmem:[#allocation2 + $0xcb8] sm:$0xff]
    %v512 = vld [vmem:[#allocation2 + $0xcc0] sm:$0xff]
    %v513 = vld [vmem:[#allocation2 + $0xcc8] sm:$0xff]
    %v514 = vld [vmem:[#allocation2 + $0xcd0] sm:$0xff]
    %v515 = vld [vmem:[#allocation2 + $0xcd8] sm:$0xff]
    %v516 = vld [vmem:[#allocation2 + $0xce0] sm:$0xff]
    %v517 = vld [vmem:[#allocation2 + $0xce8] sm:$0xff]
    %v518 = vld [vmem:[#allocation2 + $0xcf0] sm:$0xff]
    %v519 = vld [vmem:[#allocation2 + $0xcf8] sm:$0xff]
    %v520 = vld [vmem:[#allocation2 + $0xd00] sm:$0xff]
    %v521 = vld [vmem:[#allocation2 + $0xd08] sm:$0xff]
    %v522 = vld [vmem:[#allocation2 + $0xd10] sm:$0xff]
    %v523 = vld [vmem:[#allocation2 + $0xd18] sm:$0xff]
    %v524 = vld [vmem:[#allocation2 + $0xd20] sm:$0xff]
    %v525 = vld [vmem:[#allocation2 + $0xd28] sm:$0xff]
    %v526 = vld [vmem:[#allocation2 + $0xd30] sm:$0xff]
    %v527 = vld [vmem:[#allocation2 + $0xd38] sm:$0xff]
    %v528 = vld [vmem:[#allocation2 + $0xd40] sm:$0xff]
    %v529 = vld [vmem:[#allocation2 + $0xd48] sm:$0xff]
    %v530 = vld [vmem:[#allocation2 + $0xd50] sm:$0xff]
    %v531 = vld [vmem:[#allocation2 + $0xd58] sm:$0xff]
    %v532 = vld [vmem:[#allocation2 + $0xd60] sm:$0xff]
    %v533 = vld [vmem:[#allocation2 + $0xd68] sm:$0xff]
    %v534 = vld [vmem:[#allocation2 + $0xd70] sm:$0xff]
    %v535 = vld [vmem:[#allocation2 + $0xd78] sm:$0xff]
    %v536 = vld [vmem:[#allocation2 + $0xd80] sm:$0xff]
    %v537 = vld [vmem:[#allocation2 + $0xd88] sm:$0xff]
    %v538 = vld [vmem:[#allocation2 + $0xd90] sm:$0xff]
    %v539 = vld [vmem:[#allocation2 + $0xd98] sm:$0xff]
    %v540 = vld [vmem:[#allocation2 + $0xda0] sm:$0xff]
    %v541 = vld [vmem:[#allocation2 + $0xda8] sm:$0xff]
    %v542 = vld [vmem:[#allocation2 + $0xdb0] sm:$0xff]
    %v543 = vld [vmem:[#allocation2 + $0xdb8] sm:$0xff]
    %v544 = vld [vmem:[#allocation2 + $0xdc0] sm:$0xff]
    %v545 = vld [vmem:[#allocation2 + $0xdc8] sm:$0xff]
    %v546 = vld [vmem:[#allocation2 + $0xdd0] sm:$0xff]
    %v547 = vld [vmem:[#allocation2 + $0xdd8] sm:$0xff]
    %v548 = vld [vmem:[#allocation2 + $0xde0] sm:$0xff]
    %v549 = vld [vmem:[#allocation2 + $0xde8] sm:$0xff]
    %v550 = vld [vmem:[#allocation2 + $0xdf0] sm:$0xff]
    %v551 = vld [vmem:[#allocation2 + $0xdf8] sm:$0xff]
    %v552 = vld [vmem:[#allocation2 + $0xe00] sm:$0xff]
    %v553 = vld [vmem:[#allocation2 + $0xe08] sm:$0xff]
    %v554 = vld [vmem:[#allocation2 + $0xe10] sm:$0xff]
    %v555 = vld [vmem:[#allocation2 + $0xe18] sm:$0xff]
    %v556 = vld [vmem:[#allocation2 + $0xe20] sm:$0xff]
    %v557 = vld [vmem:[#allocation2 + $0xe28] sm:$0xff]
    %v558 = vld [vmem:[#allocation2 + $0xe30] sm:$0xff]
    %v559 = vld [vmem:[#allocation2 + $0xe38] sm:$0xff]
    %v560 = vld [vmem:[#allocation2 + $0xe40] sm:$0xff]
    %v561 = vld [vmem:[#allocation2 + $0xe48] sm:$0xff]
    %v562 = vld [vmem:[#allocation2 + $0xe50] sm:$0xff]
    %v563 = vld [vmem:[#allocation2 + $0xe58] sm:$0xff]
    %v564 = vld [vmem:[#allocation2 + $0xe60] sm:$0xff]
    %v565 = vld [vmem:[#allocation2 + $0xe68] sm:$0xff]
    %v566 = vld [vmem:[#allocation2 + $0xe70] sm:$0xff]
    %v567 = vld [vmem:[#allocation2 + $0xe78] sm:$0xff]
    %v568 = vld [vmem:[#allocation2 + $0xe80] sm:$0xff]
    %v569 = vld [vmem:[#allocation2 + $0xe88] sm:$0xff]
    %v570 = vld [vmem:[#allocation2 + $0xe90] sm:$0xff]
    %v571 = vld [vmem:[#allocation2 + $0xe98] sm:$0xff]
    %v572 = vld [vmem:[#allocation2 + $0xea0] sm:$0xff]
    %v573 = vld [vmem:[#allocation2 + $0xea8] sm:$0xff]
    %v574 = vld [vmem:[#allocation2 + $0xeb0] sm:$0xff]
    %v575 = vld [vmem:[#allocation2 + $0xeb8] sm:$0xff]
    %v576 = vld [vmem:[#allocation2 + $0xec0] sm:$0xff]
    %v577 = vld [vmem:[#allocation2 + $0xec8] sm:$0xff]
    %v578 = vld [vmem:[#allocation2 + $0xed0] sm:$0xff]
    %v579 = vld [vmem:[#allocation2 + $0xed8] sm:$0xff]
    %v580 = vld [vmem:[#allocation2 + $0xee0] sm:$0xff]
    %v581 = vld [vmem:[#allocation2 + $0xee8] sm:$0xff]
    %v582 = vld [vmem:[#allocation2 + $0xef0] sm:$0xff]
    %v583 = vld [vmem:[#allocation2 + $0xef8] sm:$0xff]
    %v584 = vld [vmem:[#allocation2 + $0xf00] sm:$0xff]
    %v585 = vld [vmem:[#allocation2 + $0xf08] sm:$0xff]
    %v586 = vld [vmem:[#allocation2 + $0xf10] sm:$0xff]
    %v587 = vld [vmem:[#allocation2 + $0xf18] sm:$0xff]
    %v588 = vld [vmem:[#allocation2 + $0xf20] sm:$0xff]
    %v589 = vld [vmem:[#allocation2 + $0xf28] sm:$0xff]
    %v590 = vld [vmem:[#allocation2 + $0xf30] sm:$0xff]
    %v591 = vld [vmem:[#allocation2 + $0xf38] sm:$0xff]
    %v592 = vld [vmem:[#allocation2 + $0xf40] sm:$0xff]
    %v593 = vld [vmem:[#allocation2 + $0xf48] sm:$0xff]
    %v594 = vld [vmem:[#allocation2 + $0xf50] sm:$0xff]
    %v595 = vld [vmem:[#allocation2 + $0xf58] sm:$0xff]
    %v596 = vld [vmem:[#allocation2 + $0xf60] sm:$0xff]
    %v597 = vld [vmem:[#allocation2 + $0xf68] sm:$0xff]
    %v598 = vld [vmem:[#allocation2 + $0xf70] sm:$0xff]
    %v599 = vld [vmem:[#allocation2 + $0xf78] sm:$0xff]
    %v600 = vld [vmem:[#allocation2 + $0xf80] sm:$0xff]
    %v601 = vld [vmem:[#allocation2 + $0xf88] sm:$0xff]
    %v602 = vld [vmem:[#allocation2 + $0xf90] sm:$0xff]
    %v603 = vld [vmem:[#allocation2 + $0xf98] sm:$0xff]
    %v604 = vld [vmem:[#allocation2 + $0xfa0] sm:$0xff]
    %v605 = vld [vmem:[#allocation2 + $0xfa8] sm:$0xff]
    %v606 = vld [vmem:[#allocation2 + $0xfb0] sm:$0xff]
    %v607 = vld [vmem:[#allocation2 + $0xfb8] sm:$0xff]
    %v608 = vld [vmem:[#allocation2 + $0xfc0] sm:$0xff]
    %v609 = vld [vmem:[#allocation2 + $0xfc8] sm:$0xff]
    %v610 = vld [vmem:[#allocation2 + $0xfd0] sm:$0xff]
    %v611 = vld [vmem:[#allocation2 + $0xfd8] sm:$0xff]
    %v612 = vld [vmem:[#allocation2 + $0xfe0] sm:$0xff]
    %v613 = vld [vmem:[#allocation2 + $0xfe8] sm:$0xff]
    %v614 = vld [vmem:[#allocation2 + $0xff0] sm:$0xff]
    %v615 = vld [vmem:[#allocation2 + $0xff8] sm:$0xff]
    %v616 = vld [vmem:[#allocation2 + $0x1000] sm:$0xff]
    %v617 = vld [vmem:[#allocation2 + $0x1008] sm:$0xff]
    %v618 = vld [vmem:[#allocation2 + $0x1010] sm:$0xff]
    %v619 = vld [vmem:[#allocation2 + $0x1018] sm:$0xff]
    %v620 = vld [vmem:[#allocation2 + $0x1020] sm:$0xff]
    %v621 = vld [vmem:[#allocation2 + $0x1028] sm:$0xff]
    %v622 = vld [vmem:[#allocation2 + $0x1030] sm:$0xff]
    %v623 = vld [vmem:[#allocation2 + $0x1038] sm:$0xff]
    %v624 = vld [vmem:[#allocation2 + $0x1040] sm:$0xff]
    %v625 = vld [vmem:[#allocation2 + $0x1048] sm:$0xff]
    %v626 = vld [vmem:[#allocation2 + $0x1050] sm:$0xff]
    %v627 = vld [vmem:[#allocation2 + $0x1058] sm:$0xff]
    %v628 = vld [vmem:[#allocation2 + $0x1060] sm:$0xff]
    %v629 = vld [vmem:[#allocation2 + $0x1068] sm:$0xff]
    %v630 = vld [vmem:[#allocation2 + $0x1070] sm:$0xff]
    %v631 = vld [vmem:[#allocation2 + $0x1078] sm:$0xff]
    %v632 = vld [vmem:[#allocation2 + $0x1080] sm:$0xff]
    %v633 = vld [vmem:[#allocation2 + $0x1088] sm:$0xff]
    %v634 = vld [vmem:[#allocation2 + $0x1090] sm:$0xff]
    %v635 = vld [vmem:[#allocation2 + $0x1098] sm:$0xff]
    %v636 = vld [vmem:[#allocation2 + $0x10a0] sm:$0xff]
    %v637 = vld [vmem:[#allocation2 + $0x10a8] sm:$0xff]
    %v638 = vld [vmem:[#allocation2 + $0x10b0] sm:$0xff]
    %v639 = vld [vmem:[#allocation2 + $0x10b8] sm:$0xff]
    %v640 = vld [vmem:[#allocation2 + $0x10c0] sm:$0xff]
    %v641 = vld [vmem:[#allocation2 + $0x10c8] sm:$0xff]
    %v642 = vld [vmem:[#allocation2 + $0x10d0] sm:$0xff]
    %v643 = vld [vmem:[#allocation2 + $0x10d8] sm:$0xff]
    %v644 = vld [vmem:[#allocation2 + $0x10e0] sm:$0xff]
    %v645 = vld [vmem:[#allocation2 + $0x10e8] sm:$0xff]
    %v646 = vld [vmem:[#allocation2 + $0x10f0] sm:$0xff]
    %v647 = vld [vmem:[#allocation2 + $0x10f8] sm:$0xff]
    %v648 = vld [vmem:[#allocation2 + $0x1100] sm:$0xff]
    %v649 = vld [vmem:[#allocation2 + $0x1108] sm:$0xff]
    %v650 = vld [vmem:[#allocation2 + $0x1110] sm:$0xff]
    %v651 = vld [vmem:[#allocation2 + $0x1118] sm:$0xff]
    %v652 = vld [vmem:[#allocation2 + $0x1120] sm:$0xff]
    %v653 = vld [vmem:[#allocation2 + $0x1128] sm:$0xff]
    %v654 = vld [vmem:[#allocation2 + $0x1130] sm:$0xff]
    %v655 = vld [vmem:[#allocation2 + $0x1138] sm:$0xff]
    %v656 = vld [vmem:[#allocation2 + $0x1140] sm:$0xff]
    %v657 = vld [vmem:[#allocation2 + $0x1148] sm:$0xff]
    %v658 = vld [vmem:[#allocation2 + $0x1150] sm:$0xff]
    %v659 = vld [vmem:[#allocation2 + $0x1158] sm:$0xff]
    %v660 = vld [vmem:[#allocation2 + $0x1160] sm:$0xff]
    %v661 = vld [vmem:[#allocation2 + $0x1168] sm:$0xff]
    %v662 = vld [vmem:[#allocation2 + $0x1170] sm:$0xff]
    %v663 = vld [vmem:[#allocation2 + $0x1178] sm:$0xff]
    %v664 = vld [vmem:[#allocation2 + $0x1180] sm:$0xff]
    %v665 = vld [vmem:[#allocation2 + $0x1188] sm:$0xff]
    %v666 = vld [vmem:[#allocation2 + $0x1190] sm:$0xff]
    %v667 = vld [vmem:[#allocation2 + $0x1198] sm:$0xff]
    %v668 = vld [vmem:[#allocation2 + $0x11a0] sm:$0xff]
    %v669 = vld [vmem:[#allocation2 + $0x11a8] sm:$0xff]
    %v670 = vld [vmem:[#allocation2 + $0x11b0] sm:$0xff]
    %v671 = vld [vmem:[#allocation2 + $0x11b8] sm:$0xff]
    %v672 = vld [vmem:[#allocation2 + $0x11c0] sm:$0xff]
    %v673 = vld [vmem:[#allocation2 + $0x11c8] sm:$0xff]
    %v674 = vld [vmem:[#allocation2 + $0x11d0] sm:$0xff]
    %v675 = vld [vmem:[#allocation2 + $0x11d8] sm:$0xff]
    %v676 = vld [vmem:[#allocation2 + $0x11e0] sm:$0xff]
    %v677 = vld [vmem:[#allocation2 + $0x11e8] sm:$0xff]
    %v678 = vld [vmem:[#allocation2 + $0x11f0] sm:$0xff]
    %v679 = vld [vmem:[#allocation2 + $0x11f8] sm:$0xff]
    %v680 = vld [vmem:[#allocation2 + $0x1200] sm:$0xff]
    %v681 = vld [vmem:[#allocation2 + $0x1208] sm:$0xff]
    %v682 = vld [vmem:[#allocation2 + $0x1210] sm:$0xff]
    %v683 = vld [vmem:[#allocation2 + $0x1218] sm:$0xff]
    %v684 = vld [vmem:[#allocation2 + $0x1220] sm:$0xff]
    %v685 = vld [vmem:[#allocation2 + $0x1228] sm:$0xff]
    %v686 = vld [vmem:[#allocation2 + $0x1230] sm:$0xff]
    %v687 = vld [vmem:[#allocation2 + $0x1238] sm:$0xff]
    %v688 = vld [vmem:[#allocation2 + $0x1240] sm:$0xff]
    %v689 = vld [vmem:[#allocation2 + $0x1248] sm:$0xff]
    %v690 = vld [vmem:[#allocation2 + $0x1250] sm:$0xff]
    %v691 = vld [vmem:[#allocation2 + $0x1258] sm:$0xff]
    %v692 = vld [vmem:[#allocation2 + $0x1260] sm:$0xff]
    %v693 = vld [vmem:[#allocation2 + $0x1268] sm:$0xff]
    %v694 = vld [vmem:[#allocation2 + $0x1270] sm:$0xff]
    %v695 = vld [vmem:[#allocation2 + $0x1278] sm:$0xff]
    %v696 = vld [vmem:[#allocation2 + $0x1280] sm:$0xff]
    %v697 = vld [vmem:[#allocation2 + $0x1288] sm:$0xff]
    %v698 = vld [vmem:[#allocation2 + $0x1290] sm:$0xff]
    %v699 = vld [vmem:[#allocation2 + $0x1298] sm:$0xff]
    %v700 = vld [vmem:[#allocation2 + $0x12a0] sm:$0xff]
    %v701 = vld [vmem:[#allocation2 + $0x12a8] sm:$0xff]
    %v702 = vld [vmem:[#allocation2 + $0x12b0] sm:$0xff]
    %v703 = vld [vmem:[#allocation2 + $0x12b8] sm:$0xff]
    %v704 = vld [vmem:[#allocation2 + $0x12c0] sm:$0xff]
    %v705 = vld [vmem:[#allocation2 + $0x12c8] sm:$0xff]
    %v706 = vld [vmem:[#allocation2 + $0x12d0] sm:$0xff]
    %v707 = vld [vmem:[#allocation2 + $0x12d8] sm:$0xff]
    %v708 = vld [vmem:[#allocation2 + $0x12e0] sm:$0xff]
    %v709 = vld [vmem:[#allocation2 + $0x12e8] sm:$0xff]
    %v710 = vld [vmem:[#allocation2 + $0x12f0] sm:$0xff]
    %v711 = vld [vmem:[#allocation2 + $0x12f8] sm:$0xff]
    %v712 = vld [vmem:[#allocation2 + $0x1300] sm:$0xff]
    %v713 = vld [vmem:[#allocation2 + $0x1308] sm:$0xff]
    %v714 = vld [vmem:[#allocation2 + $0x1310] sm:$0xff]
    %v715 = vld [vmem:[#allocation2 + $0x1318] sm:$0xff]
    %v716 = vld [vmem:[#allocation2 + $0x1320] sm:$0xff]
    %v717 = vld [vmem:[#allocation2 + $0x1328] sm:$0xff]
    %v718 = vld [vmem:[#allocation2 + $0x1330] sm:$0xff]
    %v719 = vld [vmem:[#allocation2 + $0x1338] sm:$0xff]
    %v720 = vld [vmem:[#allocation2 + $0x1340] sm:$0xff]
    %v721 = vld [vmem:[#allocation2 + $0x1348] sm:$0xff]
    %v722 = vld [vmem:[#allocation2 + $0x1350] sm:$0xff]
    %v723 = vld [vmem:[#allocation2 + $0x1358] sm:$0xff]
    %v724 = vld [vmem:[#allocation2 + $0x1360] sm:$0xff]
    %v725 = vld [vmem:[#allocation2 + $0x1368] sm:$0xff]
    %v726 = vld [vmem:[#allocation2 + $0x1370] sm:$0xff]
    %v727 = vld [vmem:[#allocation2 + $0x1378] sm:$0xff]
    %v728 = vld [vmem:[#allocation2 + $0x1380] sm:$0xff]
    %v729 = vld [vmem:[#allocation2 + $0x1388] sm:$0xff]
    %v730 = vld [vmem:[#allocation2 + $0x1390] sm:$0xff]
    %v731 = vld [vmem:[#allocation2 + $0x1398] sm:$0xff]
    %v732 = vld [vmem:[#allocation2 + $0x13a0] sm:$0xff]
    %v733 = vld [vmem:[#allocation2 + $0x13a8] sm:$0xff]
    %v734 = vld [vmem:[#allocation2 + $0x13b0] sm:$0xff]
    %v735 = vld [vmem:[#allocation2 + $0x13b8] sm:$0xff]
    %v736 = vld [vmem:[#allocation2 + $0x13c0] sm:$0xff]
    %v737 = vld [vmem:[#allocation2 + $0x13c8] sm:$0xff]
    %v738 = vld [vmem:[#allocation2 + $0x13d0] sm:$0xff]
    %v739 = vld [vmem:[#allocation2 + $0x13d8] sm:$0xff]
    %v740 = vld [vmem:[#allocation2 + $0x13e0] sm:$0xff]
    %v741 = vld [vmem:[#allocation2 + $0x13e8] sm:$0xff]
    %v742 = vld [vmem:[#allocation2 + $0x13f0] sm:$0xff]
    %v743 = vld [vmem:[#allocation2 + $0x13f8] sm:$0xff]
    %v744 = vld [vmem:[#allocation2 + $0x1400] sm:$0xff]
    %v745 = vld [vmem:[#allocation2 + $0x1408] sm:$0xff]
    %v746 = vld [vmem:[#allocation2 + $0x1410] sm:$0xff]
    %v747 = vld [vmem:[#allocation2 + $0x1418] sm:$0xff]
    %v748 = vld [vmem:[#allocation2 + $0x1420] sm:$0xff]
    %v749 = vld [vmem:[#allocation2 + $0x1428] sm:$0xff]
    %v750 = vld [vmem:[#allocation2 + $0x1430] sm:$0xff]
    %v751 = vld [vmem:[#allocation2 + $0x1438] sm:$0xff]
    %v752 = vld [vmem:[#allocation2 + $0x1440] sm:$0xff]
    %v753 = vld [vmem:[#allocation2 + $0x1448] sm:$0xff]
    %v754 = vld [vmem:[#allocation2 + $0x1450] sm:$0xff]
    %v755 = vld [vmem:[#allocation2 + $0x1458] sm:$0xff]
    %v756 = vld [vmem:[#allocation2 + $0x1460] sm:$0xff]
    %v757 = vld [vmem:[#allocation2 + $0x1468] sm:$0xff]
    %v758 = vld [vmem:[#allocation2 + $0x1470] sm:$0xff]
    %v759 = vld [vmem:[#allocation2 + $0x1478] sm:$0xff]
    %v760 = vld [vmem:[#allocation2 + $0x1480] sm:$0xff]
    %v761 = vld [vmem:[#allocation2 + $0x1488] sm:$0xff]
    %v762 = vld [vmem:[#allocation2 + $0x1490] sm:$0xff]
    %v763 = vld [vmem:[#allocation2 + $0x1498] sm:$0xff]
    %v764 = vld [vmem:[#allocation2 + $0x14a0] sm:$0xff]
    %v765 = vld [vmem:[#allocation2 + $0x14a8] sm:$0xff]
    %v766 = vld [vmem:[#allocation2 + $0x14b0] sm:$0xff]
    %v767 = vld [vmem:[#allocation2 + $0x14b8] sm:$0xff]
    %v768 = vld [vmem:[#allocation2 + $0x14c0] sm:$0xff]
    %v769 = vld [vmem:[#allocation2 + $0x14c8] sm:$0xff]
    %v770 = vld [vmem:[#allocation2 + $0x14d0] sm:$0xff]
    %v771 = vld [vmem:[#allocation2 + $0x14d8] sm:$0xff]
    %v772 = vld [vmem:[#allocation2 + $0x14e0] sm:$0xff]
    %v773 = vld [vmem:[#allocation2 + $0x14e8] sm:$0xff]
    %v774 = vld [vmem:[#allocation2 + $0x14f0] sm:$0xff]
    %v775 = vld [vmem:[#allocation2 + $0x14f8] sm:$0xff]
    %v776 = vld [vmem:[#allocation2 + $0x1500] sm:$0xff]
    %v777 = vld [vmem:[#allocation2 + $0x1508] sm:$0xff]
    %v778 = vld [vmem:[#allocation2 + $0x1510] sm:$0xff]
    %v779 = vld [vmem:[#allocation2 + $0x1518] sm:$0xff]
    %v780 = vld [vmem:[#allocation2 + $0x1520] sm:$0xff]
    %v781 = vld [vmem:[#allocation2 + $0x1528] sm:$0xff]
    %v782 = vld [vmem:[#allocation2 + $0x1530] sm:$0xff]
    %v783 = vld [vmem:[#allocation2 + $0x1538] sm:$0xff]
    %v784 = vld [vmem:[#allocation2 + $0x1540] sm:$0xff]
    %v785 = vld [vmem:[#allocation2 + $0x1548] sm:$0xff]
    %v786 = vld [vmem:[#allocation2 + $0x1550] sm:$0xff]
    %v787 = vld [vmem:[#allocation2 + $0x1558] sm:$0xff]
    %v788 = vld [vmem:[#allocation2 + $0x1560] sm:$0xff]
    %v789 = vld [vmem:[#allocation2 + $0x1568] sm:$0xff]
    %v790 = vld [vmem:[#allocation2 + $0x1570] sm:$0xff]
    %v791 = vld [vmem:[#allocation2 + $0x1578] sm:$0xff]
    %v792 = vld [vmem:[#allocation2 + $0x1580] sm:$0xff]
    %v793 = vld [vmem:[#allocation2 + $0x1588] sm:$0xff]
    %v794 = vld [vmem:[#allocation2 + $0x1590] sm:$0xff]
    %v795 = vld [vmem:[#allocation2 + $0x1598] sm:$0xff]
    %v796 = vld [vmem:[#allocation2 + $0x15a0] sm:$0xff]
    %v797 = vld [vmem:[#allocation2 + $0x15a8] sm:$0xff]
    %v798 = vld [vmem:[#allocation2 + $0x15b0] sm:$0xff]
    %v799 = vld [vmem:[#allocation2 + $0x15b8] sm:$0xff]
    %v800 = vld [vmem:[#allocation2 + $0x15c0] sm:$0xff]
    %v801 = vld [vmem:[#allocation2 + $0x15c8] sm:$0xff]
    %v802 = vld [vmem:[#allocation2 + $0x15d0] sm:$0xff]
    %v803 = vld [vmem:[#allocation2 + $0x15d8] sm:$0xff]
    %v804 = vld [vmem:[#allocation2 + $0x15e0] sm:$0xff]
    %v805 = vld [vmem:[#allocation2 + $0x15e8] sm:$0xff]
    %v806 = vld [vmem:[#allocation2 + $0x15f0] sm:$0xff]
    %v807 = vld [vmem:[#allocation2 + $0x15f8] sm:$0xff]
    %v808 = vld [vmem:[#allocation2 + $0x1600] sm:$0xff]
    %v809 = vld [vmem:[#allocation2 + $0x1608] sm:$0xff]
    %v810 = vld [vmem:[#allocation2 + $0x1610] sm:$0xff]
    %v811 = vld [vmem:[#allocation2 + $0x1618] sm:$0xff]
    %v812 = vld [vmem:[#allocation2 + $0x1620] sm:$0xff]
    %v813 = vld [vmem:[#allocation2 + $0x1628] sm:$0xff]
    %v814 = vld [vmem:[#allocation2 + $0x1630] sm:$0xff]
    %v815 = vld [vmem:[#allocation2 + $0x1638] sm:$0xff]
    %v816 = vld [vmem:[#allocation2 + $0x1640] sm:$0xff]
    %v817 = vld [vmem:[#allocation2 + $0x1648] sm:$0xff]
    %v818 = vld [vmem:[#allocation2 + $0x1650] sm:$0xff]
    %v819 = vld [vmem:[#allocation2 + $0x1658] sm:$0xff]
    %v820 = vld [vmem:[#allocation2 + $0x1660] sm:$0xff]
    %v821 = vld [vmem:[#allocation2 + $0x1668] sm:$0xff]
    %v822 = vld [vmem:[#allocation2 + $0x1670] sm:$0xff]
    %v823 = vld [vmem:[#allocation2 + $0x1678] sm:$0xff]
    %v824 = vld [vmem:[#allocation2 + $0x1680] sm:$0xff]
    %v825 = vld [vmem:[#allocation2 + $0x1688] sm:$0xff]
    %v826 = vld [vmem:[#allocation2 + $0x1690] sm:$0xff]
    %v827 = vld [vmem:[#allocation2 + $0x1698] sm:$0xff]
    %v828 = vld [vmem:[#allocation2 + $0x16a0] sm:$0xff]
    %v829 = vld [vmem:[#allocation2 + $0x16a8] sm:$0xff]
    %v830 = vld [vmem:[#allocation2 + $0x16b0] sm:$0xff]
    %v831 = vld [vmem:[#allocation2 + $0x16b8] sm:$0xff]
    %v832 = vld [vmem:[#allocation2 + $0x16c0] sm:$0xff]
    %v833 = vld [vmem:[#allocation2 + $0x16c8] sm:$0xff]
    %v834 = vld [vmem:[#allocation2 + $0x16d0] sm:$0xff]
    %v835 = vld [vmem:[#allocation2 + $0x16d8] sm:$0xff]
    %v836 = vld [vmem:[#allocation2 + $0x16e0] sm:$0xff]
    %v837 = vld [vmem:[#allocation2 + $0x16e8] sm:$0xff]
    %v838 = vld [vmem:[#allocation2 + $0x16f0] sm:$0xff]
    %v839 = vld [vmem:[#allocation2 + $0x16f8] sm:$0xff]
    %v840 = vld [vmem:[#allocation2 + $0x1700] sm:$0xff]
    %v841 = vld [vmem:[#allocation2 + $0x1708] sm:$0xff]
    %v842 = vld [vmem:[#allocation2 + $0x1710] sm:$0xff]
    %v843 = vld [vmem:[#allocation2 + $0x1718] sm:$0xff]
    %v844 = vld [vmem:[#allocation2 + $0x1720] sm:$0xff]
    %v845 = vld [vmem:[#allocation2 + $0x1728] sm:$0xff]
    %v846 = vld [vmem:[#allocation2 + $0x1730] sm:$0xff]
    %v847 = vld [vmem:[#allocation2 + $0x1738] sm:$0xff]
    %v848 = vld [vmem:[#allocation2 + $0x1740] sm:$0xff]
    %v849 = vld [vmem:[#allocation2 + $0x1748] sm:$0xff]
    %v850 = vld [vmem:[#allocation2 + $0x1750] sm:$0xff]
    %v851 = vld [vmem:[#allocation2 + $0x1758] sm:$0xff]
    %v852 = vld [vmem:[#allocation2 + $0x1760] sm:$0xff]
    %v853 = vld [vmem:[#allocation2 + $0x1768] sm:$0xff]
    %v854 = vld [vmem:[#allocation2 + $0x1770] sm:$0xff]
    %v855 = vld [vmem:[#allocation2 + $0x1778] sm:$0xff]
    %v856 = vld [vmem:[#allocation2 + $0x1780] sm:$0xff]
    %v857 = vld [vmem:[#allocation2 + $0x1788] sm:$0xff]
    %v858 = vld [vmem:[#allocation2 + $0x1790] sm:$0xff]
    %v859 = vld [vmem:[#allocation2 + $0x1798] sm:$0xff]
    %v860 = vld [vmem:[#allocation2 + $0x17a0] sm:$0xff]
    %v861 = vld [vmem:[#allocation2 + $0x17a8] sm:$0xff]
    %v862 = vld [vmem:[#allocation2 + $0x17b0] sm:$0xff]
    %v863 = vld [vmem:[#allocation2 + $0x17b8] sm:$0xff]
    %v864 = vld [vmem:[#allocation2 + $0x17c0] sm:$0xff]
    %v865 = vld [vmem:[#allocation2 + $0x17c8] sm:$0xff]
    %v866 = vld [vmem:[#allocation2 + $0x17d0] sm:$0xff]
    %v867 = vld [vmem:[#allocation2 + $0x17d8] sm:$0xff]
    %v868 = vld [vmem:[#allocation2 + $0x17e0] sm:$0xff]
    %v869 = vld [vmem:[#allocation2 + $0x17e8] sm:$0xff]
    %v870 = vld [vmem:[#allocation2 + $0x17f0] sm:$0xff]
    %v871 = vld [vmem:[#allocation2 + $0x17f8] sm:$0xff]
    %v872 = vld [vmem:[#allocation2 + $0x1800] sm:$0xff]
    %v873 = vld [vmem:[#allocation2 + $0x1808] sm:$0xff]
    %v874 = vld [vmem:[#allocation2 + $0x1810] sm:$0xff]
    %v875 = vld [vmem:[#allocation2 + $0x1818] sm:$0xff]
    %v876 = vld [vmem:[#allocation2 + $0x1820] sm:$0xff]
    %v877 = vld [vmem:[#allocation2 + $0x1828] sm:$0xff]
    %v878 = vld [vmem:[#allocation2 + $0x1830] sm:$0xff]
    %v879 = vld [vmem:[#allocation2 + $0x1838] sm:$0xff]
    %v880 = vld [vmem:[#allocation2 + $0x1840] sm:$0xff]
    %v881 = vld [vmem:[#allocation2 + $0x1848] sm:$0xff]
    %v882 = vld [vmem:[#allocation2 + $0x1850] sm:$0xff]
    %v883 = vld [vmem:[#allocation2 + $0x1858] sm:$0xff]
    %v884 = vld [vmem:[#allocation2 + $0x1860] sm:$0xff]
    %v885 = vld [vmem:[#allocation2 + $0x1868] sm:$0xff]
    %v886 = vld [vmem:[#allocation2 + $0x1870] sm:$0xff]
    %v887 = vld [vmem:[#allocation2 + $0x1878] sm:$0xff]
    %v888 = vld [vmem:[#allocation2 + $0x1880] sm:$0xff]
    %v889 = vld [vmem:[#allocation2 + $0x1888] sm:$0xff]
    %v890 = vld [vmem:[#allocation2 + $0x1890] sm:$0xff]
    %v891 = vld [vmem:[#allocation2 + $0x1898] sm:$0xff]
    %v892 = vld [vmem:[#allocation2 + $0x18a0] sm:$0xff]
    %v893 = vld [vmem:[#allocation2 + $0x18a8] sm:$0xff]
    %v894 = vld [vmem:[#allocation2 + $0x18b0] sm:$0xff]
    %v895 = vld [vmem:[#allocation2 + $0x18b8] sm:$0xff]
    %v896 = vld [vmem:[#allocation2 + $0x18c0] sm:$0xff]
    %v897 = vld [vmem:[#allocation2 + $0x18c8] sm:$0xff]
    %v898 = vld [vmem:[#allocation2 + $0x18d0] sm:$0xff]
    %v899 = vld [vmem:[#allocation2 + $0x18d8] sm:$0xff]
    %v900 = vld [vmem:[#allocation2 + $0x18e0] sm:$0xff]
    %v901 = vld [vmem:[#allocation2 + $0x18e8] sm:$0xff]
    %v902 = vld [vmem:[#allocation2 + $0x18f0] sm:$0xff]
    %v903 = vld [vmem:[#allocation2 + $0x18f8] sm:$0xff]
    %v904 = vld [vmem:[#allocation2 + $0x1900] sm:$0xff]
    %v905 = vld [vmem:[#allocation2 + $0x1908] sm:$0xff]
    %v906 = vld [vmem:[#allocation2 + $0x1910] sm:$0xff]
    %v907 = vld [vmem:[#allocation2 + $0x1918] sm:$0xff]
    %v908 = vld [vmem:[#allocation2 + $0x1920] sm:$0xff]
    %v909 = vld [vmem:[#allocation2 + $0x1928] sm:$0xff]
    %v910 = vld [vmem:[#allocation2 + $0x1930] sm:$0xff]
    %v911 = vld [vmem:[#allocation2 + $0x1938] sm:$0xff]
    %v912 = vld [vmem:[#allocation2 + $0x1940] sm:$0xff]
    %v913 = vld [vmem:[#allocation2 + $0x1948] sm:$0xff]
    %v914 = vld [vmem:[#allocation2 + $0x1950] sm:$0xff]
    %v915 = vld [vmem:[#allocation2 + $0x1958] sm:$0xff]
    %v916 = vld [vmem:[#allocation2 + $0x1960] sm:$0xff]
    %v917 = vld [vmem:[#allocation2 + $0x1968] sm:$0xff]
    %v918 = vld [vmem:[#allocation2 + $0x1970] sm:$0xff]
    %v919 = vld [vmem:[#allocation2 + $0x1978] sm:$0xff]
    %v920 = vld [vmem:[#allocation2 + $0x1980] sm:$0xff]
    %v921 = vld [vmem:[#allocation2 + $0x1988] sm:$0xff]
    %v922 = vld [vmem:[#allocation2 + $0x1990] sm:$0xff]
    %v923 = vld [vmem:[#allocation2 + $0x1998] sm:$0xff]
    %v924 = vld [vmem:[#allocation2 + $0x19a0] sm:$0xff]
    %v925 = vld [vmem:[#allocation2 + $0x19a8] sm:$0xff]
    %v926 = vld [vmem:[#allocation2 + $0x19b0] sm:$0xff]
    %v927 = vld [vmem:[#allocation2 + $0x19b8] sm:$0xff]
    %v928 = vld [vmem:[#allocation2 + $0x19c0] sm:$0xff]
    %v929 = vld [vmem:[#allocation2 + $0x19c8] sm:$0xff]
    %v930 = vld [vmem:[#allocation2 + $0x19d0] sm:$0xff]
    %v931 = vld [vmem:[#allocation2 + $0x19d8] sm:$0xff]
    %v932 = vld [vmem:[#allocation2 + $0x19e0] sm:$0xff]
    %v933 = vld [vmem:[#allocation2 + $0x19e8] sm:$0xff]
    %v934 = vld [vmem:[#allocation2 + $0x19f0] sm:$0xff]
    %v935 = vld [vmem:[#allocation2 + $0x19f8] sm:$0xff]
    %v936 = vld [vmem:[#allocation2 + $0x1a00] sm:$0xff]
    %v937 = vld [vmem:[#allocation2 + $0x1a08] sm:$0xff]
    %v938 = vld [vmem:[#allocation2 + $0x1a10] sm:$0xff]
    %v939 = vld [vmem:[#allocation2 + $0x1a18] sm:$0xff]
    %v940 = vld [vmem:[#allocation2 + $0x1a20] sm:$0xff]
    %v941 = vld [vmem:[#allocation2 + $0x1a28] sm:$0xff]
    %v942 = vld [vmem:[#allocation2 + $0x1a30] sm:$0xff]
    %v943 = vld [vmem:[#allocation2 + $0x1a38] sm:$0xff]
    %v944 = vld [vmem:[#allocation2 + $0x1a40] sm:$0xff]
    %v945 = vld [vmem:[#allocation2 + $0x1a48] sm:$0xff]
    %v946 = vld [vmem:[#allocation2 + $0x1a50] sm:$0xff]
    %v947 = vld [vmem:[#allocation2 + $0x1a58] sm:$0xff]
    %v948 = vld [vmem:[#allocation2 + $0x1a60] sm:$0xff]
    %v949 = vld [vmem:[#allocation2 + $0x1a68] sm:$0xff]
    %v950 = vld [vmem:[#allocation2 + $0x1a70] sm:$0xff]
    %v951 = vld [vmem:[#allocation2 + $0x1a78] sm:$0xff]
    %v952 = vld [vmem:[#allocation2 + $0x1a80] sm:$0xff]
    %v953 = vld [vmem:[#allocation2 + $0x1a88] sm:$0xff]
    %v954 = vld [vmem:[#allocation2 + $0x1a90] sm:$0xff]
    %v955 = vld [vmem:[#allocation2 + $0x1a98] sm:$0xff]
    %v956 = vld [vmem:[#allocation2 + $0x1aa0] sm:$0xff]
    %v957 = vld [vmem:[#allocation2 + $0x1aa8] sm:$0xff]
    %v958 = vld [vmem:[#allocation2 + $0x1ab0] sm:$0xff]
    %v959 = vld [vmem:[#allocation2 + $0x1ab8] sm:$0xff]
    %v960 = vld [vmem:[#allocation2 + $0x1ac0] sm:$0xff]
    %v961 = vld [vmem:[#allocation2 + $0x1ac8] sm:$0xff]
    %v962 = vld [vmem:[#allocation2 + $0x1ad0] sm:$0xff]
    %v963 = vld [vmem:[#allocation2 + $0x1ad8] sm:$0xff]
    %v964 = vld [vmem:[#allocation2 + $0x1ae0] sm:$0xff]
    %v965 = vld [vmem:[#allocation2 + $0x1ae8] sm:$0xff]
    %v966 = vld [vmem:[#allocation2 + $0x1af0] sm:$0xff]
    %v967 = vld [vmem:[#allocation2 + $0x1af8] sm:$0xff]
    %v968 = vld [vmem:[#allocation2 + $0x1b00] sm:$0xff]
    %v969 = vld [vmem:[#allocation2 + $0x1b08] sm:$0xff]
    %v970 = vld [vmem:[#allocation2 + $0x1b10] sm:$0xff]
    %v971 = vld [vmem:[#allocation2 + $0x1b18] sm:$0xff]
    %v972 = vld [vmem:[#allocation2 + $0x1b20] sm:$0xff]
    %v973 = vld [vmem:[#allocation2 + $0x1b28] sm:$0xff]
    %v974 = vld [vmem:[#allocation2 + $0x1b30] sm:$0xff]
    %v975 = vld [vmem:[#allocation2 + $0x1b38] sm:$0xff]
    %v976 = vld [vmem:[#allocation2 + $0x1b40] sm:$0xff]
    %v977 = vld [vmem:[#allocation2 + $0x1b48] sm:$0xff]
    %v978 = vld [vmem:[#allocation2 + $0x1b50] sm:$0xff]
    %v979 = vld [vmem:[#allocation2 + $0x1b58] sm:$0xff]
    %v980 = vld [vmem:[#allocation2 + $0x1b60] sm:$0xff]
    %v981 = vld [vmem:[#allocation2 + $0x1b68] sm:$0xff]
    %v982 = vld [vmem:[#allocation2 + $0x1b70] sm:$0xff]
    %v983 = vld [vmem:[#allocation2 + $0x1b78] sm:$0xff]
    %v984 = vld [vmem:[#allocation2 + $0x1b80] sm:$0xff]
    %v985 = vld [vmem:[#allocation2 + $0x1b88] sm:$0xff]
    %v986 = vld [vmem:[#allocation2 + $0x1b90] sm:$0xff]
    %v987 = vld [vmem:[#allocation2 + $0x1b98] sm:$0xff]
    %v988 = vld [vmem:[#allocation2 + $0x1ba0] sm:$0xff]
    %v989 = vld [vmem:[#allocation2 + $0x1ba8] sm:$0xff]
    %v990 = vld [vmem:[#allocation2 + $0x1bb0] sm:$0xff]
    %v991 = vld [vmem:[#allocation2 + $0x1bb8] sm:$0xff]
    %v992 = vld [vmem:[#allocation2 + $0x1bc0] sm:$0xff]
    %v993 = vld [vmem:[#allocation2 + $0x1bc8] sm:$0xff]
    %v994 = vld [vmem:[#allocation2 + $0x1bd0] sm:$0xff]
    %v995 = vld [vmem:[#allocation2 + $0x1bd8] sm:$0xff]
    %v996 = vld [vmem:[#allocation2 + $0x1be0] sm:$0xff]
    %v997 = vld [vmem:[#allocation2 + $0x1be8] sm:$0xff]
    %v998 = vld [vmem:[#allocation2 + $0x1bf0] sm:$0xff]
    %v999 = vld [vmem:[#allocation2 + $0x1bf8] sm:$0xff]
    %v1000 = vld [vmem:[#allocation2 + $0x1c00] sm:$0xff]
    %v1001 = vld [vmem:[#allocation2 + $0x1c08] sm:$0xff]
    %v1002 = vld [vmem:[#allocation2 + $0x1c10] sm:$0xff]
    %v1003 = vld [vmem:[#allocation2 + $0x1c18] sm:$0xff]
    %v1004 = vld [vmem:[#allocation2 + $0x1c20] sm:$0xff]
    %v1005 = vld [vmem:[#allocation2 + $0x1c28] sm:$0xff]
    %v1006 = vld [vmem:[#allocation2 + $0x1c30] sm:$0xff]
    %v1007 = vld [vmem:[#allocation2 + $0x1c38] sm:$0xff]
    %v1008 = vld [vmem:[#allocation2 + $0x1c40] sm:$0xff]
    %v1009 = vld [vmem:[#allocation2 + $0x1c48] sm:$0xff]
    %v1010 = vld [vmem:[#allocation2 + $0x1c50] sm:$0xff]
    %v1011 = vld [vmem:[#allocation2 + $0x1c58] sm:$0xff]
    %v1012 = vld [vmem:[#allocation2 + $0x1c60] sm:$0xff]
    %v1013 = vld [vmem:[#allocation2 + $0x1c68] sm:$0xff]
    %v1014 = vld [vmem:[#allocation2 + $0x1c70] sm:$0xff]
    %v1015 = vld [vmem:[#allocation2 + $0x1c78] sm:$0xff]
    %v1016 = vld [vmem:[#allocation2 + $0x1c80] sm:$0xff]
    %v1017 = vld [vmem:[#allocation2 + $0x1c88] sm:$0xff]
    %v1018 = vld [vmem:[#allocation2 + $0x1c90] sm:$0xff]
    %v1019 = vld [vmem:[#allocation2 + $0x1c98] sm:$0xff]
    %v1020 = vld [vmem:[#allocation2 + $0x1ca0] sm:$0xff]
    %v1021 = vld [vmem:[#allocation2 + $0x1ca8] sm:$0xff]
    %v1022 = vld [vmem:[#allocation2 + $0x1cb0] sm:$0xff]
    %v1023 = vld [vmem:[#allocation2 + $0x1cb8] sm:$0xff]
    %v1024 = vld [vmem:[#allocation2 + $0x1cc0] sm:$0xff]
    %v1025 = vld [vmem:[#allocation2 + $0x1cc8] sm:$0xff]
    %v1026 = vld [vmem:[#allocation2 + $0x1cd0] sm:$0xff]
    %v1027 = vld [vmem:[#allocation2 + $0x1cd8] sm:$0xff]
    %v1028 = vld [vmem:[#allocation2 + $0x1ce0] sm:$0xff]
    %v1029 = vld [vmem:[#allocation2 + $0x1ce8] sm:$0xff]
    %v1030 = vld [vmem:[#allocation2 + $0x1cf0] sm:$0xff]
    %v1031 = vld [vmem:[#allocation2 + $0x1cf8] sm:$0xff]
    %v1032 = vld [vmem:[#allocation2 + $0x1d00] sm:$0xff]
    %v1033 = vld [vmem:[#allocation2 + $0x1d08] sm:$0xff]
    %v1034 = vld [vmem:[#allocation2 + $0x1d10] sm:$0xff]
    %v1035 = vld [vmem:[#allocation2 + $0x1d18] sm:$0xff]
    %v1036 = vld [vmem:[#allocation2 + $0x1d20] sm:$0xff]
    %v1037 = vld [vmem:[#allocation2 + $0x1d28] sm:$0xff]
    %v1038 = vld [vmem:[#allocation2 + $0x1d30] sm:$0xff]
    %v1039 = vld [vmem:[#allocation2 + $0x1d38] sm:$0xff]
    %v1040 = vld [vmem:[#allocation2 + $0x1d40] sm:$0xff]
    %v1041 = vld [vmem:[#allocation2 + $0x1d48] sm:$0xff]
    %v1042 = vld [vmem:[#allocation2 + $0x1d50] sm:$0xff]
    %v1043 = vld [vmem:[#allocation2 + $0x1d58] sm:$0xff]
    %v1044 = vld [vmem:[#allocation2 + $0x1d60] sm:$0xff]
    %v1045 = vld [vmem:[#allocation2 + $0x1d68] sm:$0xff]
    %v1046 = vld [vmem:[#allocation2 + $0x1d70] sm:$0xff]
    %v1047 = vld [vmem:[#allocation2 + $0x1d78] sm:$0xff]
    %v1048 = vld [vmem:[#allocation2 + $0x1d80] sm:$0xff]
    %v1049 = vld [vmem:[#allocation2 + $0x1d88] sm:$0xff]
    %v1050 = vld [vmem:[#allocation2 + $0x1d90] sm:$0xff]
    %v1051 = vld [vmem:[#allocation2 + $0x1d98] sm:$0xff]
    %v1052 = vld [vmem:[#allocation2 + $0x1da0] sm:$0xff]
    %v1053 = vld [vmem:[#allocation2 + $0x1da8] sm:$0xff]
    %v1054 = vld [vmem:[#allocation2 + $0x1db0] sm:$0xff]
    %v1055 = vld [vmem:[#allocation2 + $0x1db8] sm:$0xff]
    %v1056 = vld [vmem:[#allocation2 + $0x1dc0] sm:$0xff]
    %v1057 = vld [vmem:[#allocation2 + $0x1dc8] sm:$0xff]
    %v1058 = vld [vmem:[#allocation2 + $0x1dd0] sm:$0xff]
    %v1059 = vld [vmem:[#allocation2 + $0x1dd8] sm:$0xff]
    %v1060 = vld [vmem:[#allocation2 + $0x1de0] sm:$0xff]
    %v1061 = vld [vmem:[#allocation2 + $0x1de8] sm:$0xff]
    %v1062 = vld [vmem:[#allocation2 + $0x1df0] sm:$0xff]
    %v1063 = vld [vmem:[#allocation2 + $0x1df8] sm:$0xff]
    %v1064 = vld [vmem:[#allocation2 + $0x1e00] sm:$0xff]
    %v1065 = vld [vmem:[#allocation2 + $0x1e08] sm:$0xff]
    %v1066 = vld [vmem:[#allocation2 + $0x1e10] sm:$0xff]
    %v1067 = vld [vmem:[#allocation2 + $0x1e18] sm:$0xff]
    %v1068 = vld [vmem:[#allocation2 + $0x1e20] sm:$0xff]
    %v1069 = vld [vmem:[#allocation2 + $0x1e28] sm:$0xff]
    %v1070 = vld [vmem:[#allocation2 + $0x1e30] sm:$0xff]
    %v1071 = vld [vmem:[#allocation2 + $0x1e38] sm:$0xff]
    %v1072 = vld [vmem:[#allocation2 + $0x1e40] sm:$0xff]
    %v1073 = vld [vmem:[#allocation2 + $0x1e48] sm:$0xff]
    %v1074 = vld [vmem:[#allocation2 + $0x1e50] sm:$0xff]
    %v1075 = vld [vmem:[#allocation2 + $0x1e58] sm:$0xff]
    %v1076 = vld [vmem:[#allocation2 + $0x1e60] sm:$0xff]
    %v1077 = vld [vmem:[#allocation2 + $0x1e68] sm:$0xff]
    %v1078 = vld [vmem:[#allocation2 + $0x1e70] sm:$0xff]
    %v1079 = vld [vmem:[#allocation2 + $0x1e78] sm:$0xff]
    %v1080 = vld [vmem:[#allocation2 + $0x1e80] sm:$0xff]
    %v1081 = vld [vmem:[#allocation2 + $0x1e88] sm:$0xff]
    %v1082 = vld [vmem:[#allocation2 + $0x1e90] sm:$0xff]
    %v1083 = vld [vmem:[#allocation2 + $0x1e98] sm:$0xff]
    %v1084 = vld [vmem:[#allocation2 + $0x1ea0] sm:$0xff]
    %v1085 = vld [vmem:[#allocation2 + $0x1ea8] sm:$0xff]
    %v1086 = vld [vmem:[#allocation2 + $0x1eb0] sm:$0xff]
    %v1087 = vld [vmem:[#allocation2 + $0x1eb8] sm:$0xff]
    %v1088 = vld [vmem:[#allocation2 + $0x1ec0] sm:$0xff]
    %v1089 = vld [vmem:[#allocation2 + $0x1ec8] sm:$0xff]
    %v1090 = vld [vmem:[#allocation2 + $0x1ed0] sm:$0xff]
    %v1091 = vld [vmem:[#allocation2 + $0x1ed8] sm:$0xff]
    %v1092 = vld [vmem:[#allocation2 + $0x1ee0] sm:$0xff]
    %v1093 = vld [vmem:[#allocation2 + $0x1ee8] sm:$0xff]
    %v1094 = vld [vmem:[#allocation2 + $0x1ef0] sm:$0xff]
    %v1095 = vld [vmem:[#allocation2 + $0x1ef8] sm:$0xff]
    %v1096 = vld [vmem:[#allocation2 + $0x1f00] sm:$0xff]
    %v1097 = vld [vmem:[#allocation2 + $0x1f08] sm:$0xff]
    %v1098 = vld [vmem:[#allocation2 + $0x1f10] sm:$0xff]
    %v1099 = vld [vmem:[#allocation2 + $0x1f18] sm:$0xff]
    %v1100 = vld [vmem:[#allocation2 + $0x1f20] sm:$0xff]
    %v1101 = vld [vmem:[#allocation2 + $0x1f28] sm:$0xff]
    %v1102 = vld [vmem:[#allocation2 + $0x1f30] sm:$0xff]
    %v1103 = vld [vmem:[#allocation2 + $0x1f38] sm:$0xff]
    %v1104 = vld [vmem:[#allocation2 + $0x1f40] sm:$0xff]
    %v1105 = vld [vmem:[#allocation2 + $0x1f48] sm:$0xff]
    %v1106 = vld [vmem:[#allocation2 + $0x1f50] sm:$0xff]
    %v1107 = vld [vmem:[#allocation2 + $0x1f58] sm:$0xff]
    %v1108 = vld [vmem:[#allocation2 + $0x1f60] sm:$0xff]
    %v1109 = vld [vmem:[#allocation2 + $0x1f68] sm:$0xff]
    %v1110 = vld [vmem:[#allocation2 + $0x1f70] sm:$0xff]
    %v1111 = vld [vmem:[#allocation2 + $0x1f78] sm:$0xff]
    %v1112 = vld [vmem:[#allocation2 + $0x1f80] sm:$0xff]
    %v1113 = vld [vmem:[#allocation2 + $0x1f88] sm:$0xff]
    %v1114 = vld [vmem:[#allocation2 + $0x1f90] sm:$0xff]
    %v1115 = vld [vmem:[#allocation2 + $0x1f98] sm:$0xff]
    %v1116 = vld [vmem:[#allocation2 + $0x1fa0] sm:$0xff]
    %v1117 = vld [vmem:[#allocation2 + $0x1fa8] sm:$0xff]
    %v1118 = vld [vmem:[#allocation2 + $0x1fb0] sm:$0xff]
    %v1119 = vld [vmem:[#allocation2 + $0x1fb8] sm:$0xff]
    %v1120 = vld [vmem:[#allocation2 + $0x1fc0] sm:$0xff]
    %v1121 = vld [vmem:[#allocation2 + $0x1fc8] sm:$0xff]
    %v1122 = vld [vmem:[#allocation2 + $0x1fd0] sm:$0xff]
    %v1123 = vld [vmem:[#allocation2 + $0x1fd8] sm:$0xff]
    %v1124 = vld [vmem:[#allocation2 + $0x1fe0] sm:$0xff]
    %v1125 = vld [vmem:[#allocation2 + $0x1fe8] sm:$0xff]
    %v1126 = vld [vmem:[#allocation2 + $0x1ff0] sm:$0xff]
    %v1127 = vld [vmem:[#allocation2 + $0x1ff8] sm:$0xff]
    %v1128 = vld [vmem:[#allocation2 + $0x2000] sm:$0xff]
    %v1129 = vld [vmem:[#allocation2 + $0x2008] sm:$0xff]
    %v1130 = vld [vmem:[#allocation2 + $0x2010] sm:$0xff]
    %v1131 = vld [vmem:[#allocation2 + $0x2018] sm:$0xff]
    %v1132 = vld [vmem:[#allocation2 + $0x2020] sm:$0xff]
    %v1133 = vld [vmem:[#allocation2 + $0x2028] sm:$0xff]
    %v1134 = vld [vmem:[#allocation2 + $0x2030] sm:$0xff]
    %v1135 = vld [vmem:[#allocation2 + $0x2038] sm:$0xff]
    %v1136 = vld [vmem:[#allocation2 + $0x2040] sm:$0xff]
    %v1137 = vld [vmem:[#allocation2 + $0x2048] sm:$0xff]
    %v1138 = vld [vmem:[#allocation2 + $0x2050] sm:$0xff]
    %v1139 = vld [vmem:[#allocation2 + $0x2058] sm:$0xff]
    %v1140 = vld [vmem:[#allocation2 + $0x2060] sm:$0xff]
    %v1141 = vld [vmem:[#allocation2 + $0x2068] sm:$0xff]
    %v1142 = vld [vmem:[#allocation2 + $0x2070] sm:$0xff]
    %v1143 = vld [vmem:[#allocation2 + $0x2078] sm:$0xff]
    %v1144 = vld [vmem:[#allocation2 + $0x2080] sm:$0xff]
    %v1145 = vld [vmem:[#allocation2 + $0x2088] sm:$0xff]
    %v1146 = vld [vmem:[#allocation2 + $0x2090] sm:$0xff]
    %v1147 = vld [vmem:[#allocation2 + $0x2098] sm:$0xff]
    %v1148 = vld [vmem:[#allocation2 + $0x20a0] sm:$0xff]
    %v1149 = vld [vmem:[#allocation2 + $0x20a8] sm:$0xff]
    %v1150 = vld [vmem:[#allocation2 + $0x20b0] sm:$0xff]
    %v1151 = vld [vmem:[#allocation2 + $0x20b8] sm:$0xff]
    %v1152 = vld [vmem:[#allocation2 + $0x20c0] sm:$0xff]
    %v1153 = vld [vmem:[#allocation2 + $0x20c8] sm:$0xff]
    %v1154 = vld [vmem:[#allocation2 + $0x20d0] sm:$0xff]
    %v1155 = vld [vmem:[#allocation2 + $0x20d8] sm:$0xff]
    %v1156 = vld [vmem:[#allocation2 + $0x20e0] sm:$0xff]
    %v1157 = vld [vmem:[#allocation2 + $0x20e8] sm:$0xff]
    %v1158 = vld [vmem:[#allocation2 + $0x20f0] sm:$0xff]
    %v1159 = vld [vmem:[#allocation2 + $0x20f8] sm:$0xff]
    %v1160 = vld [vmem:[#allocation2 + $0x2100] sm:$0xff]
    %v1161 = vld [vmem:[#allocation2 + $0x2108] sm:$0xff]
    %v1162 = vld [vmem:[#allocation2 + $0x2110] sm:$0xff]
    %v1163 = vld [vmem:[#allocation2 + $0x2118] sm:$0xff]
    %v1164 = vld [vmem:[#allocation2 + $0x2120] sm:$0xff]
    %v1165 = vld [vmem:[#allocation2 + $0x2128] sm:$0xff]
    %v1166 = vld [vmem:[#allocation2 + $0x2130] sm:$0xff]
    %v1167 = vld [vmem:[#allocation2 + $0x2138] sm:$0xff]
    %v1168 = vld [vmem:[#allocation2 + $0x2140] sm:$0xff]
    %v1169 = vld [vmem:[#allocation2 + $0x2148] sm:$0xff]
    %v1170 = vld [vmem:[#allocation2 + $0x2150] sm:$0xff]
    %v1171 = vld [vmem:[#allocation2 + $0x2158] sm:$0xff]
    %v1172 = vld [vmem:[#allocation2 + $0x2160] sm:$0xff]
    %v1173 = vld [vmem:[#allocation2 + $0x2168] sm:$0xff]
    %v1174 = vld [vmem:[#allocation2 + $0x2170] sm:$0xff]
    %v1175 = vld [vmem:[#allocation2 + $0x2178] sm:$0xff]
    %v1176 = vld [vmem:[#allocation2 + $0x2180] sm:$0xff]
    %v1177 = vld [vmem:[#allocation2 + $0x2188] sm:$0xff]
    %v1178 = vld [vmem:[#allocation2 + $0x2190] sm:$0xff]
    %v1179 = vld [vmem:[#allocation2 + $0x2198] sm:$0xff]
    %v1180 = vld [vmem:[#allocation2 + $0x21a0] sm:$0xff]
    %v1181 = vld [vmem:[#allocation2 + $0x21a8] sm:$0xff]
    %v1182 = vld [vmem:[#allocation2 + $0x21b0] sm:$0xff]
    %v1183 = vld [vmem:[#allocation2 + $0x21b8] sm:$0xff]
    %v1184 = vld [vmem:[#allocation2 + $0x21c0] sm:$0xff]
    %v1185 = vld [vmem:[#allocation2 + $0x21c8] sm:$0xff]
    %v1186 = vld [vmem:[#allocation2 + $0x21d0] sm:$0xff]
    %v1187 = vld [vmem:[#allocation2 + $0x21d8] sm:$0xff]
    %v1188 = vld [vmem:[#allocation2 + $0x21e0] sm:$0xff]
    %v1189 = vld [vmem:[#allocation2 + $0x21e8] sm:$0xff]
    %v1190 = vld [vmem:[#allocation2 + $0x21f0] sm:$0xff]
    %v1191 = vld [vmem:[#allocation2 + $0x21f8] sm:$0xff]
    %v1192 = vld [vmem:[#allocation2 + $0x2200] sm:$0xff]
    %v1193 = vld [vmem:[#allocation2 + $0x2208] sm:$0xff]
    %v1194 = vld [vmem:[#allocation2 + $0x2210] sm:$0xff]
    %v1195 = vld [vmem:[#allocation2 + $0x2218] sm:$0xff]
    %v1196 = vld [vmem:[#allocation2 + $0x2220] sm:$0xff]
    %v1197 = vld [vmem:[#allocation2 + $0x2228] sm:$0xff]
    %v1198 = vld [vmem:[#allocation2 + $0x2230] sm:$0xff]
    %v1199 = vld [vmem:[#allocation2 + $0x2238] sm:$0xff]
    %v1200 = vld [vmem:[#allocation2 + $0x2240] sm:$0xff]
    %v1201 = vld [vmem:[#allocation2 + $0x2248] sm:$0xff]
    %v1202 = vld [vmem:[#allocation2 + $0x2250] sm:$0xff]
    %v1203 = vld [vmem:[#allocation2 + $0x2258] sm:$0xff]
    %v1204 = vld [vmem:[#allocation2 + $0x2260] sm:$0xff]
    %v1205 = vld [vmem:[#allocation2 + $0x2268] sm:$0xff]
    %v1206 = vld [vmem:[#allocation2 + $0x2270] sm:$0xff]
    %v1207 = vld [vmem:[#allocation2 + $0x2278] sm:$0xff]
    %v1208 = vld [vmem:[#allocation2 + $0x2280] sm:$0xff]
    %v1209 = vld [vmem:[#allocation2 + $0x2288] sm:$0xff]
    %v1210 = vld [vmem:[#allocation2 + $0x2290] sm:$0xff]
    %v1211 = vld [vmem:[#allocation2 + $0x2298] sm:$0xff]
    %v1212 = vld [vmem:[#allocation2 + $0x22a0] sm:$0xff]
    %v1213 = vld [vmem:[#allocation2 + $0x22a8] sm:$0xff]
    %v1214 = vld [vmem:[#allocation2 + $0x22b0] sm:$0xff]
    %v1215 = vld [vmem:[#allocation2 + $0x22b8] sm:$0xff]
    %v1216 = vld [vmem:[#allocation2 + $0x22c0] sm:$0xff]
    %v1217 = vld [vmem:[#allocation2 + $0x22c8] sm:$0xff]
    %v1218 = vld [vmem:[#allocation2 + $0x22d0] sm:$0xff]
    %v1219 = vld [vmem:[#allocation2 + $0x22d8] sm:$0xff]
    %v1220 = vld [vmem:[#allocation2 + $0x22e0] sm:$0xff]
    %v1221 = vld [vmem:[#allocation2 + $0x22e8] sm:$0xff]
    %v1222 = vld [vmem:[#allocation2 + $0x22f0] sm:$0xff]
    %v1223 = vld [vmem:[#allocation2 + $0x22f8] sm:$0xff]
    %v1224 = vld [vmem:[#allocation2 + $0x2300] sm:$0xff]
    %v1225 = vld [vmem:[#allocation2 + $0x2308] sm:$0xff]
    %v1226 = vld [vmem:[#allocation2 + $0x2310] sm:$0xff]
    %v1227 = vld [vmem:[#allocation2 + $0x2318] sm:$0xff]
    %v1228 = vld [vmem:[#allocation2 + $0x2320] sm:$0xff]
    %v1229 = vld [vmem:[#allocation2 + $0x2328] sm:$0xff]
    %v1230 = vld [vmem:[#allocation2 + $0x2330] sm:$0xff]
    %v1231 = vld [vmem:[#allocation2 + $0x2338] sm:$0xff]
    %v1232 = vld [vmem:[#allocation2 + $0x2340] sm:$0xff]
    %v1233 = vld [vmem:[#allocation2 + $0x2348] sm:$0xff]
    %v1234 = vld [vmem:[#allocation2 + $0x2350] sm:$0xff]
    %v1235 = vld [vmem:[#allocation2 + $0x2358] sm:$0xff]
    %v1236 = vld [vmem:[#allocation2 + $0x2360] sm:$0xff]
    %v1237 = vld [vmem:[#allocation2 + $0x2368] sm:$0xff]
    %v1238 = vld [vmem:[#allocation2 + $0x2370] sm:$0xff]
    %v1239 = vld [vmem:[#allocation2 + $0x2378] sm:$0xff]
    %v1240 = vld [vmem:[#allocation2 + $0x2380] sm:$0xff]
    %v1241 = vld [vmem:[#allocation2 + $0x2388] sm:$0xff]
    %v1242 = vld [vmem:[#allocation2 + $0x2390] sm:$0xff]
    %v1243 = vld [vmem:[#allocation2 + $0x2398] sm:$0xff]
    %v1244 = vld [vmem:[#allocation2 + $0x23a0] sm:$0xff]
    %v1245 = vld [vmem:[#allocation2 + $0x23a8] sm:$0xff]
    %v1246 = vld [vmem:[#allocation2 + $0x23b0] sm:$0xff]
    %v1247 = vld [vmem:[#allocation2 + $0x23b8] sm:$0xff]
    %v1248 = vld [vmem:[#allocation2 + $0x23c0] sm:$0xff]
    %v1249 = vld [vmem:[#allocation2 + $0x23c8] sm:$0xff]
    %v1250 = vld [vmem:[#allocation2 + $0x23d0] sm:$0xff]
    %v1251 = vld [vmem:[#allocation2 + $0x23d8] sm:$0xff]
    %v1252 = vld [vmem:[#allocation2 + $0x23e0] sm:$0xff]
    %v1253 = vld [vmem:[#allocation2 + $0x23e8] sm:$0xff]
    %v1254 = vld [vmem:[#allocation2 + $0x23f0] sm:$0xff]
    %v1255 = vld [vmem:[#allocation2 + $0x23f8] sm:$0xff]
    %v1256 = vld [vmem:[#allocation5] sm:$0x3f]
    %v1258 = vlaneseq
    %v1259 = vshrl.u32 %v1258, 7
    %v1260 = vsub.s32 0, %v1259
    %v1261 = vrot.slane %v1256, %v1260
    %v1262 = vlaneseq
    %v1263 = vshrl.u32 %v1262, 7
    %v1264 = vsub.s32 1, %v1263
    %v1265 = vrot.slane %v1256, %v1264
    %v1266 = vlaneseq
    %v1267 = vshrl.u32 %v1266, 7
    %v1268 = vsub.s32 2, %v1267
    %v1269 = vrot.slane %v1256, %v1268
    %v1270 = vlaneseq
    %v1271 = vshrl.u32 %v1270, 7
    %v1272 = vsub.s32 3, %v1271
    %v1273 = vrot.slane %v1256, %v1272
    %v1274 = vlaneseq
    %v1275 = vshrl.u32 %v1274, 7
    %v1276 = vsub.s32 4, %v1275
    %v1277 = vrot.slane %v1256, %v1276
    %v1278 = vlaneseq
    %v1279 = vshrl.u32 %v1278, 7
    %v1280 = vsub.s32 5, %v1279
    %v1281 = vrot.slane %v1256, %v1280
    %v1291 = vcombine.high %v101, %v101
    %v1293 = vunpack.c.l.s4 1983009808
    %v1294 = vunpack.c.0.s8 %v1293
    %v1295 = vlaneseq
    %v1296 = vshrl.u32 %v1295, 7
    %v1297 = vsub.s32 %v1294, %v1296
    %v1298 = vrot.slane %v101, %v1297
    %v1300 = vunpack.c.l.s4 1983009808
    %v1301 = vunpack.c.0.s8 %v1300
    %v1302 = vlaneseq
    %v1303 = vshrl.u32 %v1302, 7
    %v1304 = vsub.s32 %v1301, %v1303
    %v1305 = vrot.slane %v1291, %v1304
    %v1306 = vcombine.high %v1298, %v1298
    %v1307 = vcombine.high %v1305, %v1305
    %v1308 = vcombine.high %v102, %v102
    %v1310 = vunpack.c.l.s4 1983009808
    %v1311 = vunpack.c.0.s8 %v1310
    %v1312 = vlaneseq
    %v1313 = vshrl.u32 %v1312, 7
    %v1314 = vsub.s32 %v1311, %v1313
    %v1315 = vrot.slane %v102, %v1314
    %v1317 = vunpack.c.l.s4 1983009808
    %v1318 = vunpack.c.0.s8 %v1317
    %v1319 = vlaneseq
    %v1320 = vshrl.u32 %v1319, 7
    %v1321 = vsub.s32 %v1318, %v1320
    %v1322 = vrot.slane %v1308, %v1321
    %v1323 = vcombine.high %v1315, %v1315
    %v1324 = vcombine.high %v1322, %v1322
    %v1325 = vcombine.high %v103, %v103
    %v1327 = vunpack.c.l.s4 1983009808
    %v1328 = vunpack.c.0.s8 %v1327
    %v1329 = vlaneseq
    %v1330 = vshrl.u32 %v1329, 7
    %v1331 = vsub.s32 %v1328, %v1330
    %v1332 = vrot.slane %v103, %v1331
    %v1334 = vunpack.c.l.s4 1983009808
    %v1335 = vunpack.c.0.s8 %v1334
    %v1336 = vlaneseq
    %v1337 = vshrl.u32 %v1336, 7
    %v1338 = vsub.s32 %v1335, %v1337
    %v1339 = vrot.slane %v1325, %v1338
    %v1340 = vcombine.high %v1332, %v1332
    %v1341 = vcombine.high %v1339, %v1339
    %1354 = vmatprep.subr.mxu0 %v105
    %1355 = vmatpush1.msra.mxu0 %v104
    %1356 = vmatprep.subr.mxu0 %v111
    %1357 = vmatpush1.msra.mxu0 %v110
    %1358 = vmatprep.subr.mxu0 %v117
    %1359 = vmatpush1.msra.mxu0 %v116
    %1360 = vmatprep.subr.mxu0 %v123
    %1361 = vmatpush1.msra.mxu0 %v122
    %1362 = vmatprep.subr.mxu0 %v129
    %1363 = vmatpush1.msra.mxu0 %v128
    %1364 = vmatprep.subr.mxu0 %v135
    %1365 = vmatpush1.msra.mxu0 %v134
    %1366 = vmatprep.subr.mxu0 %v141
    %1367 = vmatpush1.msra.mxu0 %v140
    %1368 = vmatprep.subr.mxu0 %v147
    %1369 = vmatpush1.msra.mxu0 %v146
    %1370 = vmatprep.subr.mxu0 %v153
    %1371 = vmatpush1.msra.mxu0 %v152
    %1372 = vmatprep.subr.mxu0 %v159
    %1373 = vmatpush1.msra.mxu0 %v158
    %1374 = vmatprep.subr.mxu0 %v165
    %1375 = vmatpush1.msra.mxu0 %v164
    %1376 = vmatprep.subr.mxu0 %v171
    %1377 = vmatpush1.msra.mxu0 %v170
    %1378 = vmatprep.subr.mxu0 %v177
    %1379 = vmatpush1.msra.mxu0 %v176
    %1380 = vmatprep.subr.mxu0 %v183
    %1381 = vmatpush1.msra.mxu0 %v182
    %1382 = vmatprep.subr.mxu0 %v189
    %1383 = vmatpush1.msra.mxu0 %v188
    %1384 = vmatprep.subr.mxu0 %v195
    %1385 = vmatpush1.msra.mxu0 %v194
    %1386 = vmatprep.subr.mxu0 %v201
    %1387 = vmatpush1.msra.mxu0 %v200
    %1388 = vmatprep.subr.mxu0 %v207
    %1389 = vmatpush1.msra.mxu0 %v206
    %1390 = vmatprep.subr.mxu0 %v213
    %1391 = vmatpush1.msra.mxu0 %v212
    %1392 = vmatprep.subr.mxu0 %v219
    %1393 = vmatpush1.msra.mxu0 %v218
    %1394 = vmatprep.subr.mxu0 %v225
    %1395 = vmatpush1.msra.mxu0 %v224
    %1396 = vmatprep.subr.mxu0 %v231
    %1397 = vmatpush1.msra.mxu0 %v230
    %1398 = vmatprep.subr.mxu0 %v237
    %1399 = vmatpush1.msra.mxu0 %v236
    %1400 = vmatprep.subr.mxu0 %v243
    %1401 = vmatpush1.msra.mxu0 %v242
    %1402 = vmatprep.subr.mxu0 %v249
    %1403 = vmatpush1.msra.mxu0 %v248
    %1404 = vmatprep.subr.mxu0 %v255
    %1405 = vmatpush1.msra.mxu0 %v254
    %1406 = vmatprep.subr.mxu0 %v261
    %1407 = vmatpush1.msra.mxu0 %v260
    %1408 = vmatprep.subr.mxu0 %v267
    %1409 = vmatpush1.msra.mxu0 %v266
    %1410 = vmatprep.subr.mxu0 %v273
    %1411 = vmatpush1.msra.mxu0 %v272
    %1412 = vmatprep.subr.mxu0 %v279
    %1413 = vmatpush1.msra.mxu0 %v278
    %1414 = vmatprep.subr.mxu0 %v285
    %1415 = vmatpush1.msra.mxu0 %v284
    %1416 = vmatprep.subr.mxu0 %v291
    %1417 = vmatpush1.msra.mxu0 %v290
    %1418 = vmatprep.mubr.f32.mxu0 %v1306
    %1419 = vmatmul.mubr.f32.gmra.mrb[0].mxu0 %v1298
    %v1420 = vpop.f32.mrb[0].mxu0
    %v1421 = vadd.f32 %v1261, %v1420
    %v1422 = vpop.f32.mrb[0].mxu0
    %v1423 = vadd.f32 %v1265, %v1422
    %1424 = vdwg.mxu0
    %1425 = vmatprep.subr.mxu0 %v297
    %1426 = vmatpush1.msra.mxu0 %v296
    %1427 = vmatprep.subr.mxu0 %v303
    %1428 = vmatpush1.msra.mxu0 %v302
    %1429 = vmatprep.subr.mxu0 %v309
    %1430 = vmatpush1.msra.mxu0 %v308
    %1431 = vmatprep.subr.mxu0 %v315
    %1432 = vmatpush1.msra.mxu0 %v314
    %1433 = vmatprep.subr.mxu0 %v321
    %1434 = vmatpush1.msra.mxu0 %v320
    %1435 = vmatprep.subr.mxu0 %v327
    %1436 = vmatpush1.msra.mxu0 %v326
    %1437 = vmatprep.subr.mxu0 %v333
    %1438 = vmatpush1.msra.mxu0 %v332
    %1439 = vmatprep.subr.mxu0 %v339
    %1440 = vmatpush1.msra.mxu0 %v338
    %1441 = vmatprep.subr.mxu0 %v345
    %1442 = vmatpush1.msra.mxu0 %v344
    %1443 = vmatprep.subr.mxu0 %v351
    %1444 = vmatpush1.msra.mxu0 %v350
    %1445 = vmatprep.subr.mxu0 %v357
    %1446 = vmatpush1.msra.mxu0 %v356
    %1447 = vmatprep.subr.mxu0 %v363
    %1448 = vmatpush1.msra.mxu0 %v362
    %1449 = vmatprep.subr.mxu0 %v369
    %1450 = vmatpush1.msra.mxu0 %v368
    %1451 = vmatprep.subr.mxu0 %v375
    %1452 = vmatpush1.msra.mxu0 %v374
    %1453 = vmatprep.subr.mxu0 %v381
    %1454 = vmatpush1.msra.mxu0 %v380
    %1455 = vmatprep.subr.mxu0 %v387
    %1456 = vmatpush1.msra.mxu0 %v386
    %1457 = vmatprep.subr.mxu0 %v393
    %1458 = vmatpush1.msra.mxu0 %v392
    %1459 = vmatprep.subr.mxu0 %v399
    %1460 = vmatpush1.msra.mxu0 %v398
    %1461 = vmatprep.subr.mxu0 %v405
    %1462 = vmatpush1.msra.mxu0 %v404
    %1463 = vmatprep.subr.mxu0 %v411
    %1464 = vmatpush1.msra.mxu0 %v410
    %1465 = vmatprep.subr.mxu0 %v417
    %1466 = vmatpush1.msra.mxu0 %v416
    %1467 = vmatprep.subr.mxu0 %v423
    %1468 = vmatpush1.msra.mxu0 %v422
    %1469 = vmatprep.subr.mxu0 %v429
    %1470 = vmatpush1.msra.mxu0 %v428
    %1471 = vmatprep.subr.mxu0 %v435
    %1472 = vmatpush1.msra.mxu0 %v434
    %1473 = vmatprep.subr.mxu0 %v441
    %1474 = vmatpush1.msra.mxu0 %v440
    %1475 = vmatprep.subr.mxu0 %v447
    %1476 = vmatpush1.msra.mxu0 %v446
    %1477 = vmatprep.subr.mxu0 %v453
    %1478 = vmatpush1.msra.mxu0 %v452
    %1479 = vmatprep.subr.mxu0 %v459
    %1480 = vmatpush1.msra.mxu0 %v458
    %1481 = vmatprep.subr.mxu0 %v465
    %1482 = vmatpush1.msra.mxu0 %v464
    %1483 = vmatprep.subr.mxu0 %v471
    %1484 = vmatpush1.msra.mxu0 %v470
    %1485 = vmatprep.subr.mxu0 %v477
    %1486 = vmatpush1.msra.mxu0 %v476
    %1487 = vmatprep.subr.mxu0 %v483
    %1488 = vmatpush1.msra.mxu0 %v482
    %1489 = vmatprep.mubr.f32.mxu0 %v1307
    %1490 = vmatmul.mubr.f32.gmra.mrb[0].mxu0 %v1305
    %v1491 = vpop.f32.mrb[0].mxu0
    %v1492 = vadd.f32 %v1421, %v1491
    %v1493 = vpop.f32.mrb[0].mxu0
    %v1494 = vadd.f32 %v1423, %v1493
    %1495 = vdwg.mxu0
    %1496 = vmatprep.subr.mxu0 %v489
    %1497 = vmatpush1.msra.mxu0 %v488
    %1498 = vmatprep.subr.mxu0 %v495
    %1499 = vmatpush1.msra.mxu0 %v494
    %1500 = vmatprep.subr.mxu0 %v501
    %1501 = vmatpush1.msra.mxu0 %v500
    %1502 = vmatprep.subr.mxu0 %v507
    %1503 = vmatpush1.msra.mxu0 %v506
    %1504 = vmatprep.subr.mxu0 %v513
    %1505 = vmatpush1.msra.mxu0 %v512
    %1506 = vmatprep.subr.mxu0 %v519
    %1507 = vmatpush1.msra.mxu0 %v518
    %1508 = vmatprep.subr.mxu0 %v525
    %1509 = vmatpush1.msra.mxu0 %v524
    %1510 = vmatprep.subr.mxu0 %v531
    %1511 = vmatpush1.msra.mxu0 %v530
    %1512 = vmatprep.subr.mxu0 %v537
    %1513 = vmatpush1.msra.mxu0 %v536
    %1514 = vmatprep.subr.mxu0 %v543
    %1515 = vmatpush1.msra.mxu0 %v542
    %1516 = vmatprep.subr.mxu0 %v549
    %1517 = vmatpush1.msra.mxu0 %v548
    %1518 = vmatprep.subr.mxu0 %v555
    %1519 = vmatpush1.msra.mxu0 %v554
    %1520 = vmatprep.subr.mxu0 %v561
    %1521 = vmatpush1.msra.mxu0 %v560
    %1522 = vmatprep.subr.mxu0 %v567
    %1523 = vmatpush1.msra.mxu0 %v566
    %1524 = vmatprep.subr.mxu0 %v573
    %1525 = vmatpush1.msra.mxu0 %v572
    %1526 = vmatprep.subr.mxu0 %v579
    %1527 = vmatpush1.msra.mxu0 %v578
    %1528 = vmatprep.subr.mxu0 %v585
    %1529 = vmatpush1.msra.mxu0 %v584
    %1530 = vmatprep.subr.mxu0 %v591
    %1531 = vmatpush1.msra.mxu0 %v590
    %1532 = vmatprep.subr.mxu0 %v597
    %1533 = vmatpush1.msra.mxu0 %v596
    %1534 = vmatprep.subr.mxu0 %v603
    %1535 = vmatpush1.msra.mxu0 %v602
    %1536 = vmatprep.subr.mxu0 %v609
    %1537 = vmatpush1.msra.mxu0 %v608
    %1538 = vmatprep.subr.mxu0 %v615
    %1539 = vmatpush1.msra.mxu0 %v614
    %1540 = vmatprep.subr.mxu0 %v621
    %1541 = vmatpush1.msra.mxu0 %v620
    %1542 = vmatprep.subr.mxu0 %v627
    %1543 = vmatpush1.msra.mxu0 %v626
    %1544 = vmatprep.subr.mxu0 %v633
    %1545 = vmatpush1.msra.mxu0 %v632
    %1546 = vmatprep.subr.mxu0 %v639
    %1547 = vmatpush1.msra.mxu0 %v638
    %1548 = vmatprep.subr.mxu0 %v645
    %1549 = vmatpush1.msra.mxu0 %v644
    %1550 = vmatprep.subr.mxu0 %v651
    %1551 = vmatpush1.msra.mxu0 %v650
    %1552 = vmatprep.subr.mxu0 %v657
    %1553 = vmatpush1.msra.mxu0 %v656
    %1554 = vmatprep.subr.mxu0 %v663
    %1555 = vmatpush1.msra.mxu0 %v662
    %1556 = vmatprep.subr.mxu0 %v669
    %1557 = vmatpush1.msra.mxu0 %v668
    %1558 = vmatprep.subr.mxu0 %v675
    %1559 = vmatpush1.msra.mxu0 %v674
    %1560 = vmatprep.mubr.f32.mxu0 %v1323
    %1561 = vmatmul.mubr.f32.gmra.mrb[0].mxu0 %v1315
    %v1562 = vpop.f32.mrb[0].mxu0
    %v1563 = vadd.f32 %v1492, %v1562
    %v1564 = vpop.f32.mrb[0].mxu0
    %v1565 = vadd.f32 %v1494, %v1564
    %1566 = vdwg.mxu0
    %1567 = vmatprep.subr.mxu0 %v681
    %1568 = vmatpush1.msra.mxu0 %v680
    %1569 = vmatprep.subr.mxu0 %v687
    %1570 = vmatpush1.msra.mxu0 %v686
    %1571 = vmatprep.subr.mxu0 %v693
    %1572 = vmatpush1.msra.mxu0 %v692
    %1573 = vmatprep.subr.mxu0 %v699
    %1574 = vmatpush1.msra.mxu0 %v698
    %1575 = vmatprep.subr.mxu0 %v705
    %1576 = vmatpush1.msra.mxu0 %v704
    %1577 = vmatprep.subr.mxu0 %v711
    %1578 = vmatpush1.msra.mxu0 %v710
    %1579 = vmatprep.subr.mxu0 %v717
    %1580 = vmatpush1.msra.mxu0 %v716
    %1581 = vmatprep.subr.mxu0 %v723
    %1582 = vmatpush1.msra.mxu0 %v722
    %1583 = vmatprep.subr.mxu0 %v729
    %1584 = vmatpush1.msra.mxu0 %v728
    %1585 = vmatprep.subr.mxu0 %v735
    %1586 = vmatpush1.msra.mxu0 %v734
    %1587 = vmatprep.subr.mxu0 %v741
    %1588 = vmatpush1.msra.mxu0 %v740
    %1589 = vmatprep.subr.mxu0 %v747
    %1590 = vmatpush1.msra.mxu0 %v746
    %1591 = vmatprep.subr.mxu0 %v753
    %1592 = vmatpush1.msra.mxu0 %v752
    %1593 = vmatprep.subr.mxu0 %v759
    %1594 = vmatpush1.msra.mxu0 %v758
    %1595 = vmatprep.subr.mxu0 %v765
    %1596 = vmatpush1.msra.mxu0 %v764
    %1597 = vmatprep.subr.mxu0 %v771
    %1598 = vmatpush1.msra.mxu0 %v770
    %1599 = vmatprep.subr.mxu0 %v777
    %1600 = vmatpush1.msra.mxu0 %v776
    %1601 = vmatprep.subr.mxu0 %v783
    %1602 = vmatpush1.msra.mxu0 %v782
    %1603 = vmatprep.subr.mxu0 %v789
    %1604 = vmatpush1.msra.mxu0 %v788
    %1605 = vmatprep.subr.mxu0 %v795
    %1606 = vmatpush1.msra.mxu0 %v794
    %1607 = vmatprep.subr.mxu0 %v801
    %1608 = vmatpush1.msra.mxu0 %v800
    %1609 = vmatprep.subr.mxu0 %v807
    %1610 = vmatpush1.msra.mxu0 %v806
    %1611 = vmatprep.subr.mxu0 %v813
    %1612 = vmatpush1.msra.mxu0 %v812
    %1613 = vmatprep.subr.mxu0 %v819
    %1614 = vmatpush1.msra.mxu0 %v818
    %1615 = vmatprep.subr.mxu0 %v825
    %1616 = vmatpush1.msra.mxu0 %v824
    %1617 = vmatprep.subr.mxu0 %v831
    %1618 = vmatpush1.msra.mxu0 %v830
    %1619 = vmatprep.subr.mxu0 %v837
    %1620 = vmatpush1.msra.mxu0 %v836
    %1621 = vmatprep.subr.mxu0 %v843
    %1622 = vmatpush1.msra.mxu0 %v842
    %1623 = vmatprep.subr.mxu0 %v849
    %1624 = vmatpush1.msra.mxu0 %v848
    %1625 = vmatprep.subr.mxu0 %v855
    %1626 = vmatpush1.msra.mxu0 %v854
    %1627 = vmatprep.subr.mxu0 %v861
    %1628 = vmatpush1.msra.mxu0 %v860
    %1629 = vmatprep.subr.mxu0 %v867
    %1630 = vmatpush1.msra.mxu0 %v866
    %1631 = vmatprep.mubr.f32.mxu0 %v1324
    %1632 = vmatmul.mubr.f32.gmra.mrb[0].mxu0 %v1322
    %v1633 = vpop.f32.mrb[0].mxu0
    %v1634 = vadd.f32 %v1563, %v1633
    %v1635 = vpop.f32.mrb[0].mxu0
    %v1636 = vadd.f32 %v1565, %v1635
    %1637 = vdwg.mxu0
    %1638 = vmatprep.subr.mxu0 %v873
    %1639 = vmatpush1.msra.mxu0 %v872
    %1640 = vmatprep.subr.mxu0 %v879
    %1641 = vmatpush1.msra.mxu0 %v878
    %1642 = vmatprep.subr.mxu0 %v885
    %1643 = vmatpush1.msra.mxu0 %v884
    %1644 = vmatprep.subr.mxu0 %v891
    %1645 = vmatpush1.msra.mxu0 %v890
    %1646 = vmatprep.subr.mxu0 %v897
    %1647 = vmatpush1.msra.mxu0 %v896
    %1648 = vmatprep.subr.mxu0 %v903
    %1649 = vmatpush1.msra.mxu0 %v902
    %1650 = vmatprep.subr.mxu0 %v909
    %1651 = vmatpush1.msra.mxu0 %v908
    %1652 = vmatprep.subr.mxu0 %v915
    %1653 = vmatpush1.msra.mxu0 %v914
    %1654 = vmatprep.subr.mxu0 %v921
    %1655 = vmatpush1.msra.mxu0 %v920
    %1656 = vmatprep.subr.mxu0 %v927
    %1657 = vmatpush1.msra.mxu0 %v926
    %1658 = vmatprep.subr.mxu0 %v933
    %1659 = vmatpush1.msra.mxu0 %v932
    %1660 = vmatprep.subr.mxu0 %v939
    %1661 = vmatpush1.msra.mxu0 %v938
    %1662 = vmatprep.subr.mxu0 %v945
    %1663 = vmatpush1.msra.mxu0 %v944
    %1664 = vmatprep.subr.mxu0 %v951
    %1665 = vmatpush1.msra.mxu0 %v950
    %1666 = vmatprep.subr.mxu0 %v957
    %1667 = vmatpush1.msra.mxu0 %v956
    %1668 = vmatprep.subr.mxu0 %v963
    %1669 = vmatpush1.msra.mxu0 %v962
    %1670 = vmatprep.subr.mxu0 %v969
    %1671 = vmatpush1.msra.mxu0 %v968
    %1672 = vmatprep.subr.mxu0 %v975
    %1673 = vmatpush1.msra.mxu0 %v974
    %1674 = vmatprep.subr.mxu0 %v981
    %1675 = vmatpush1.msra.mxu0 %v980
    %1676 = vmatprep.subr.mxu0 %v987
    %1677 = vmatpush1.msra.mxu0 %v986
    %1678 = vmatprep.subr.mxu0 %v993
    %1679 = vmatpush1.msra.mxu0 %v992
    %1680 = vmatprep.subr.mxu0 %v999
    %1681 = vmatpush1.msra.mxu0 %v998
    %1682 = vmatprep.subr.mxu0 %v1005
    %1683 = vmatpush1.msra.mxu0 %v1004
    %1684 = vmatprep.subr.mxu0 %v1011
    %1685 = vmatpush1.msra.mxu0 %v1010
    %1686 = vmatprep.subr.mxu0 %v1017
    %1687 = vmatpush1.msra.mxu0 %v1016
    %1688 = vmatprep.subr.mxu0 %v1023
    %1689 = vmatpush1.msra.mxu0 %v1022
    %1690 = vmatprep.subr.mxu0 %v1029
    %1691 = vmatpush1.msra.mxu0 %v1028
    %1692 = vmatprep.subr.mxu0 %v1035
    %1693 = vmatpush1.msra.mxu0 %v1034
    %1694 = vmatprep.subr.mxu0 %v1041
    %1695 = vmatpush1.msra.mxu0 %v1040
    %1696 = vmatprep.subr.mxu0 %v1047
    %1697 = vmatpush1.msra.mxu0 %v1046
    %1698 = vmatprep.subr.mxu0 %v1053
    %1699 = vmatpush1.msra.mxu0 %v1052
    %1700 = vmatprep.subr.mxu0 %v1059
    %1701 = vmatpush1.msra.mxu0 %v1058
    %1702 = vmatprep.mubr.f32.mxu0 %v1340
    %1703 = vmatmul.mubr.f32.gmra.mrb[0].mxu0 %v1332
    %v1704 = vpop.f32.mrb[0].mxu0
    %v1705 = vadd.f32 %v1634, %v1704
    %v1706 = vpop.f32.mrb[0].mxu0
    %v1707 = vadd.f32 %v1636, %v1706
    %1708 = vdwg.mxu0
    %1709 = vmatprep.subr.mxu0 %v1065
    %1710 = vmatpush1.msra.mxu0 %v1064
    %1711 = vmatprep.subr.mxu0 %v1071
    %1712 = vmatpush1.msra.mxu0 %v1070
    %1713 = vmatprep.subr.mxu0 %v1077
    %1714 = vmatpush1.msra.mxu0 %v1076
    %1715 = vmatprep.subr.mxu0 %v1083
    %1716 = vmatpush1.msra.mxu0 %v1082
    %1717 = vmatprep.subr.mxu0 %v1089
    %1718 = vmatpush1.msra.mxu0 %v1088
    %1719 = vmatprep.subr.mxu0 %v1095
    %1720 = vmatpush1.msra.mxu0 %v1094
    %1721 = vmatprep.subr.mxu0 %v1101
    %1722 = vmatpush1.msra.mxu0 %v1100
    %1723 = vmatprep.subr.mxu0 %v1107
    %1724 = vmatpush1.msra.mxu0 %v1106
    %1725 = vmatprep.subr.mxu0 %v1113
    %1726 = vmatpush1.msra.mxu0 %v1112
    %1727 = vmatprep.subr.mxu0 %v1119
    %1728 = vmatpush1.msra.mxu0 %v1118
    %1729 = vmatprep.subr.mxu0 %v1125
    %1730 = vmatpush1.msra.mxu0 %v1124
    %1731 = vmatprep.subr.mxu0 %v1131
    %1732 = vmatpush1.msra.mxu0 %v1130
    %1733 = vmatprep.subr.mxu0 %v1137
    %1734 = vmatpush1.msra.mxu0 %v1136
    %1735 = vmatprep.subr.mxu0 %v1143
    %1736 = vmatpush1.msra.mxu0 %v1142
    %1737 = vmatprep.subr.mxu0 %v1149
    %1738 = vmatpush1.msra.mxu0 %v1148
    %1739 = vmatprep.subr.mxu0 %v1155
    %1740 = vmatpush1.msra.mxu0 %v1154
    %1741 = vmatprep.subr.mxu0 %v1161
    %1742 = vmatpush1.msra.mxu0 %v1160
    %1743 = vmatprep.subr.mxu0 %v1167
    %1744 = vmatpush1.msra.mxu0 %v1166
    %1745 = vmatprep.subr.mxu0 %v1173
    %1746 = vmatpush1.msra.mxu0 %v1172
    %1747 = vmatprep.subr.mxu0 %v1179
    %1748 = vmatpush1.msra.mxu0 %v1178
    %1749 = vmatprep.subr.mxu0 %v1185
    %1750 = vmatpush1.msra.mxu0 %v1184
    %1751 = vmatprep.subr.mxu0 %v1191
    %1752 = vmatpush1.msra.mxu0 %v1190
    %1753 = vmatprep.subr.mxu0 %v1197
    %1754 = vmatpush1.msra.mxu0 %v1196
    %1755 = vmatprep.subr.mxu0 %v1203
    %1756 = vmatpush1.msra.mxu0 %v1202
    %1757 = vmatprep.subr.mxu0 %v1209
    %1758 = vmatpush1.msra.mxu0 %v1208
    %1759 = vmatprep.subr.mxu0 %v1215
    %1760 = vmatpush1.msra.mxu0 %v1214
    %1761 = vmatprep.subr.mxu0 %v1221
    %1762 = vmatpush1.msra.mxu0 %v1220
    %1763 = vmatprep.subr.mxu0 %v1227
    %1764 = vmatpush1.msra.mxu0 %v1226
    %1765 = vmatprep.subr.mxu0 %v1233
    %1766 = vmatpush1.msra.mxu0 %v1232
    %1767 = vmatprep.subr.mxu0 %v1239
    %1768 = vmatpush1.msra.mxu0 %v1238
    %1769 = vmatprep.subr.mxu0 %v1245
    %1770 = vmatpush1.msra.mxu0 %v1244
    %1771 = vmatprep.subr.mxu0 %v1251
    %1772 = vmatpush1.msra.mxu0 %v1250
    %1773 = vmatprep.mubr.f32.mxu0 %v1341
    %1774 = vmatmul.mubr.f32.gmra.mrb[0].mxu0 %v1339
    %v1775 = vpop.f32.mrb[0].mxu0
    %v1776 = vadd.f32 %v1705, %v1775
    %v1777 = vpop.f32.mrb[0].mxu0
    %v1778 = vadd.f32 %v1707, %v1777
    %1779 = vdwg.mxu0
    %1780 = vmatprep.subr.mxu0 %v107
    %1781 = vmatpush1.msra.mxu0 %v106
    %1782 = vmatprep.subr.mxu0 %v113
    %1783 = vmatpush1.msra.mxu0 %v112
    %1784 = vmatprep.subr.mxu0 %v119
    %1785 = vmatpush1.msra.mxu0 %v118
    %1786 = vmatprep.subr.mxu0 %v125
    %1787 = vmatpush1.msra.mxu0 %v124
    %1788 = vmatprep.subr.mxu0 %v131
    %1789 = vmatpush1.msra.mxu0 %v130
    %1790 = vmatprep.subr.mxu0 %v137
    %1791 = vmatpush1.msra.mxu0 %v136
    %1792 = vmatprep.subr.mxu0 %v143
    %1793 = vmatpush1.msra.mxu0 %v142
    %1794 = vmatprep.subr.mxu0 %v149
    %1795 = vmatpush1.msra.mxu0 %v148
    %1796 = vmatprep.subr.mxu0 %v155
    %1797 = vmatpush1.msra.mxu0 %v154
    %1798 = vmatprep.subr.mxu0 %v161
    %1799 = vmatpush1.msra.mxu0 %v160
    %1800 = vmatprep.subr.mxu0 %v167
    %1801 = vmatpush1.msra.mxu0 %v166
    %1802 = vmatprep.subr.mxu0 %v173
    %1803 = vmatpush1.msra.mxu0 %v172
    %1804 = vmatprep.subr.mxu0 %v179
    %1805 = vmatpush1.msra.mxu0 %v178
    %1806 = vmatprep.subr.mxu0 %v185
    %1807 = vmatpush1.msra.mxu0 %v184
    %1808 = vmatprep.subr.mxu0 %v191
    %1809 = vmatpush1.msra.mxu0 %v190
    %1810 = vmatprep.subr.mxu0 %v197
    %1811 = vmatpush1.msra.mxu0 %v196
    %1812 = vmatprep.subr.mxu0 %v203
    %1813 = vmatpush1.msra.mxu0 %v202
    %1814 = vmatprep.subr.mxu0 %v209
    %1815 = vmatpush1.msra.mxu0 %v208
    %1816 = vmatprep.subr.mxu0 %v215
    %1817 = vmatpush1.msra.mxu0 %v214
    %1818 = vmatprep.subr.mxu0 %v221
    %1819 = vmatpush1.msra.mxu0 %v220
    %1820 = vmatprep.subr.mxu0 %v227
    %1821 = vmatpush1.msra.mxu0 %v226
    %1822 = vmatprep.subr.mxu0 %v233
    %1823 = vmatpush1.msra.mxu0 %v232
    %1824 = vmatprep.subr.mxu0 %v239
    %1825 = vmatpush1.msra.mxu0 %v238
    %1826 = vmatprep.subr.mxu0 %v245
    %1827 = vmatpush1.msra.mxu0 %v244
    %1828 = vmatprep.subr.mxu0 %v251
    %1829 = vmatpush1.msra.mxu0 %v250
    %1830 = vmatprep.subr.mxu0 %v257
    %1831 = vmatpush1.msra.mxu0 %v256
    %1832 = vmatprep.subr.mxu0 %v263
    %1833 = vmatpush1.msra.mxu0 %v262
    %1834 = vmatprep.subr.mxu0 %v269
    %1835 = vmatpush1.msra.mxu0 %v268
    %1836 = vmatprep.subr.mxu0 %v275
    %1837 = vmatpush1.msra.mxu0 %v274
    %1838 = vmatprep.subr.mxu0 %v281
    %1839 = vmatpush1.msra.mxu0 %v280
    %1840 = vmatprep.subr.mxu0 %v287
    %1841 = vmatpush1.msra.mxu0 %v286
    %1842 = vmatprep.subr.mxu0 %v293
    %1843 = vmatpush1.msra.mxu0 %v292
    %1844 = vmatprep.mubr.f32.mxu0 %v1306
    %1845 = vmatmul.mubr.f32.gmra.mrb[0].mxu0 %v1298
    %v1846 = vpop.f32.mrb[0].mxu0
    %v1847 = vadd.f32 %v1269, %v1846
    %v1848 = vpop.f32.mrb[0].mxu0
    %v1849 = vadd.f32 %v1273, %v1848
    %1850 = vdwg.mxu0
    %1851 = vmatprep.subr.mxu0 %v299
    %1852 = vmatpush1.msra.mxu0 %v298
    %1853 = vmatprep.subr.mxu0 %v305
    %1854 = vmatpush1.msra.mxu0 %v304
    %1855 = vmatprep.subr.mxu0 %v311
    %1856 = vmatpush1.msra.mxu0 %v310
    %1857 = vmatprep.subr.mxu0 %v317
    %1858 = vmatpush1.msra.mxu0 %v316
    %1859 = vmatprep.subr.mxu0 %v323
    %1860 = vmatpush1.msra.mxu0 %v322
    %1861 = vmatprep.subr.mxu0 %v329
    %1862 = vmatpush1.msra.mxu0 %v328
    %1863 = vmatprep.subr.mxu0 %v335
    %1864 = vmatpush1.msra.mxu0 %v334
    %1865 = vmatprep.subr.mxu0 %v341
    %1866 = vmatpush1.msra.mxu0 %v340
    %1867 = vmatprep.subr.mxu0 %v347
    %1868 = vmatpush1.msra.mxu0 %v346
    %1869 = vmatprep.subr.mxu0 %v353
    %1870 = vmatpush1.msra.mxu0 %v352
    %1871 = vmatprep.subr.mxu0 %v359
    %1872 = vmatpush1.msra.mxu0 %v358
    %1873 = vmatprep.subr.mxu0 %v365
    %1874 = vmatpush1.msra.mxu0 %v364
    %1875 = vmatprep.subr.mxu0 %v371
    %1876 = vmatpush1.msra.mxu0 %v370
    %1877 = vmatprep.subr.mxu0 %v377
    %1878 = vmatpush1.msra.mxu0 %v376
    %1879 = vmatprep.subr.mxu0 %v383
    %1880 = vmatpush1.msra.mxu0 %v382
    %1881 = vmatprep.subr.mxu0 %v389
    %1882 = vmatpush1.msra.mxu0 %v388
    %1883 = vmatprep.subr.mxu0 %v395
    %1884 = vmatpush1.msra.mxu0 %v394
    %1885 = vmatprep.subr.mxu0 %v401
    %1886 = vmatpush1.msra.mxu0 %v400
    %1887 = vmatprep.subr.mxu0 %v407
    %1888 = vmatpush1.msra.mxu0 %v406
    %1889 = vmatprep.subr.mxu0 %v413
    %1890 = vmatpush1.msra.mxu0 %v412
    %1891 = vmatprep.subr.mxu0 %v419
    %1892 = vmatpush1.msra.mxu0 %v418
    %1893 = vmatprep.subr.mxu0 %v425
    %1894 = vmatpush1.msra.mxu0 %v424
    %1895 = vmatprep.subr.mxu0 %v431
    %1896 = vmatpush1.msra.mxu0 %v430
    %1897 = vmatprep.subr.mxu0 %v437
    %1898 = vmatpush1.msra.mxu0 %v436
    %1899 = vmatprep.subr.mxu0 %v443
    %1900 = vmatpush1.msra.mxu0 %v442
    %1901 = vmatprep.subr.mxu0 %v449
    %1902 = vmatpush1.msra.mxu0 %v448
    %1903 = vmatprep.subr.mxu0 %v455
    %1904 = vmatpush1.msra.mxu0 %v454
    %1905 = vmatprep.subr.mxu0 %v461
    %1906 = vmatpush1.msra.mxu0 %v460
    %1907 = vmatprep.subr.mxu0 %v467
    %1908 = vmatpush1.msra.mxu0 %v466
    %1909 = vmatprep.subr.mxu0 %v473
    %1910 = vmatpush1.msra.mxu0 %v472
    %1911 = vmatprep.subr.mxu0 %v479
    %1912 = vmatpush1.msra.mxu0 %v478
    %1913 = vmatprep.subr.mxu0 %v485
    %1914 = vmatpush1.msra.mxu0 %v484
    %1915 = vmatprep.mubr.f32.mxu0 %v1307
    %1916 = vmatmul.mubr.f32.gmra.mrb[0].mxu0 %v1305
    %v1917 = vpop.f32.mrb[0].mxu0
    %v1918 = vadd.f32 %v1847, %v1917
    %v1919 = vpop.f32.mrb[0].mxu0
    %v1920 = vadd.f32 %v1849, %v1919
    %1921 = vdwg.mxu0
    %1922 = vmatprep.subr.mxu0 %v491
    %1923 = vmatpush1.msra.mxu0 %v490
    %1924 = vmatprep.subr.mxu0 %v497
    %1925 = vmatpush1.msra.mxu0 %v496
    %1926 = vmatprep.subr.mxu0 %v503
    %1927 = vmatpush1.msra.mxu0 %v502
    %1928 = vmatprep.subr.mxu0 %v509
    %1929 = vmatpush1.msra.mxu0 %v508
    %1930 = vmatprep.subr.mxu0 %v515
    %1931 = vmatpush1.msra.mxu0 %v514
    %1932 = vmatprep.subr.mxu0 %v521
    %1933 = vmatpush1.msra.mxu0 %v520
    %1934 = vmatprep.subr.mxu0 %v527
    %1935 = vmatpush1.msra.mxu0 %v526
    %1936 = vmatprep.subr.mxu0 %v533
    %1937 = vmatpush1.msra.mxu0 %v532
    %1938 = vmatprep.subr.mxu0 %v539
    %1939 = vmatpush1.msra.mxu0 %v538
    %1940 = vmatprep.subr.mxu0 %v545
    %1941 = vmatpush1.msra.mxu0 %v544
    %1942 = vmatprep.subr.mxu0 %v551
    %1943 = vmatpush1.msra.mxu0 %v550
    %1944 = vmatprep.subr.mxu0 %v557
    %1945 = vmatpush1.msra.mxu0 %v556
    %1946 = vmatprep.subr.mxu0 %v563
    %1947 = vmatpush1.msra.mxu0 %v562
    %1948 = vmatprep.subr.mxu0 %v569
    %1949 = vmatpush1.msra.mxu0 %v568
    %1950 = vmatprep.subr.mxu0 %v575
    %1951 = vmatpush1.msra.mxu0 %v574
    %1952 = vmatprep.subr.mxu0 %v581
    %1953 = vmatpush1.msra.mxu0 %v580
    %1954 = vmatprep.subr.mxu0 %v587
    %1955 = vmatpush1.msra.mxu0 %v586
    %1956 = vmatprep.subr.mxu0 %v593
    %1957 = vmatpush1.msra.mxu0 %v592
    %1958 = vmatprep.subr.mxu0 %v599
    %1959 = vmatpush1.msra.mxu0 %v598
    %1960 = vmatprep.subr.mxu0 %v605
    %1961 = vmatpush1.msra.mxu0 %v604
    %1962 = vmatprep.subr.mxu0 %v611
    %1963 = vmatpush1.msra.mxu0 %v610
    %1964 = vmatprep.subr.mxu0 %v617
    %1965 = vmatpush1.msra.mxu0 %v616
    %1966 = vmatprep.subr.mxu0 %v623
    %1967 = vmatpush1.msra.mxu0 %v622
    %1968 = vmatprep.subr.mxu0 %v629
    %1969 = vmatpush1.msra.mxu0 %v628
    %1970 = vmatprep.subr.mxu0 %v635
    %1971 = vmatpush1.msra.mxu0 %v634
    %1972 = vmatprep.subr.mxu0 %v641
    %1973 = vmatpush1.msra.mxu0 %v640
    %1974 = vmatprep.subr.mxu0 %v647
    %1975 = vmatpush1.msra.mxu0 %v646
    %1976 = vmatprep.subr.mxu0 %v653
    %1977 = vmatpush1.msra.mxu0 %v652
    %1978 = vmatprep.subr.mxu0 %v659
    %1979 = vmatpush1.msra.mxu0 %v658
    %1980 = vmatprep.subr.mxu0 %v665
    %1981 = vmatpush1.msra.mxu0 %v664
    %1982 = vmatprep.subr.mxu0 %v671
    %1983 = vmatpush1.msra.mxu0 %v670
    %1984 = vmatprep.subr.mxu0 %v677
    %1985 = vmatpush1.msra.mxu0 %v676
    %1986 = vmatprep.mubr.f32.mxu0 %v1323
    %1987 = vmatmul.mubr.f32.gmra.mrb[0].mxu0 %v1315
    %v1988 = vpop.f32.mrb[0].mxu0
    %v1989 = vadd.f32 %v1918, %v1988
    %v1990 = vpop.f32.mrb[0].mxu0
    %v1991 = vadd.f32 %v1920, %v1990
    %1992 = vdwg.mxu0
    %1993 = vmatprep.subr.mxu0 %v683
    %1994 = vmatpush1.msra.mxu0 %v682
    %1995 = vmatprep.subr.mxu0 %v689
    %1996 = vmatpush1.msra.mxu0 %v688
    %1997 = vmatprep.subr.mxu0 %v695
    %1998 = vmatpush1.msra.mxu0 %v694
    %1999 = vmatprep.subr.mxu0 %v701
    %2000 = vmatpush1.msra.mxu0 %v700
    %2001 = vmatprep.subr.mxu0 %v707
    %2002 = vmatpush1.msra.mxu0 %v706
    %2003 = vmatprep.subr.mxu0 %v713
    %2004 = vmatpush1.msra.mxu0 %v712
    %2005 = vmatprep.subr.mxu0 %v719
    %2006 = vmatpush1.msra.mxu0 %v718
    %2007 = vmatprep.subr.mxu0 %v725
    %2008 = vmatpush1.msra.mxu0 %v724
    %2009 = vmatprep.subr.mxu0 %v731
    %2010 = vmatpush1.msra.mxu0 %v730
    %2011 = vmatprep.subr.mxu0 %v737
    %2012 = vmatpush1.msra.mxu0 %v736
    %2013 = vmatprep.subr.mxu0 %v743
    %2014 = vmatpush1.msra.mxu0 %v742
    %2015 = vmatprep.subr.mxu0 %v749
    %2016 = vmatpush1.msra.mxu0 %v748
    %2017 = vmatprep.subr.mxu0 %v755
    %2018 = vmatpush1.msra.mxu0 %v754
    %2019 = vmatprep.subr.mxu0 %v761
    %2020 = vmatpush1.msra.mxu0 %v760
    %2021 = vmatprep.subr.mxu0 %v767
    %2022 = vmatpush1.msra.mxu0 %v766
    %2023 = vmatprep.subr.mxu0 %v773
    %2024 = vmatpush1.msra.mxu0 %v772
    %2025 = vmatprep.subr.mxu0 %v779
    %2026 = vmatpush1.msra.mxu0 %v778
    %2027 = vmatprep.subr.mxu0 %v785
    %2028 = vmatpush1.msra.mxu0 %v784
    %2029 = vmatprep.subr.mxu0 %v791
    %2030 = vmatpush1.msra.mxu0 %v790
    %2031 = vmatprep.subr.mxu0 %v797
    %2032 = vmatpush1.msra.mxu0 %v796
    %2033 = vmatprep.subr.mxu0 %v803
    %2034 = vmatpush1.msra.mxu0 %v802
    %2035 = vmatprep.subr.mxu0 %v809
    %2036 = vmatpush1.msra.mxu0 %v808
    %2037 = vmatprep.subr.mxu0 %v815
    %2038 = vmatpush1.msra.mxu0 %v814
    %2039 = vmatprep.subr.mxu0 %v821
    %2040 = vmatpush1.msra.mxu0 %v820
    %2041 = vmatprep.subr.mxu0 %v827
    %2042 = vmatpush1.msra.mxu0 %v826
    %2043 = vmatprep.subr.mxu0 %v833
    %2044 = vmatpush1.msra.mxu0 %v832
    %2045 = vmatprep.subr.mxu0 %v839
    %2046 = vmatpush1.msra.mxu0 %v838
    %2047 = vmatprep.subr.mxu0 %v845
    %2048 = vmatpush1.msra.mxu0 %v844
    %2049 = vmatprep.subr.mxu0 %v851
    %2050 = vmatpush1.msra.mxu0 %v850
    %2051 = vmatprep.subr.mxu0 %v857
    %2052 = vmatpush1.msra.mxu0 %v856
    %2053 = vmatprep.subr.mxu0 %v863
    %2054 = vmatpush1.msra.mxu0 %v862
    %2055 = vmatprep.subr.mxu0 %v869
    %2056 = vmatpush1.msra.mxu0 %v868
    %2057 = vmatprep.mubr.f32.mxu0 %v1324
    %2058 = vmatmul.mubr.f32.gmra.mrb[0].mxu0 %v1322
    %v2059 = vpop.f32.mrb[0].mxu0
    %v2060 = vadd.f32 %v1989, %v2059
    %v2061 = vpop.f32.mrb[0].mxu0
    %v2062 = vadd.f32 %v1991, %v2061
    %2063 = vdwg.mxu0
    %2064 = vmatprep.subr.mxu0 %v875
    %2065 = vmatpush1.msra.mxu0 %v874
    %2066 = vmatprep.subr.mxu0 %v881
    %2067 = vmatpush1.msra.mxu0 %v880
    %2068 = vmatprep.subr.mxu0 %v887
    %2069 = vmatpush1.msra.mxu0 %v886
    %2070 = vmatprep.subr.mxu0 %v893
    %2071 = vmatpush1.msra.mxu0 %v892
    %2072 = vmatprep.subr.mxu0 %v899
    %2073 = vmatpush1.msra.mxu0 %v898
    %2074 = vmatprep.subr.mxu0 %v905
    %2075 = vmatpush1.msra.mxu0 %v904
    %2076 = vmatprep.subr.mxu0 %v911
    %2077 = vmatpush1.msra.mxu0 %v910
    %2078 = vmatprep.subr.mxu0 %v917
    %2079 = vmatpush1.msra.mxu0 %v916
    %2080 = vmatprep.subr.mxu0 %v923
    %2081 = vmatpush1.msra.mxu0 %v922
    %2082 = vmatprep.subr.mxu0 %v929
    %2083 = vmatpush1.msra.mxu0 %v928
    %2084 = vmatprep.subr.mxu0 %v935
    %2085 = vmatpush1.msra.mxu0 %v934
    %2086 = vmatprep.subr.mxu0 %v941
    %2087 = vmatpush1.msra.mxu0 %v940
    %2088 = vmatprep.subr.mxu0 %v947
    %2089 = vmatpush1.msra.mxu0 %v946
    %2090 = vmatprep.subr.mxu0 %v953
    %2091 = vmatpush1.msra.mxu0 %v952
    %2092 = vmatprep.subr.mxu0 %v959
    %2093 = vmatpush1.msra.mxu0 %v958
    %2094 = vmatprep.subr.mxu0 %v965
    %2095 = vmatpush1.msra.mxu0 %v964
    %2096 = vmatprep.subr.mxu0 %v971
    %2097 = vmatpush1.msra.mxu0 %v970
    %2098 = vmatprep.subr.mxu0 %v977
    %2099 = vmatpush1.msra.mxu0 %v976
    %2100 = vmatprep.subr.mxu0 %v983
    %2101 = vmatpush1.msra.mxu0 %v982
    %2102 = vmatprep.subr.mxu0 %v989
    %2103 = vmatpush1.msra.mxu0 %v988
    %2104 = vmatprep.subr.mxu0 %v995
    %2105 = vmatpush1.msra.mxu0 %v994
    %2106 = vmatprep.subr.mxu0 %v1001
    %2107 = vmatpush1.msra.mxu0 %v1000
    %2108 = vmatprep.subr.mxu0 %v1007
    %2109 = vmatpush1.msra.mxu0 %v1006
    %2110 = vmatprep.subr.mxu0 %v1013
    %2111 = vmatpush1.msra.mxu0 %v1012
    %2112 = vmatprep.subr.mxu0 %v1019
    %2113 = vmatpush1.msra.mxu0 %v1018
    %2114 = vmatprep.subr.mxu0 %v1025
    %2115 = vmatpush1.msra.mxu0 %v1024
    %2116 = vmatprep.subr.mxu0 %v1031
    %2117 = vmatpush1.msra.mxu0 %v1030
    %2118 = vmatprep.subr.mxu0 %v1037
    %2119 = vmatpush1.msra.mxu0 %v1036
    %2120 = vmatprep.subr.mxu0 %v1043
    %2121 = vmatpush1.msra.mxu0 %v1042
    %2122 = vmatprep.subr.mxu0 %v1049
    %2123 = vmatpush1.msra.mxu0 %v1048
    %2124 = vmatprep.subr.mxu0 %v1055
    %2125 = vmatpush1.msra.mxu0 %v1054
    %2126 = vmatprep.subr.mxu0 %v1061
    %2127 = vmatpush1.msra.mxu0 %v1060
    %2128 = vmatprep.mubr.f32.mxu0 %v1340
    %2129 = vmatmul.mubr.f32.gmra.mrb[0].mxu0 %v1332
    %v2130 = vpop.f32.mrb[0].mxu0
    %v2131 = vadd.f32 %v2060, %v2130
    %v2132 = vpop.f32.mrb[0].mxu0
    %v2133 = vadd.f32 %v2062, %v2132
    %2134 = vdwg.mxu0
    %2135 = vmatprep.subr.mxu0 %v1067
    %2136 = vmatpush1.msra.mxu0 %v1066
    %2137 = vmatprep.subr.mxu0 %v1073
    %2138 = vmatpush1.msra.mxu0 %v1072
    %2139 = vmatprep.subr.mxu0 %v1079
    %2140 = vmatpush1.msra.mxu0 %v1078
    %2141 = vmatprep.subr.mxu0 %v1085
    %2142 = vmatpush1.msra.mxu0 %v1084
    %2143 = vmatprep.subr.mxu0 %v1091
    %2144 = vmatpush1.msra.mxu0 %v1090
    %2145 = vmatprep.subr.mxu0 %v1097
    %2146 = vmatpush1.msra.mxu0 %v1096
    %2147 = vmatprep.subr.mxu0 %v1103
    %2148 = vmatpush1.msra.mxu0 %v1102
    %2149 = vmatprep.subr.mxu0 %v1109
    %2150 = vmatpush1.msra.mxu0 %v1108
    %2151 = vmatprep.subr.mxu0 %v1115
    %2152 = vmatpush1.msra.mxu0 %v1114
    %2153 = vmatprep.subr.mxu0 %v1121
    %2154 = vmatpush1.msra.mxu0 %v1120
    %2155 = vmatprep.subr.mxu0 %v1127
    %2156 = vmatpush1.msra.mxu0 %v1126
    %2157 = vmatprep.subr.mxu0 %v1133
    %2158 = vmatpush1.msra.mxu0 %v1132
    %2159 = vmatprep.subr.mxu0 %v1139
    %2160 = vmatpush1.msra.mxu0 %v1138
    %2161 = vmatprep.subr.mxu0 %v1145
    %2162 = vmatpush1.msra.mxu0 %v1144
    %2163 = vmatprep.subr.mxu0 %v1151
    %2164 = vmatpush1.msra.mxu0 %v1150
    %2165 = vmatprep.subr.mxu0 %v1157
    %2166 = vmatpush1.msra.mxu0 %v1156
    %2167 = vmatprep.subr.mxu0 %v1163
    %2168 = vmatpush1.msra.mxu0 %v1162
    %2169 = vmatprep.subr.mxu0 %v1169
    %2170 = vmatpush1.msra.mxu0 %v1168
    %2171 = vmatprep.subr.mxu0 %v1175
    %2172 = vmatpush1.msra.mxu0 %v1174
    %2173 = vmatprep.subr.mxu0 %v1181
    %2174 = vmatpush1.msra.mxu0 %v1180
    %2175 = vmatprep.subr.mxu0 %v1187
    %2176 = vmatpush1.msra.mxu0 %v1186
    %2177 = vmatprep.subr.mxu0 %v1193
    %2178 = vmatpush1.msra.mxu0 %v1192
    %2179 = vmatprep.subr.mxu0 %v1199
    %2180 = vmatpush1.msra.mxu0 %v1198
    %2181 = vmatprep.subr.mxu0 %v1205
    %2182 = vmatpush1.msra.mxu0 %v1204
    %2183 = vmatprep.subr.mxu0 %v1211
    %2184 = vmatpush1.msra.mxu0 %v1210
    %2185 = vmatprep.subr.mxu0 %v1217
    %2186 = vmatpush1.msra.mxu0 %v1216
    %2187 = vmatprep.subr.mxu0 %v1223
    %2188 = vmatpush1.msra.mxu0 %v1222
    %2189 = vmatprep.subr.mxu0 %v1229
    %2190 = vmatpush1.msra.mxu0 %v1228
    %2191 = vmatprep.subr.mxu0 %v1235
    %2192 = vmatpush1.msra.mxu0 %v1234
    %2193 = vmatprep.subr.mxu0 %v1241
    %2194 = vmatpush1.msra.mxu0 %v1240
    %2195 = vmatprep.subr.mxu0 %v1247
    %2196 = vmatpush1.msra.mxu0 %v1246
    %2197 = vmatprep.subr.mxu0 %v1253
    %2198 = vmatpush1.msra.mxu0 %v1252
    %2199 = vmatprep.mubr.f32.mxu0 %v1341
    %2200 = vmatmul.mubr.f32.gmra.mrb[0].mxu0 %v1339
    %v2201 = vpop.f32.mrb[0].mxu0
    %v2202 = vadd.f32 %v2131, %v2201
    %v2203 = vpop.f32.mrb[0].mxu0
    %v2204 = vadd.f32 %v2133, %v2203
    %2205 = vdwg.mxu0
    %2206 = vmatprep.subr.mxu0 %v109
    %2207 = vmatpush1.msra.mxu0 %v108
    %2208 = vmatprep.subr.mxu0 %v115
    %2209 = vmatpush1.msra.mxu0 %v114
    %2210 = vmatprep.subr.mxu0 %v121
    %2211 = vmatpush1.msra.mxu0 %v120
    %2212 = vmatprep.subr.mxu0 %v127
    %2213 = vmatpush1.msra.mxu0 %v126
    %2214 = vmatprep.subr.mxu0 %v133
    %2215 = vmatpush1.msra.mxu0 %v132
    %2216 = vmatprep.subr.mxu0 %v139
    %2217 = vmatpush1.msra.mxu0 %v138
    %2218 = vmatprep.subr.mxu0 %v145
    %2219 = vmatpush1.msra.mxu0 %v144
    %2220 = vmatprep.subr.mxu0 %v151
    %2221 = vmatpush1.msra.mxu0 %v150
    %2222 = vmatprep.subr.mxu0 %v157
    %2223 = vmatpush1.msra.mxu0 %v156
    %2224 = vmatprep.subr.mxu0 %v163
    %2225 = vmatpush1.msra.mxu0 %v162
    %2226 = vmatprep.subr.mxu0 %v169
    %2227 = vmatpush1.msra.mxu0 %v168
    %2228 = vmatprep.subr.mxu0 %v175
    %2229 = vmatpush1.msra.mxu0 %v174
    %2230 = vmatprep.subr.mxu0 %v181
    %2231 = vmatpush1.msra.mxu0 %v180
    %2232 = vmatprep.subr.mxu0 %v187
    %2233 = vmatpush1.msra.mxu0 %v186
    %2234 = vmatprep.subr.mxu0 %v193
    %2235 = vmatpush1.msra.mxu0 %v192
    %2236 = vmatprep.subr.mxu0 %v199
    %2237 = vmatpush1.msra.mxu0 %v198
    %2238 = vmatprep.subr.mxu0 %v205
    %2239 = vmatpush1.msra.mxu0 %v204
    %2240 = vmatprep.subr.mxu0 %v211
    %2241 = vmatpush1.msra.mxu0 %v210
    %2242 = vmatprep.subr.mxu0 %v217
    %2243 = vmatpush1.msra.mxu0 %v216
    %2244 = vmatprep.subr.mxu0 %v223
    %2245 = vmatpush1.msra.mxu0 %v222
    %2246 = vmatprep.subr.mxu0 %v229
    %2247 = vmatpush1.msra.mxu0 %v228
    %2248 = vmatprep.subr.mxu0 %v235
    %2249 = vmatpush1.msra.mxu0 %v234
    %2250 = vmatprep.subr.mxu0 %v241
    %2251 = vmatpush1.msra.mxu0 %v240
    %2252 = vmatprep.subr.mxu0 %v247
    %2253 = vmatpush1.msra.mxu0 %v246
    %2254 = vmatprep.subr.mxu0 %v253
    %2255 = vmatpush1.msra.mxu0 %v252
    %2256 = vmatprep.subr.mxu0 %v259
    %2257 = vmatpush1.msra.mxu0 %v258
    %2258 = vmatprep.subr.mxu0 %v265
    %2259 = vmatpush1.msra.mxu0 %v264
    %2260 = vmatprep.subr.mxu0 %v271
    %2261 = vmatpush1.msra.mxu0 %v270
    %2262 = vmatprep.subr.mxu0 %v277
    %2263 = vmatpush1.msra.mxu0 %v276
    %2264 = vmatprep.subr.mxu0 %v283
    %2265 = vmatpush1.msra.mxu0 %v282
    %2266 = vmatprep.subr.mxu0 %v289
    %2267 = vmatpush1.msra.mxu0 %v288
    %2268 = vmatprep.subr.mxu0 %v295
    %2269 = vmatpush1.msra.mxu0 %v294
    %2270 = vmatprep.mubr.f32.mxu0 %v1306
    %2271 = vmatmul.mubr.f32.gmra.mrb[0].mxu0 %v1298
    %v2272 = vpop.f32.mrb[0].mxu0
    %v2273 = vadd.f32 %v1277, %v2272
    %v2274 = vpop.f32.mrb[0].mxu0
    %v2275 = vadd.f32 %v1281, %v2274
    %2276 = vdwg.mxu0
    %2277 = vmatprep.subr.mxu0 %v301
    %2278 = vmatpush1.msra.mxu0 %v300
    %2279 = vmatprep.subr.mxu0 %v307
    %2280 = vmatpush1.msra.mxu0 %v306
    %2281 = vmatprep.subr.mxu0 %v313
    %2282 = vmatpush1.msra.mxu0 %v312
    %2283 = vmatprep.subr.mxu0 %v319
    %2284 = vmatpush1.msra.mxu0 %v318
    %2285 = vmatprep.subr.mxu0 %v325
    %2286 = vmatpush1.msra.mxu0 %v324
    %2287 = vmatprep.subr.mxu0 %v331
    %2288 = vmatpush1.msra.mxu0 %v330
    %2289 = vmatprep.subr.mxu0 %v337
    %2290 = vmatpush1.msra.mxu0 %v336
    %2291 = vmatprep.subr.mxu0 %v343
    %2292 = vmatpush1.msra.mxu0 %v342
    %2293 = vmatprep.subr.mxu0 %v349
    %2294 = vmatpush1.msra.mxu0 %v348
    %2295 = vmatprep.subr.mxu0 %v355
    %2296 = vmatpush1.msra.mxu0 %v354
    %2297 = vmatprep.subr.mxu0 %v361
    %2298 = vmatpush1.msra.mxu0 %v360
    %2299 = vmatprep.subr.mxu0 %v367
    %2300 = vmatpush1.msra.mxu0 %v366
    %2301 = vmatprep.subr.mxu0 %v373
    %2302 = vmatpush1.msra.mxu0 %v372
    %2303 = vmatprep.subr.mxu0 %v379
    %2304 = vmatpush1.msra.mxu0 %v378
    %2305 = vmatprep.subr.mxu0 %v385
    %2306 = vmatpush1.msra.mxu0 %v384
    %2307 = vmatprep.subr.mxu0 %v391
    %2308 = vmatpush1.msra.mxu0 %v390
    %2309 = vmatprep.subr.mxu0 %v397
    %2310 = vmatpush1.msra.mxu0 %v396
    %2311 = vmatprep.subr.mxu0 %v403
    %2312 = vmatpush1.msra.mxu0 %v402
    %2313 = vmatprep.subr.mxu0 %v409
    %2314 = vmatpush1.msra.mxu0 %v408
    %2315 = vmatprep.subr.mxu0 %v415
    %2316 = vmatpush1.msra.mxu0 %v414
    %2317 = vmatprep.subr.mxu0 %v421
    %2318 = vmatpush1.msra.mxu0 %v420
    %2319 = vmatprep.subr.mxu0 %v427
    %2320 = vmatpush1.msra.mxu0 %v426
    %2321 = vmatprep.subr.mxu0 %v433
    %2322 = vmatpush1.msra.mxu0 %v432
    %2323 = vmatprep.subr.mxu0 %v439
    %2324 = vmatpush1.msra.mxu0 %v438
    %2325 = vmatprep.subr.mxu0 %v445
    %2326 = vmatpush1.msra.mxu0 %v444
    %2327 = vmatprep.subr.mxu0 %v451
    %2328 = vmatpush1.msra.mxu0 %v450
    %2329 = vmatprep.subr.mxu0 %v457
    %2330 = vmatpush1.msra.mxu0 %v456
    %2331 = vmatprep.subr.mxu0 %v463
    %2332 = vmatpush1.msra.mxu0 %v462
    %2333 = vmatprep.subr.mxu0 %v469
    %2334 = vmatpush1.msra.mxu0 %v468
    %2335 = vmatprep.subr.mxu0 %v475
    %2336 = vmatpush1.msra.mxu0 %v474
    %2337 = vmatprep.subr.mxu0 %v481
    %2338 = vmatpush1.msra.mxu0 %v480
    %2339 = vmatprep.subr.mxu0 %v487
    %2340 = vmatpush1.msra.mxu0 %v486
    %2341 = vmatprep.mubr.f32.mxu0 %v1307
    %2342 = vmatmul.mubr.f32.gmra.mrb[0].mxu0 %v1305
    %v2343 = vpop.f32.mrb[0].mxu0
    %v2344 = vadd.f32 %v2273, %v2343
    %v2345 = vpop.f32.mrb[0].mxu0
    %v2346 = vadd.f32 %v2275, %v2345
    %2347 = vdwg.mxu0
    %2348 = vmatprep.subr.mxu0 %v493
    %2349 = vmatpush1.msra.mxu0 %v492
    %2350 = vmatprep.subr.mxu0 %v499
    %2351 = vmatpush1.msra.mxu0 %v498
    %2352 = vmatprep.subr.mxu0 %v505
    %2353 = vmatpush1.msra.mxu0 %v504
    %2354 = vmatprep.subr.mxu0 %v511
    %2355 = vmatpush1.msra.mxu0 %v510
    %2356 = vmatprep.subr.mxu0 %v517
    %2357 = vmatpush1.msra.mxu0 %v516
    %2358 = vmatprep.subr.mxu0 %v523
    %2359 = vmatpush1.msra.mxu0 %v522
    %2360 = vmatprep.subr.mxu0 %v529
    %2361 = vmatpush1.msra.mxu0 %v528
    %2362 = vmatprep.subr.mxu0 %v535
    %2363 = vmatpush1.msra.mxu0 %v534
    %2364 = vmatprep.subr.mxu0 %v541
    %2365 = vmatpush1.msra.mxu0 %v540
    %2366 = vmatprep.subr.mxu0 %v547
    %2367 = vmatpush1.msra.mxu0 %v546
    %2368 = vmatprep.subr.mxu0 %v553
    %2369 = vmatpush1.msra.mxu0 %v552
    %2370 = vmatprep.subr.mxu0 %v559
    %2371 = vmatpush1.msra.mxu0 %v558
    %2372 = vmatprep.subr.mxu0 %v565
    %2373 = vmatpush1.msra.mxu0 %v564
    %2374 = vmatprep.subr.mxu0 %v571
    %2375 = vmatpush1.msra.mxu0 %v570
    %2376 = vmatprep.subr.mxu0 %v577
    %2377 = vmatpush1.msra.mxu0 %v576
    %2378 = vmatprep.subr.mxu0 %v583
    %2379 = vmatpush1.msra.mxu0 %v582
    %2380 = vmatprep.subr.mxu0 %v589
    %2381 = vmatpush1.msra.mxu0 %v588
    %2382 = vmatprep.subr.mxu0 %v595
    %2383 = vmatpush1.msra.mxu0 %v594
    %2384 = vmatprep.subr.mxu0 %v601
    %2385 = vmatpush1.msra.mxu0 %v600
    %2386 = vmatprep.subr.mxu0 %v607
    %2387 = vmatpush1.msra.mxu0 %v606
    %2388 = vmatprep.subr.mxu0 %v613
    %2389 = vmatpush1.msra.mxu0 %v612
    %2390 = vmatprep.subr.mxu0 %v619
    %2391 = vmatpush1.msra.mxu0 %v618
    %2392 = vmatprep.subr.mxu0 %v625
    %2393 = vmatpush1.msra.mxu0 %v624
    %2394 = vmatprep.subr.mxu0 %v631
    %2395 = vmatpush1.msra.mxu0 %v630
    %2396 = vmatprep.subr.mxu0 %v637
    %2397 = vmatpush1.msra.mxu0 %v636
    %2398 = vmatprep.subr.mxu0 %v643
    %2399 = vmatpush1.msra.mxu0 %v642
    %2400 = vmatprep.subr.mxu0 %v649
    %2401 = vmatpush1.msra.mxu0 %v648
    %2402 = vmatprep.subr.mxu0 %v655
    %2403 = vmatpush1.msra.mxu0 %v654
    %2404 = vmatprep.subr.mxu0 %v661
    %2405 = vmatpush1.msra.mxu0 %v660
    %2406 = vmatprep.subr.mxu0 %v667
    %2407 = vmatpush1.msra.mxu0 %v666
    %2408 = vmatprep.subr.mxu0 %v673
    %2409 = vmatpush1.msra.mxu0 %v672
    %2410 = vmatprep.subr.mxu0 %v679
    %2411 = vmatpush1.msra.mxu0 %v678
    %2412 = vmatprep.mubr.f32.mxu0 %v1323
    %2413 = vmatmul.mubr.f32.gmra.mrb[0].mxu0 %v1315
    %v2414 = vpop.f32.mrb[0].mxu0
    %v2415 = vadd.f32 %v2344, %v2414
    %v2416 = vpop.f32.mrb[0].mxu0
    %v2417 = vadd.f32 %v2346, %v2416
    %2418 = vdwg.mxu0
    %2419 = vmatprep.subr.mxu0 %v685
    %2420 = vmatpush1.msra.mxu0 %v684
    %2421 = vmatprep.subr.mxu0 %v691
    %2422 = vmatpush1.msra.mxu0 %v690
    %2423 = vmatprep.subr.mxu0 %v697
    %2424 = vmatpush1.msra.mxu0 %v696
    %2425 = vmatprep.subr.mxu0 %v703
    %2426 = vmatpush1.msra.mxu0 %v702
    %2427 = vmatprep.subr.mxu0 %v709
    %2428 = vmatpush1.msra.mxu0 %v708
    %2429 = vmatprep.subr.mxu0 %v715
    %2430 = vmatpush1.msra.mxu0 %v714
    %2431 = vmatprep.subr.mxu0 %v721
    %2432 = vmatpush1.msra.mxu0 %v720
    %2433 = vmatprep.subr.mxu0 %v727
    %2434 = vmatpush1.msra.mxu0 %v726
    %2435 = vmatprep.subr.mxu0 %v733
    %2436 = vmatpush1.msra.mxu0 %v732
    %2437 = vmatprep.subr.mxu0 %v739
    %2438 = vmatpush1.msra.mxu0 %v738
    %2439 = vmatprep.subr.mxu0 %v745
    %2440 = vmatpush1.msra.mxu0 %v744
    %2441 = vmatprep.subr.mxu0 %v751
    %2442 = vmatpush1.msra.mxu0 %v750
    %2443 = vmatprep.subr.mxu0 %v757
    %2444 = vmatpush1.msra.mxu0 %v756
    %2445 = vmatprep.subr.mxu0 %v763
    %2446 = vmatpush1.msra.mxu0 %v762
    %2447 = vmatprep.subr.mxu0 %v769
    %2448 = vmatpush1.msra.mxu0 %v768
    %2449 = vmatprep.subr.mxu0 %v775
    %2450 = vmatpush1.msra.mxu0 %v774
    %2451 = vmatprep.subr.mxu0 %v781
    %2452 = vmatpush1.msra.mxu0 %v780
    %2453 = vmatprep.subr.mxu0 %v787
    %2454 = vmatpush1.msra.mxu0 %v786
    %2455 = vmatprep.subr.mxu0 %v793
    %2456 = vmatpush1.msra.mxu0 %v792
    %2457 = vmatprep.subr.mxu0 %v799
    %2458 = vmatpush1.msra.mxu0 %v798
    %2459 = vmatprep.subr.mxu0 %v805
    %2460 = vmatpush1.msra.mxu0 %v804
    %2461 = vmatprep.subr.mxu0 %v811
    %2462 = vmatpush1.msra.mxu0 %v810
    %2463 = vmatprep.subr.mxu0 %v817
    %2464 = vmatpush1.msra.mxu0 %v816
    %2465 = vmatprep.subr.mxu0 %v823
    %2466 = vmatpush1.msra.mxu0 %v822
    %2467 = vmatprep.subr.mxu0 %v829
    %2468 = vmatpush1.msra.mxu0 %v828
    %2469 = vmatprep.subr.mxu0 %v835
    %2470 = vmatpush1.msra.mxu0 %v834
    %2471 = vmatprep.subr.mxu0 %v841
    %2472 = vmatpush1.msra.mxu0 %v840
    %2473 = vmatprep.subr.mxu0 %v847
    %2474 = vmatpush1.msra.mxu0 %v846
    %2475 = vmatprep.subr.mxu0 %v853
    %2476 = vmatpush1.msra.mxu0 %v852
    %2477 = vmatprep.subr.mxu0 %v859
    %2478 = vmatpush1.msra.mxu0 %v858
    %2479 = vmatprep.subr.mxu0 %v865
    %2480 = vmatpush1.msra.mxu0 %v864
    %2481 = vmatprep.subr.mxu0 %v871
    %2482 = vmatpush1.msra.mxu0 %v870
    %2483 = vmatprep.mubr.f32.mxu0 %v1324
    %2484 = vmatmul.mubr.f32.gmra.mrb[0].mxu0 %v1322
    %v2485 = vpop.f32.mrb[0].mxu0
    %v2486 = vadd.f32 %v2415, %v2485
    %v2487 = vpop.f32.mrb[0].mxu0
    %v2488 = vadd.f32 %v2417, %v2487
    %2489 = vdwg.mxu0
    %2490 = vmatprep.subr.mxu0 %v877
    %2491 = vmatpush1.msra.mxu0 %v876
    %2492 = vmatprep.subr.mxu0 %v883
    %2493 = vmatpush1.msra.mxu0 %v882
    %2494 = vmatprep.subr.mxu0 %v889
    %2495 = vmatpush1.msra.mxu0 %v888
    %2496 = vmatprep.subr.mxu0 %v895
    %2497 = vmatpush1.msra.mxu0 %v894
    %2498 = vmatprep.subr.mxu0 %v901
    %2499 = vmatpush1.msra.mxu0 %v900
    %2500 = vmatprep.subr.mxu0 %v907
    %2501 = vmatpush1.msra.mxu0 %v906
    %2502 = vmatprep.subr.mxu0 %v913
    %2503 = vmatpush1.msra.mxu0 %v912
    %2504 = vmatprep.subr.mxu0 %v919
    %2505 = vmatpush1.msra.mxu0 %v918
    %2506 = vmatprep.subr.mxu0 %v925
    %2507 = vmatpush1.msra.mxu0 %v924
    %2508 = vmatprep.subr.mxu0 %v931
    %2509 = vmatpush1.msra.mxu0 %v930
    %2510 = vmatprep.subr.mxu0 %v937
    %2511 = vmatpush1.msra.mxu0 %v936
    %2512 = vmatprep.subr.mxu0 %v943
    %2513 = vmatpush1.msra.mxu0 %v942
    %2514 = vmatprep.subr.mxu0 %v949
    %2515 = vmatpush1.msra.mxu0 %v948
    %2516 = vmatprep.subr.mxu0 %v955
    %2517 = vmatpush1.msra.mxu0 %v954
    %2518 = vmatprep.subr.mxu0 %v961
    %2519 = vmatpush1.msra.mxu0 %v960
    %2520 = vmatprep.subr.mxu0 %v967
    %2521 = vmatpush1.msra.mxu0 %v966
    %2522 = vmatprep.subr.mxu0 %v973
    %2523 = vmatpush1.msra.mxu0 %v972
    %2524 = vmatprep.subr.mxu0 %v979
    %2525 = vmatpush1.msra.mxu0 %v978
    %2526 = vmatprep.subr.mxu0 %v985
    %2527 = vmatpush1.msra.mxu0 %v984
    %2528 = vmatprep.subr.mxu0 %v991
    %2529 = vmatpush1.msra.mxu0 %v990
    %2530 = vmatprep.subr.mxu0 %v997
    %2531 = vmatpush1.msra.mxu0 %v996
    %2532 = vmatprep.subr.mxu0 %v1003
    %2533 = vmatpush1.msra.mxu0 %v1002
    %2534 = vmatprep.subr.mxu0 %v1009
    %2535 = vmatpush1.msra.mxu0 %v1008
    %2536 = vmatprep.subr.mxu0 %v1015
    %2537 = vmatpush1.msra.mxu0 %v1014
    %2538 = vmatprep.subr.mxu0 %v1021
    %2539 = vmatpush1.msra.mxu0 %v1020
    %2540 = vmatprep.subr.mxu0 %v1027
    %2541 = vmatpush1.msra.mxu0 %v1026
    %2542 = vmatprep.subr.mxu0 %v1033
    %2543 = vmatpush1.msra.mxu0 %v1032
    %2544 = vmatprep.subr.mxu0 %v1039
    %2545 = vmatpush1.msra.mxu0 %v1038
    %2546 = vmatprep.subr.mxu0 %v1045
    %2547 = vmatpush1.msra.mxu0 %v1044
    %2548 = vmatprep.subr.mxu0 %v1051
    %2549 = vmatpush1.msra.mxu0 %v1050
    %2550 = vmatprep.subr.mxu0 %v1057
    %2551 = vmatpush1.msra.mxu0 %v1056
    %2552 = vmatprep.subr.mxu0 %v1063
    %2553 = vmatpush1.msra.mxu0 %v1062
    %2554 = vmatprep.mubr.f32.mxu0 %v1340
    %2555 = vmatmul.mubr.f32.gmra.mrb[0].mxu0 %v1332
    %v2556 = vpop.f32.mrb[0].mxu0
    %v2557 = vadd.f32 %v2486, %v2556
    %v2558 = vpop.f32.mrb[0].mxu0
    %v2559 = vadd.f32 %v2488, %v2558
    %2560 = vdwg.mxu0
    %2561 = vmatprep.subr.mxu0 %v1069
    %2562 = vmatpush1.msra.mxu0 %v1068
    %2563 = vmatprep.subr.mxu0 %v1075
    %2564 = vmatpush1.msra.mxu0 %v1074
    %2565 = vmatprep.subr.mxu0 %v1081
    %2566 = vmatpush1.msra.mxu0 %v1080
    %2567 = vmatprep.subr.mxu0 %v1087
    %2568 = vmatpush1.msra.mxu0 %v1086
    %2569 = vmatprep.subr.mxu0 %v1093
    %2570 = vmatpush1.msra.mxu0 %v1092
    %2571 = vmatprep.subr.mxu0 %v1099
    %2572 = vmatpush1.msra.mxu0 %v1098
    %2573 = vmatprep.subr.mxu0 %v1105
    %2574 = vmatpush1.msra.mxu0 %v1104
    %2575 = vmatprep.subr.mxu0 %v1111
    %2576 = vmatpush1.msra.mxu0 %v1110
    %2577 = vmatprep.subr.mxu0 %v1117
    %2578 = vmatpush1.msra.mxu0 %v1116
    %2579 = vmatprep.subr.mxu0 %v1123
    %2580 = vmatpush1.msra.mxu0 %v1122
    %2581 = vmatprep.subr.mxu0 %v1129
    %2582 = vmatpush1.msra.mxu0 %v1128
    %2583 = vmatprep.subr.mxu0 %v1135
    %2584 = vmatpush1.msra.mxu0 %v1134
    %2585 = vmatprep.subr.mxu0 %v1141
    %2586 = vmatpush1.msra.mxu0 %v1140
    %2587 = vmatprep.subr.mxu0 %v1147
    %2588 = vmatpush1.msra.mxu0 %v1146
    %2589 = vmatprep.subr.mxu0 %v1153
    %2590 = vmatpush1.msra.mxu0 %v1152
    %2591 = vmatprep.subr.mxu0 %v1159
    %2592 = vmatpush1.msra.mxu0 %v1158
    %2593 = vmatprep.subr.mxu0 %v1165
    %2594 = vmatpush1.msra.mxu0 %v1164
    %2595 = vmatprep.subr.mxu0 %v1171
    %2596 = vmatpush1.msra.mxu0 %v1170
    %2597 = vmatprep.subr.mxu0 %v1177
    %2598 = vmatpush1.msra.mxu0 %v1176
    %2599 = vmatprep.subr.mxu0 %v1183
    %2600 = vmatpush1.msra.mxu0 %v1182
    %2601 = vmatprep.subr.mxu0 %v1189
    %2602 = vmatpush1.msra.mxu0 %v1188
    %2603 = vmatprep.subr.mxu0 %v1195
    %2604 = vmatpush1.msra.mxu0 %v1194
    %2605 = vmatprep.subr.mxu0 %v1201
    %2606 = vmatpush1.msra.mxu0 %v1200
    %2607 = vmatprep.subr.mxu0 %v1207
    %2608 = vmatpush1.msra.mxu0 %v1206
    %2609 = vmatprep.subr.mxu0 %v1213
    %2610 = vmatpush1.msra.mxu0 %v1212
    %2611 = vmatprep.subr.mxu0 %v1219
    %2612 = vmatpush1.msra.mxu0 %v1218
    %2613 = vmatprep.subr.mxu0 %v1225
    %2614 = vmatpush1.msra.mxu0 %v1224
    %2615 = vmatprep.subr.mxu0 %v1231
    %2616 = vmatpush1.msra.mxu0 %v1230
    %2617 = vmatprep.subr.mxu0 %v1237
    %2618 = vmatpush1.msra.mxu0 %v1236
    %2619 = vmatprep.subr.mxu0 %v1243
    %2620 = vmatpush1.msra.mxu0 %v1242
    %2621 = vmatprep.subr.mxu0 %v1249
    %2622 = vmatpush1.msra.mxu0 %v1248
    %2623 = vmatprep.subr.mxu0 %v1255
    %2624 = vmatpush1.msra.mxu0 %v1254
    %2625 = vmatprep.mubr.f32.mxu0 %v1341
    %2626 = vmatmul.mubr.f32.gmra.mrb[0].mxu0 %v1339
    %v2627 = vpop.f32.mrb[0].mxu0
    %v2628 = vadd.f32 %v2557, %v2627
    %v2629 = vpop.f32.mrb[0].mxu0
    %v2630 = vadd.f32 %v2559, %v2629
    %2631 = vdwg.mxu0
    %vm2632 = vcmask 1041408
    %v2633 = vsel %vm2632, %v1776, 0.0
    %v2634 = vsel %vm2632, %v1778, 0.0
    %v2635 = vadd.f32 %v2633, %v2634
    %v2636 = vsel %vm2632, %v2202, 0.0
    %v2637 = vadd.f32 %v2635, %v2636
    %v2638 = vsel %vm2632, %v2204, 0.0
    %v2639 = vadd.f32 %v2637, %v2638
    %v2640 = vsel %vm2632, %v2628, 0.0
    %v2641 = vadd.f32 %v2639, %v2640
    %v2642 = vsel %vm2632, %v2630, 0.0
    %v2643 = vadd.f32 %v2641, %v2642
    %2644 = vadd.xlane.f32.xlu0 %v2643
    %v2645 = vpop.xlane.xlu0 %2644
    %v2646 = vrcp.pop 768.0
    %v2647 = vmul.f32 %v2645, %v2646
    %v2648 = vsub.f32 %v1776, %v2647
    %v2649 = vsub.f32 %v1778, %v2647
    %v2650 = vsub.f32 %v2202, %v2647
    %v2651 = vsub.f32 %v2204, %v2647
    %v2652 = vsub.f32 %v2628, %v2647
    %v2653 = vsub.f32 %v2630, %v2647
    %v2654 = vmul.f32 %v2648, %v2648
    %v2655 = vmul.f32 %v2649, %v2649
    %v2656 = vmul.f32 %v2650, %v2650
    %v2657 = vmul.f32 %v2651, %v2651
    %v2658 = vmul.f32 %v2652, %v2652
    %v2659 = vmul.f32 %v2653, %v2653
    %v2660 = vsel %vm2632, %v2654, 0.0
    %v2661 = vsel %vm2632, %v2655, 0.0
    %v2662 = vadd.f32 %v2660, %v2661
    %v2663 = vsel %vm2632, %v2656, 0.0
    %v2664 = vadd.f32 %v2662, %v2663
    %v2665 = vsel %vm2632, %v2657, 0.0
    %v2666 = vadd.f32 %v2664, %v2665
    %v2667 = vsel %vm2632, %v2658, 0.0
    %v2668 = vadd.f32 %v2666, %v2667
    %v2669 = vsel %vm2632, %v2659, 0.0
    %v2670 = vadd.f32 %v2668, %v2669
    %2671 = vadd.xlane.f32.xlu0 %v2670
    %v2672 = vpop.xlane.xlu0 %2671
    %v2673 = vmul.f32 %v2672, %v2646
    %v2674 = vadd.f32 %v2673, 1e-05
    %v2675 = vrsqrt.pop %v2674
    %v2676 = vmul.f32 %v2648, %v2675
    %v2677 = vmul.f32 %v2649, %v2675
    %v2678 = vmul.f32 %v2650, %v2675
    %v2679 = vmul.f32 %v2651, %v2675
    %v2680 = vmul.f32 %v2652, %v2675
    %v2681 = vmul.f32 %v2653, %v2675
    %v2682 = vld [vmem:[#allocation7] sm:$0x3f]
    %v2684 = vlaneseq
    %v2685 = vshrl.u32 %v2684, 7
    %v2686 = vsub.s32 0, %v2685
    %v2687 = vrot.slane %v2682, %v2686
    %v2688 = vlaneseq
    %v2689 = vshrl.u32 %v2688, 7
    %v2690 = vsub.s32 1, %v2689
    %v2691 = vrot.slane %v2682, %v2690
    %v2692 = vlaneseq
    %v2693 = vshrl.u32 %v2692, 7
    %v2694 = vsub.s32 2, %v2693
    %v2695 = vrot.slane %v2682, %v2694
    %v2696 = vlaneseq
    %v2697 = vshrl.u32 %v2696, 7
    %v2698 = vsub.s32 3, %v2697
    %v2699 = vrot.slane %v2682, %v2698
    %v2700 = vlaneseq
    %v2701 = vshrl.u32 %v2700, 7
    %v2702 = vsub.s32 4, %v2701
    %v2703 = vrot.slane %v2682, %v2702
    %v2704 = vlaneseq
    %v2705 = vshrl.u32 %v2704, 7
    %v2706 = vsub.s32 5, %v2705
    %v2707 = vrot.slane %v2682, %v2706
    %v2714 = vmul.f32 %v2676, %v2687
    %v2715 = vmul.f32 %v2677, %v2691
    %v2716 = vmul.f32 %v2678, %v2695
    %v2717 = vmul.f32 %v2679, %v2699
    %v2718 = vmul.f32 %v2680, %v2703
    %v2719 = vmul.f32 %v2681, %v2707
    %v2720 = vld [vmem:[#allocation8] sm:$0x3f]
    %v2722 = vlaneseq
    %v2723 = vshrl.u32 %v2722, 7
    %v2724 = vsub.s32 0, %v2723
    %v2725 = vrot.slane %v2720, %v2724
    %v2726 = vlaneseq
    %v2727 = vshrl.u32 %v2726, 7
    %v2728 = vsub.s32 1, %v2727
    %v2729 = vrot.slane %v2720, %v2728
    %v2730 = vlaneseq
    %v2731 = vshrl.u32 %v2730, 7
    %v2732 = vsub.s32 2, %v2731
    %v2733 = vrot.slane %v2720, %v2732
    %v2734 = vlaneseq
    %v2735 = vshrl.u32 %v2734, 7
    %v2736 = vsub.s32 3, %v2735
    %v2737 = vrot.slane %v2720, %v2736
    %v2738 = vlaneseq
    %v2739 = vshrl.u32 %v2738, 7
    %v2740 = vsub.s32 4, %v2739
    %v2741 = vrot.slane %v2720, %v2740
    %v2742 = vlaneseq
    %v2743 = vshrl.u32 %v2742, 7
    %v2744 = vsub.s32 5, %v2743
    %v2745 = vrot.slane %v2720, %v2744
    %v2752 = vadd.f32 %v2714, %v2725
    %v2753 = vadd.f32 %v2715, %v2729
    %v2754 = vadd.f32 %v2716, %v2733
    %v2755 = vadd.f32 %v2717, %v2737
    %v2756 = vadd.f32 %v2718, %v2741
    %v2757 = vadd.f32 %v2719, %v2745
    %v2758 = vld [vmem:[#allocation10] sm:$0xff]
    %v2759 = vld [vmem:[#allocation10 + $0x8] sm:$0xff]
    %v2760 = vld [vmem:[#allocation10 + $0x10] sm:$0xff]
    %v2761 = vld [vmem:[#allocation10 + $0x18] sm:$0xff]
    %v2762 = vld [vmem:[#allocation10 + $0x20] sm:$0xff]
    %v2763 = vld [vmem:[#allocation10 + $0x28] sm:$0xff]
    %v2764 = vld [vmem:[#allocation10 + $0x30] sm:$0xff]
    %v2765 = vld [vmem:[#allocation10 + $0x38] sm:$0xff]
    %v2766 = vld [vmem:[#allocation10 + $0x40] sm:$0xff]
    %v2767 = vld [vmem:[#allocation10 + $0x48] sm:$0xff]
    %v2768 = vld [vmem:[#allocation10 + $0x50] sm:$0xff]
    %v2769 = vld [vmem:[#allocation10 + $0x58] sm:$0xff]
    %v2770 = vld [vmem:[#allocation10 + $0x60] sm:$0xff]
    %v2771 = vld [vmem:[#allocation10 + $0x68] sm:$0xff]
    %v2772 = vld [vmem:[#allocation10 + $0x70] sm:$0xff]
    %v2773 = vld [vmem:[#allocation10 + $0x78] sm:$0xff]
    %v2774 = vld [vmem:[#allocation10 + $0x80] sm:$0xff]
    %v2775 = vld [vmem:[#allocation10 + $0x88] sm:$0xff]
    %v2776 = vld [vmem:[#allocation10 + $0x90] sm:$0xff]
    %v2777 = vld [vmem:[#allocation10 + $0x98] sm:$0xff]
    %v2778 = vld [vmem:[#allocation10 + $0xa0] sm:$0xff]
    %v2779 = vld [vmem:[#allocation10 + $0xa8] sm:$0xff]
    %v2780 = vld [vmem:[#allocation10 + $0xb0] sm:$0xff]
    %v2781 = vld [vmem:[#allocation10 + $0xb8] sm:$0xff]
    %v2782 = vld [vmem:[#allocation10 + $0xc0] sm:$0xff]
    %v2783 = vld [vmem:[#allocation10 + $0xc8] sm:$0xff]
    %v2784 = vld [vmem:[#allocation10 + $0xd0] sm:$0xff]
    %v2785 = vld [vmem:[#allocation10 + $0xd8] sm:$0xff]
    %v2786 = vld [vmem:[#allocation10 + $0xe0] sm:$0xff]
    %v2787 = vld [vmem:[#allocation10 + $0xe8] sm:$0xff]
    %v2788 = vld [vmem:[#allocation10 + $0xf0] sm:$0xff]
    %v2789 = vld [vmem:[#allocation10 + $0xf8] sm:$0xff]
    %v2790 = vld [vmem:[#allocation10 + $0x100] sm:$0xff]
    %v2791 = vld [vmem:[#allocation10 + $0x108] sm:$0xff]
    %v2792 = vld [vmem:[#allocation10 + $0x110] sm:$0xff]
    %v2793 = vld [vmem:[#allocation10 + $0x118] sm:$0xff]
    %v2794 = vld [vmem:[#allocation10 + $0x120] sm:$0xff]
    %v2795 = vld [vmem:[#allocation10 + $0x128] sm:$0xff]
    %v2796 = vld [vmem:[#allocation10 + $0x130] sm:$0xff]
    %v2797 = vld [vmem:[#allocation10 + $0x138] sm:$0xff]
    %v2798 = vld [vmem:[#allocation10 + $0x140] sm:$0xff]
    %v2799 = vld [vmem:[#allocation10 + $0x148] sm:$0xff]
    %v2800 = vld [vmem:[#allocation10 + $0x150] sm:$0xff]
    %v2801 = vld [vmem:[#allocation10 + $0x158] sm:$0xff]
    %v2802 = vld [vmem:[#allocation10 + $0x160] sm:$0xff]
    %v2803 = vld [vmem:[#allocation10 + $0x168] sm:$0xff]
    %v2804 = vld [vmem:[#allocation10 + $0x170] sm:$0xff]
    %v2805 = vld [vmem:[#allocation10 + $0x178] sm:$0xff]
    %v2806 = vld [vmem:[#allocation10 + $0x180] sm:$0xff]
    %v2807 = vld [vmem:[#allocation10 + $0x188] sm:$0xff]
    %v2808 = vld [vmem:[#allocation10 + $0x190] sm:$0xff]
    %v2809 = vld [vmem:[#allocation10 + $0x198] sm:$0xff]
    %v2810 = vld [vmem:[#allocation10 + $0x1a0] sm:$0xff]
    %v2811 = vld [vmem:[#allocation10 + $0x1a8] sm:$0xff]
    %v2812 = vld [vmem:[#allocation10 + $0x1b0] sm:$0xff]
    %v2813 = vld [vmem:[#allocation10 + $0x1b8] sm:$0xff]
    %v2814 = vld [vmem:[#allocation10 + $0x1c0] sm:$0xff]
    %v2815 = vld [vmem:[#allocation10 + $0x1c8] sm:$0xff]
    %v2816 = vld [vmem:[#allocation10 + $0x1d0] sm:$0xff]
    %v2817 = vld [vmem:[#allocation10 + $0x1d8] sm:$0xff]
    %v2818 = vld [vmem:[#allocation10 + $0x1e0] sm:$0xff]
    %v2819 = vld [vmem:[#allocation10 + $0x1e8] sm:$0xff]
    %v2820 = vld [vmem:[#allocation10 + $0x1f0] sm:$0xff]
    %v2821 = vld [vmem:[#allocation10 + $0x1f8] sm:$0xff]
    %v2822 = vld [vmem:[#allocation10 + $0x200] sm:$0xff]
    %v2823 = vld [vmem:[#allocation10 + $0x208] sm:$0xff]
    %v2824 = vld [vmem:[#allocation10 + $0x210] sm:$0xff]
    %v2825 = vld [vmem:[#allocation10 + $0x218] sm:$0xff]
    %v2826 = vld [vmem:[#allocation10 + $0x220] sm:$0xff]
    %v2827 = vld [vmem:[#allocation10 + $0x228] sm:$0xff]
    %v2828 = vld [vmem:[#allocation10 + $0x230] sm:$0xff]
    %v2829 = vld [vmem:[#allocation10 + $0x238] sm:$0xff]
    %v2830 = vld [vmem:[#allocation10 + $0x240] sm:$0xff]
    %v2831 = vld [vmem:[#allocation10 + $0x248] sm:$0xff]
    %v2832 = vld [vmem:[#allocation10 + $0x250] sm:$0xff]
    %v2833 = vld [vmem:[#allocation10 + $0x258] sm:$0xff]
    %v2834 = vld [vmem:[#allocation10 + $0x260] sm:$0xff]
    %v2835 = vld [vmem:[#allocation10 + $0x268] sm:$0xff]
    %v2836 = vld [vmem:[#allocation10 + $0x270] sm:$0xff]
    %v2837 = vld [vmem:[#allocation10 + $0x278] sm:$0xff]
    %v2838 = vld [vmem:[#allocation10 + $0x280] sm:$0xff]
    %v2839 = vld [vmem:[#allocation10 + $0x288] sm:$0xff]
    %v2840 = vld [vmem:[#allocation10 + $0x290] sm:$0xff]
    %v2841 = vld [vmem:[#allocation10 + $0x298] sm:$0xff]
    %v2842 = vld [vmem:[#allocation10 + $0x2a0] sm:$0xff]
    %v2843 = vld [vmem:[#allocation10 + $0x2a8] sm:$0xff]
    %v2844 = vld [vmem:[#allocation10 + $0x2b0] sm:$0xff]
    %v2845 = vld [vmem:[#allocation10 + $0x2b8] sm:$0xff]
    %v2846 = vld [vmem:[#allocation10 + $0x2c0] sm:$0xff]
    %v2847 = vld [vmem:[#allocation10 + $0x2c8] sm:$0xff]
    %v2848 = vld [vmem:[#allocation10 + $0x2d0] sm:$0xff]
    %v2849 = vld [vmem:[#allocation10 + $0x2d8] sm:$0xff]
    %v2850 = vld [vmem:[#allocation10 + $0x2e0] sm:$0xff]
    %v2851 = vld [vmem:[#allocation10 + $0x2e8] sm:$0xff]
    %v2852 = vld [vmem:[#allocation10 + $0x2f0] sm:$0xff]
    %v2853 = vld [vmem:[#allocation10 + $0x2f8] sm:$0xff]
    %v2854 = vld [vmem:[#allocation11] sm:$0x1]
    %v2856 = vlaneseq
    %v2857 = vshrl.u32 %v2856, 7
    %v2858 = vsub.s32 0, %v2857
    %v2859 = vrot.slane %v2854, %v2858
    %2861 = vmatprep.subr.mxu0 0.0
    %2862 = vmatpush1.msra.mxu0 %v2758
    %2863 = vmatprep.subr.mxu0 0.0
    %2864 = vmatpush1.msra.mxu0 %v2759
    %2865 = vmatprep.subr.mxu0 0.0
    %2866 = vmatpush1.msra.mxu0 %v2760
    %2867 = vmatprep.subr.mxu0 0.0
    %2868 = vmatpush1.msra.mxu0 %v2761
    %2869 = vmatprep.subr.mxu0 0.0
    %2870 = vmatpush1.msra.mxu0 %v2762
    %2871 = vmatprep.subr.mxu0 0.0
    %2872 = vmatpush1.msra.mxu0 %v2763
    %2873 = vmatprep.subr.mxu0 0.0
    %2874 = vmatpush1.msra.mxu0 %v2764
    %2875 = vmatprep.subr.mxu0 0.0
    %2876 = vmatpush1.msra.mxu0 %v2765
    %2877 = vmatprep.subr.mxu0 0.0
    %2878 = vmatpush1.msra.mxu0 %v2766
    %2879 = vmatprep.subr.mxu0 0.0
    %2880 = vmatpush1.msra.mxu0 %v2767
    %2881 = vmatprep.subr.mxu0 0.0
    %2882 = vmatpush1.msra.mxu0 %v2768
    %2883 = vmatprep.subr.mxu0 0.0
    %2884 = vmatpush1.msra.mxu0 %v2769
    %2885 = vmatprep.subr.mxu0 0.0
    %2886 = vmatpush1.msra.mxu0 %v2770
    %2887 = vmatprep.subr.mxu0 0.0
    %2888 = vmatpush1.msra.mxu0 %v2771
    %2889 = vmatprep.subr.mxu0 0.0
    %2890 = vmatpush1.msra.mxu0 %v2772
    %2891 = vmatprep.subr.mxu0 0.0
    %2892 = vmatpush1.msra.mxu0 %v2773
    %2893 = vmatprep.subr.mxu0 0.0
    %2894 = vmatpush1.msra.mxu0 %v2774
    %2895 = vmatprep.subr.mxu0 0.0
    %2896 = vmatpush1.msra.mxu0 %v2775
    %2897 = vmatprep.subr.mxu0 0.0
    %2898 = vmatpush1.msra.mxu0 %v2776
    %2899 = vmatprep.subr.mxu0 0.0
    %2900 = vmatpush1.msra.mxu0 %v2777
    %2901 = vmatprep.subr.mxu0 0.0
    %2902 = vmatpush1.msra.mxu0 %v2778
    %2903 = vmatprep.subr.mxu0 0.0
    %2904 = vmatpush1.msra.mxu0 %v2779
    %2905 = vmatprep.subr.mxu0 0.0
    %2906 = vmatpush1.msra.mxu0 %v2780
    %2907 = vmatprep.subr.mxu0 0.0
    %2908 = vmatpush1.msra.mxu0 %v2781
    %2909 = vmatprep.subr.mxu0 0.0
    %2910 = vmatpush1.msra.mxu0 %v2782
    %2911 = vmatprep.subr.mxu0 0.0
    %2912 = vmatpush1.msra.mxu0 %v2783
    %2913 = vmatprep.subr.mxu0 0.0
    %2914 = vmatpush1.msra.mxu0 %v2784
    %2915 = vmatprep.subr.mxu0 0.0
    %2916 = vmatpush1.msra.mxu0 %v2785
    %2917 = vmatprep.subr.mxu0 0.0
    %2918 = vmatpush1.msra.mxu0 %v2786
    %2919 = vmatprep.subr.mxu0 0.0
    %2920 = vmatpush1.msra.mxu0 %v2787
    %2921 = vmatprep.subr.mxu0 0.0
    %2922 = vmatpush1.msra.mxu0 %v2788
    %2923 = vmatprep.subr.mxu0 0.0
    %2924 = vmatpush1.msra.mxu0 %v2789
    %2925 = vmatprep.mubr.f32.mxu0 %v2753
    %2926 = vmatmul.mubr.f32.gmra.mrb[0].mxu0 %v2752
    %v2927 = vpop.f32.mrb[0].mxu0
    %v2928 = vadd.f32 %v2859, %v2927
    %v2929 = vpop.f32.mrb[0].mxu0
    %2930 = vdwg.mxu0
    %2931 = vmatprep.subr.mxu0 0.0
    %2932 = vmatpush1.msra.mxu0 %v2790
    %2933 = vmatprep.subr.mxu0 0.0
    %2934 = vmatpush1.msra.mxu0 %v2791
    %2935 = vmatprep.subr.mxu0 0.0
    %2936 = vmatpush1.msra.mxu0 %v2792
    %2937 = vmatprep.subr.mxu0 0.0
    %2938 = vmatpush1.msra.mxu0 %v2793
    %2939 = vmatprep.subr.mxu0 0.0
    %2940 = vmatpush1.msra.mxu0 %v2794
    %2941 = vmatprep.subr.mxu0 0.0
    %2942 = vmatpush1.msra.mxu0 %v2795
    %2943 = vmatprep.subr.mxu0 0.0
    %2944 = vmatpush1.msra.mxu0 %v2796
    %2945 = vmatprep.subr.mxu0 0.0
    %2946 = vmatpush1.msra.mxu0 %v2797
    %2947 = vmatprep.subr.mxu0 0.0
    %2948 = vmatpush1.msra.mxu0 %v2798
    %2949 = vmatprep.subr.mxu0 0.0
    %2950 = vmatpush1.msra.mxu0 %v2799
    %2951 = vmatprep.subr.mxu0 0.0
    %2952 = vmatpush1.msra.mxu0 %v2800
    %2953 = vmatprep.subr.mxu0 0.0
    %2954 = vmatpush1.msra.mxu0 %v2801
    %2955 = vmatprep.subr.mxu0 0.0
    %2956 = vmatpush1.msra.mxu0 %v2802
    %2957 = vmatprep.subr.mxu0 0.0
    %2958 = vmatpush1.msra.mxu0 %v2803
    %2959 = vmatprep.subr.mxu0 0.0
    %2960 = vmatpush1.msra.mxu0 %v2804
    %2961 = vmatprep.subr.mxu0 0.0
    %2962 = vmatpush1.msra.mxu0 %v2805
    %2963 = vmatprep.subr.mxu0 0.0
    %2964 = vmatpush1.msra.mxu0 %v2806
    %2965 = vmatprep.subr.mxu0 0.0
    %2966 = vmatpush1.msra.mxu0 %v2807
    %2967 = vmatprep.subr.mxu0 0.0
    %2968 = vmatpush1.msra.mxu0 %v2808
    %2969 = vmatprep.subr.mxu0 0.0
    %2970 = vmatpush1.msra.mxu0 %v2809
    %2971 = vmatprep.subr.mxu0 0.0
    %2972 = vmatpush1.msra.mxu0 %v2810
    %2973 = vmatprep.subr.mxu0 0.0
    %2974 = vmatpush1.msra.mxu0 %v2811
    %2975 = vmatprep.subr.mxu0 0.0
    %2976 = vmatpush1.msra.mxu0 %v2812
    %2977 = vmatprep.subr.mxu0 0.0
    %2978 = vmatpush1.msra.mxu0 %v2813
    %2979 = vmatprep.subr.mxu0 0.0
    %2980 = vmatpush1.msra.mxu0 %v2814
    %2981 = vmatprep.subr.mxu0 0.0
    %2982 = vmatpush1.msra.mxu0 %v2815
    %2983 = vmatprep.subr.mxu0 0.0
    %2984 = vmatpush1.msra.mxu0 %v2816
    %2985 = vmatprep.subr.mxu0 0.0
    %2986 = vmatpush1.msra.mxu0 %v2817
    %2987 = vmatprep.subr.mxu0 0.0
    %2988 = vmatpush1.msra.mxu0 %v2818
    %2989 = vmatprep.subr.mxu0 0.0
    %2990 = vmatpush1.msra.mxu0 %v2819
    %2991 = vmatprep.subr.mxu0 0.0
    %2992 = vmatpush1.msra.mxu0 %v2820
    %2993 = vmatprep.subr.mxu0 0.0
    %2994 = vmatpush1.msra.mxu0 %v2821
    %2995 = vmatprep.mubr.f32.mxu0 %v2755
    %2996 = vmatmul.mubr.f32.gmra.mrb[0].mxu0 %v2754
    %v2997 = vpop.f32.mrb[0].mxu0
    %v2998 = vadd.f32 %v2928, %v2997
    %v2999 = vpop.f32.mrb[0].mxu0
    %3000 = vdwg.mxu0
    %3001 = vmatprep.subr.mxu0 0.0
    %3002 = vmatpush1.msra.mxu0 %v2822
    %3003 = vmatprep.subr.mxu0 0.0
    %3004 = vmatpush1.msra.mxu0 %v2823
    %3005 = vmatprep.subr.mxu0 0.0
    %3006 = vmatpush1.msra.mxu0 %v2824
    %3007 = vmatprep.subr.mxu0 0.0
    %3008 = vmatpush1.msra.mxu0 %v2825
    %3009 = vmatprep.subr.mxu0 0.0
    %3010 = vmatpush1.msra.mxu0 %v2826
    %3011 = vmatprep.subr.mxu0 0.0
    %3012 = vmatpush1.msra.mxu0 %v2827
    %3013 = vmatprep.subr.mxu0 0.0
    %3014 = vmatpush1.msra.mxu0 %v2828
    %3015 = vmatprep.subr.mxu0 0.0
    %3016 = vmatpush1.msra.mxu0 %v2829
    %3017 = vmatprep.subr.mxu0 0.0
    %3018 = vmatpush1.msra.mxu0 %v2830
    %3019 = vmatprep.subr.mxu0 0.0
    %3020 = vmatpush1.msra.mxu0 %v2831
    %3021 = vmatprep.subr.mxu0 0.0
    %3022 = vmatpush1.msra.mxu0 %v2832
    %3023 = vmatprep.subr.mxu0 0.0
    %3024 = vmatpush1.msra.mxu0 %v2833
    %3025 = vmatprep.subr.mxu0 0.0
    %3026 = vmatpush1.msra.mxu0 %v2834
    %3027 = vmatprep.subr.mxu0 0.0
    %3028 = vmatpush1.msra.mxu0 %v2835
    %3029 = vmatprep.subr.mxu0 0.0
    %3030 = vmatpush1.msra.mxu0 %v2836
    %3031 = vmatprep.subr.mxu0 0.0
    %3032 = vmatpush1.msra.mxu0 %v2837
    %3033 = vmatprep.subr.mxu0 0.0
    %3034 = vmatpush1.msra.mxu0 %v2838
    %3035 = vmatprep.subr.mxu0 0.0
    %3036 = vmatpush1.msra.mxu0 %v2839
    %3037 = vmatprep.subr.mxu0 0.0
    %3038 = vmatpush1.msra.mxu0 %v2840
    %3039 = vmatprep.subr.mxu0 0.0
    %3040 = vmatpush1.msra.mxu0 %v2841
    %3041 = vmatprep.subr.mxu0 0.0
    %3042 = vmatpush1.msra.mxu0 %v2842
    %3043 = vmatprep.subr.mxu0 0.0
    %3044 = vmatpush1.msra.mxu0 %v2843
    %3045 = vmatprep.subr.mxu0 0.0
    %3046 = vmatpush1.msra.mxu0 %v2844
    %3047 = vmatprep.subr.mxu0 0.0
    %3048 = vmatpush1.msra.mxu0 %v2845
    %3049 = vmatprep.subr.mxu0 0.0
    %3050 = vmatpush1.msra.mxu0 %v2846
    %3051 = vmatprep.subr.mxu0 0.0
    %3052 = vmatpush1.msra.mxu0 %v2847
    %3053 = vmatprep.subr.mxu0 0.0
    %3054 = vmatpush1.msra.mxu0 %v2848
    %3055 = vmatprep.subr.mxu0 0.0
    %3056 = vmatpush1.msra.mxu0 %v2849
    %3057 = vmatprep.subr.mxu0 0.0
    %3058 = vmatpush1.msra.mxu0 %v2850
    %3059 = vmatprep.subr.mxu0 0.0
    %3060 = vmatpush1.msra.mxu0 %v2851
    %3061 = vmatprep.subr.mxu0 0.0
    %3062 = vmatpush1.msra.mxu0 %v2852
    %3063 = vmatprep.subr.mxu0 0.0
    %3064 = vmatpush1.msra.mxu0 %v2853
    %3065 = vmatprep.mubr.f32.mxu0 %v2757
    %3066 = vmatmul.mubr.f32.gmra.mrb[0].mxu0 %v2756
    %v3067 = vpop.f32.mrb[0].mxu0
    %v3068 = vadd.f32 %v2998, %v3067
    %v3069 = vpop.f32.mrb[0].mxu0
    %3070 = vdwg.mxu0
    %3071 = vst [vmem:[#allocation13] sm:$0x3] %v3068
    // Predicated region
    $region54: #{model_forward.3} parent=1 // pred_check
      _
    $region55: #{model_forward.3} parent=1 // pred_check_branch
      %3073 = sbr.rel (0) target = $region57
    $region56: #{model_forward.3} parent=1 // pred_region
      %s3075 = ssub.s32 32, 32
      %3076 = vsyncadd [#allocation4], %s3075
      %s3078 = sshll.u32 [#allocation13], 4
      %s3079 = int_to_ptr.vmem [resolvable:$true] %s3078
      %3081 = dma.vmem_to_hbm [thread:$0]  %s3079, 32, %s7, [#allocation4]
    $region57: #{model_forward.3} parent=1 // pred_fallthru
      _
    // Predicated region
    $region58: #{model_forward.3} parent=1 // pred_check
      _
    $region59: #{model_forward.3} parent=1 // pred_check_branch
      %3083 = sbr.rel (0) target = $region61
    $region60: #{model_forward.3} parent=1 // pred_region
      %3084 = dma.done [#allocation4], 32
    $region61: #{model_forward.3} parent=1 // pred_fallthru
      _
    %3085 = vsyncpa [#allocation3], 1
    %3086 = vsyncpa [#allocation6], 1
    %3087 = vsyncpa [#allocation9], 1
    %3088 = vsyncpa [#allocation12], 1
    %3089 = vsyncpa [#allocation4], 1

</llo_original>
